<compile_context>
chip_gen: v7x
topology: tpu7x:2x2x1
jax: 0.10.0
libtpu: 0.0.40
codegen_flags: <defaults>
</compile_context>

<pallas_src>
import functools

import jax
import jax.numpy as jnp
import numpy as np
from jax import lax
from jax.experimental import pallas as pl
from jax.experimental.pallas import tpu as pltpu

BN_EPS = 1e-5
LANE = 128


def _round_up(x, m):
    return (x + m - 1) // m * m


def _pick_row_tile(Hs, Ws):
    """Smallest row tile TH dividing Hs with (TH*Ws) a multiple of 128 lanes."""
    for th in range(1, Hs + 1):
        if Hs % th == 0 and (th * Ws) % LANE == 0:
            return th
    return Hs


# ----------------------------------------------------------------------------
# Pallas kernels
# ----------------------------------------------------------------------------
def _make_conv_kernel(*, TH, T, Hs, Ws, Cpad, fuse_in_affine):
    """3x3 conv (stride 1, zero pad 1) over a TH-row tile, im2col + single matmul.

    Optionally fuses an input-side BatchNorm affine + ReLU (BN of the previous
    conv) while assembling the zero-padded slab, so the padding border stays an
    exact zero (pad happens AFTER the activation, matching PyTorch).
    Also emits per-tile BN partial stats (sum and centered sum-of-squares).
    """

    def kernel(*refs):
        if fuse_in_affine:
            x_ref, w_ref, isc_ref, ibi_ref, y_ref, s_ref, m2_ref, slab = refs
        else:
            x_ref, w_ref, y_ref, s_ref, m2_ref, slab = refs

        t = pl.program_id(1)
        r0 = t * TH                              # first output row of this tile

        # ---- assemble zero-padded (TH+2, Ws+2, Cpad) input slab in VMEM ------
        slab[...] = jnp.zeros_like(slab)

        def load_rows(src0, n_rows, dst0):
            rows = x_ref[0, pl.ds(src0, n_rows), :, :]
            if fuse_in_affine:                   # BN1 affine + ReLU fused here
                rows = rows.astype(jnp.float32)
                sc = isc_ref[...].reshape(1, 1, Cpad)
                bi = ibi_ref[...].reshape(1, 1, Cpad)
                rows = jnp.maximum(rows * sc + bi, 0.0)
            slab[dst0:dst0 + n_rows, 1:Ws + 1, :] = rows.astype(slab.dtype)

        if T == 1:
            load_rows(0, Hs, 1)                  # top & bottom pad rows stay zero
        else:
            @pl.when(t == 0)
            def _():
                load_rows(0, TH + 1, 1)          # row 0 of slab = top zero pad

            if T > 2:
                @pl.when(jnp.logical_and(t > 0, t < T - 1))
                def _():
                    load_rows(r0 - 1, TH + 2, 0)

            @pl.when(t == T - 1)
            def _():
                load_rows(r0 - 1, TH + 1, 0)     # last slab row = bottom zero pad

        # ---- im2col: 9 shifted views -> (TH*Ws, 9*Cpad), one MXU matmul ------
        xs = slab[...]                           # (TH+2, Ws+2, Cpad) bf16
        taps = []
        for dh in range(3):
            for dw in range(3):
                taps.append(xs[dh:dh + TH, dw:dw + Ws, :].reshape(TH * Ws, Cpad))
        patches = jnp.concatenate(taps, axis=1)  # (TH*Ws, 9*Cpad), lane-aligned

        acc = jnp.dot(patches, w_ref[...],
                      preferred_element_type=jnp.float32)   # (TH*Ws, Cpad)

        y_ref[0] = acc.reshape(TH, Ws, Cpad).astype(y_ref.dtype)

        # ---- per-tile BN partial stats (centered -> stable Chan combine) -----
        inv_cnt = 1.0 / float(TH * Ws)
        tile_sum = jnp.sum(acc, axis=0, keepdims=True)       # (1, Cpad)
        centered = acc - tile_sum * inv_cnt
        tile_m2 = jnp.sum(centered * centered, axis=0, keepdims=True)
        s_ref[0, 0] = jnp.broadcast_to(tile_sum, (8, Cpad))
        m2_ref[0, 0] = jnp.broadcast_to(tile_m2, (8, Cpad))

    return kernel


def _make_output_kernel(*, TH, Ws, Cpad, Cout):
    """Final BN affine + ReLU, strip padded channels, emit lane-dense NCHW slab."""

    def kernel(y_ref, sc_ref, bi_ref, o_ref):
        y = y_ref[0].reshape(TH * Ws, Cpad).astype(jnp.float32)
        z = jnp.maximum(y * sc_ref[...] + bi_ref[...], 0.0)     # (TH*Ws, Cpad)
        zt = jnp.transpose(z, (1, 0))                           # (Cpad, TH*Ws)
        o_ref[0] = zt[:Cout, :].astype(o_ref.dtype)             # (Cout, TH*Ws)

    return kernel


# ----------------------------------------------------------------------------
# Pallas wrappers
# ----------------------------------------------------------------------------
def conv3x3_bn_stats(x_nhwc, w_packed, *, row_tile, out_dtype,
                     in_scale=None, in_bias=None):
    """x_nhwc: (N,Hs,Ws,Cpad) bf16; w_packed: (9*Cpad, Cpad) bf16.

    Returns (conv output (N,Hs,Ws,Cpad), partial sums, partial M2) where the
    stats are per-(batch, row-tile) partials of shape (N, T, 8, Cpad).
    """
    N, Hs, Ws, Cpad = x_nhwc.shape
    K9 = w_packed.shape[0]
    TH = row_tile
    T = Hs // TH
    fuse = in_scale is not None

    kernel = _make_conv_kernel(TH=TH, T=T, Hs=Hs, Ws=Ws, Cpad=Cpad,
                               fuse_in_affine=fuse)

    in_specs = [pl.BlockSpec((1, Hs, Ws, Cpad), lambda n, t: (n, 0, 0, 0)),
                pl.BlockSpec((K9, Cpad), lambda n, t: (0, 0))]
    args = [x_nhwc, w_packed]
    if fuse:
        in_specs += [pl.BlockSpec((1, Cpad), lambda n, t: (0, 0)),
                     pl.BlockSpec((1, Cpad), lambda n, t: (0, 0))]
        args += [in_scale, in_bias]

    out_shape = (jax.ShapeDtypeStruct((N, Hs, Ws, Cpad), out_dtype),
                 jax.ShapeDtypeStruct((N, T, 8, Cpad), jnp.float32),
                 jax.ShapeDtypeStruct((N, T, 8, Cpad), jnp.float32))
    out_specs = (pl.BlockSpec((1, TH, Ws, Cpad), lambda n, t: (n, t, 0, 0)),
                 pl.BlockSpec((1, 1, 8, Cpad), lambda n, t: (n, t, 0, 0)),
                 pl.BlockSpec((1, 1, 8, Cpad), lambda n, t: (n, t, 0, 0)))

    return pl.pallas_call(
        kernel,
        grid=(N, T),
        in_specs=in_specs,
        out_specs=out_specs,
        out_shape=out_shape,
        scratch_shapes=[pltpu.VMEM((TH + 2, Ws + 2, Cpad), jnp.bfloat16)],
        compiler_params=pltpu.CompilerParams(
            dimension_semantics=("parallel", "parallel")),
    )(*args)


def bn_relu_to_nchw(y_nhwc, scale, bias, Cout, row_tile):
    """Fused BN affine + ReLU + channel strip; output (N, Cout, Hs*Ws) lane-dense."""
    N, Hs, Ws, Cpad = y_nhwc.shape
    TH = row_tile
    T = Hs // TH
    kernel = _make_output_kernel(TH=TH, Ws=Ws, Cpad=Cpad, Cout=Cout)
    return pl.pallas_call(
        kernel,
        grid=(N, T),
        in_specs=[pl.BlockSpec((1, TH, Ws, Cpad), lambda n, t: (n, t, 0, 0)),
                  pl.BlockSpec((1, Cpad), lambda n, t: (0, 0)),
                  pl.BlockSpec((1, Cpad), lambda n, t: (0, 0))],
        out_specs=pl.BlockSpec((1, Cout, TH * Ws), lambda n, t: (n, 0, t)),
        out_shape=jax.ShapeDtypeStruct((N, Cout, Hs * Ws), jnp.float32),
        compiler_params=pltpu.CompilerParams(
            dimension_semantics=("parallel", "parallel")),
    )(y_nhwc, scale, bias)


# ----------------------------------------------------------------------------
# JAX glue
# ----------------------------------------------------------------------------
def interp_matrix(n_in, n_out):
    """Bilinear interpolation matrix, align_corners=True (torch.nn.Upsample)."""
    if n_in == 1:
        return jnp.ones((n_out, 1), jnp.float32)
    i = jnp.arange(n_out, dtype=jnp.float32)
    s = i * (n_in - 1) / (n_out - 1)
    i0 = jnp.clip(jnp.floor(s), 0, n_in - 2).astype(jnp.int32)
    frac = s - i0.astype(jnp.float32)
    rows = jnp.arange(n_out)
    U = jnp.zeros((n_out, n_in), jnp.float32)
    U = U.at[rows, i0].add(1.0 - frac)
    U = U.at[rows, i0 + 1].add(frac)
    return U


def _build_xcat(x, x_skip, Cpad):
    """Upsample x2 (bilinear, align_corners=True), zero-pad to skip HxW, concat
    along channels, transpose to NHWC and zero-pad channels to Cpad — all as one
    fused buffer build in XLA."""
    N, Cx, hx, wx = x.shape
    _, Cs, Hs, Ws = x_skip.shape
    pad_y = Hs - 2 * hx
    pad_x = Ws - 2 * wx
    assert pad_y >= 0 and pad_x >= 0   # TODO(synk): negative pad (crop) unsupported

    Uh = interp_matrix(hx, 2 * hx)
    Uw = interp_matrix(wx, 2 * wx)
    xu = jnp.einsum('oh,pw,nchw->ncop', Uh, Uw, x.astype(jnp.float32))

    xcat = jnp.zeros((N, Hs, Ws, Cpad), jnp.bfloat16)
    xu_nhwc = jnp.transpose(xu, (0, 2, 3, 1)).astype(jnp.bfloat16)
    xcat = lax.dynamic_update_slice(xcat, xu_nhwc, (0, pad_y // 2, pad_x // 2, 0))
    skip_nhwc = jnp.transpose(x_skip, (0, 2, 3, 1)).astype(jnp.bfloat16)
    xcat = lax.dynamic_update_slice(xcat, skip_nhwc, (0, 0, 0, Cx))
    return xcat


def _pack_weights(w_oihw, Cpad):
    """(Cout,Cin,3,3) torch layout -> (9*Cpad, Cpad) bf16, row = tap*Cpad + cin."""
    Cout, Cin, _, _ = w_oihw.shape
    wt = jnp.transpose(w_oihw, (2, 3, 1, 0))                       # (3,3,Cin,Cout)
    wt = jnp.pad(wt, ((0, 0), (0, 0), (0, Cpad - Cin), (0, Cpad - Cout)))
    return wt.reshape(9 * Cpad, Cpad).astype(jnp.bfloat16)


def _bn_scale_bias(sums, m2s, tile_count, total_count, gamma, beta, Cpad,
                   eps=BN_EPS):
    """Combine per-tile partial stats (Chan parallel-variance) -> BN scale/bias."""
    s = sums[:, :, 0, :].astype(jnp.float32)                       # (N, T, Cpad)
    m2 = m2s[:, :, 0, :].astype(jnp.float32)
    tile_mean = s / tile_count
    mean = jnp.sum(s, axis=(0, 1)) / total_count                   # (Cpad,)
    m2_tot = jnp.sum(m2, axis=(0, 1)) + jnp.sum(
        tile_count * (tile_mean - mean) ** 2, axis=(0, 1))
    var = m2_tot / total_count                                     # biased (BN train)
    g = jnp.zeros((Cpad,), jnp.float32).at[:gamma.shape[0]].set(gamma)
    b = jnp.zeros((Cpad,), jnp.float32).at[:beta.shape[0]].set(beta)
    scale = g * lax.rsqrt(var + eps)
    bias = b - mean * scale
    return scale.reshape(1, Cpad), bias.reshape(1, Cpad)


def expanding_block_forward(x, x_skip, params):
    """ExpandingBlock.forward. x: (N, input_n, h, w), x_skip: (N, output_n, H, W)."""
    N, Cx, _, _ = x.shape
    _, Cs, Hs, Ws = x_skip.shape
    Cout = params['w1'].shape[0]
    Cpad = _round_up(max(Cx + Cs, Cout), LANE)
    TH = _pick_row_tile(Hs, Ws)
    total = N * Hs * Ws
    tile_cnt = float(TH * Ws)

    xcat = _build_xcat(x, x_skip, Cpad)                    # (N, Hs, Ws, Cpad) bf16
    w1p = _pack_weights(params['w1'], Cpad)
    w2p = _pack_weights(params['w2'], Cpad)

    # conv1 (+ BN1 partial stats); output kept in bf16 for conv2's MXU input.
    y1, s1, m21 = conv3x3_bn_stats(xcat, w1p, row_tile=TH, out_dtype=jnp.bfloat16)
    sc1, bi1 = _bn_scale_bias(s1, m21, tile_cnt, total, params['g1'], params['b1'], Cpad)

    # conv2 with BN1-affine + ReLU fused into its input prologue (+ BN2 stats).
    y2, s2, m22 = conv3x3_bn_stats(y1, w2p, row_tile=TH, out_dtype=jnp.float32,
                                   in_scale=sc1, in_bias=bi1)
    sc2, bi2 = _bn_scale_bias(s2, m22, tile_cnt, total, params['g2'], params['b2'], Cpad)

    # final BN2-affine + ReLU + channel strip, emitted directly in NCHW layout.
    out = bn_relu_to_nchw(y2, sc2, bi2, Cout, TH)          # (N, Cout, Hs*Ws)
    return out.reshape(N, Cout, Hs, Ws)


# ----------------------------------------------------------------------------
# Pure-JAX f32 reference (for correctness check)
# ----------------------------------------------------------------------------
def ref_forward(x, x_skip, params):
    N, Cx, hx, wx = x.shape
    _, Cs, Hs, Ws = x_skip.shape
    Uh = interp_matrix(hx, 2 * hx)
    Uw = interp_matrix(wx, 2 * wx)
    xu = jnp.einsum('oh,pw,nchw->ncop', Uh, Uw, x)
    pad_y = Hs - 2 * hx
    pad_x = Ws - 2 * wx
    xu = jnp.pad(xu, ((0, 0), (0, 0),
                      (pad_y // 2, pad_y - pad_y // 2),
                      (pad_x // 2, pad_x - pad_x // 2)))
    z = jnp.concatenate([xu, x_skip], axis=1)

    def conv(t, w):
        return lax.conv_general_dilated(
            t, w, (1, 1), ((1, 1), (1, 1)),
            dimension_numbers=('NCHW', 'OIHW', 'NCHW'),
            precision=lax.Precision.HIGHEST)

    def bn_relu(t, g, b):
        mean = t.mean(axis=(0, 2, 3), keepdims=True)
        var = t.var(axis=(0, 2, 3), keepdims=True)
        return jax.nn.relu((t - mean) * (g.reshape(1, -1, 1, 1)
                                         / jnp.sqrt(var + BN_EPS))
                           + b.reshape(1, -1, 1, 1))

    z = bn_relu(conv(z, params['w1']), params['g1'], params['b1'])
    z = bn_relu(conv(z, params['w2']), params['g2'], params['b2'])
    return z


# ----------------------------------------------------------------------------
# Main
# ----------------------------------------------------------------------------
if __name__ == "__main__":
    # options: conv_kernel_size=3, conv_stride_rate=1, conv_padding=1,
    #          conv_padding_style='zeros'
    N, input_n, output_n = 2, 8, 8
    h, w = 7, 7              # expanding-path spatial -> upsampled to 14x14
    Hs, Ws = 16, 16          # skip spatial -> exercises expand_padding (pad 1+1)
    Ccat = input_n + output_n

    key = jax.random.PRNGKey(0)
    ks = jax.random.split(key, 8)
    x = jax.random.normal(ks[0], (N, input_n, h, w), jnp.float32)
    x_skip = jax.random.normal(ks[1], (N, output_n, Hs, Ws), jnp.float32)

    params = dict(
        w1=jax.random.normal(ks[2], (output_n, Ccat, 3, 3), jnp.float32)
            / float(np.sqrt(9 * Ccat)),
        g1=1.0 + 0.1 * jax.random.normal(ks[3], (output_n,), jnp.float32),
        b1=0.1 * jax.random.normal(ks[4], (output_n,), jnp.float32),
        w2=jax.random.normal(ks[5], (output_n, output_n, 3, 3), jnp.float32)
            / float(np.sqrt(9 * output_n)),
        g2=1.0 + 0.1 * jax.random.normal(ks[6], (output_n,), jnp.float32),
        b2=0.1 * jax.random.normal(ks[7], (output_n,), jnp.float32),
    )

    fwd = jax.jit(expanding_block_forward)
    out = jax.block_until_ready(fwd(x, x_skip, params))

    ref = jax.block_until_ready(ref_forward(x, x_skip, params))
    assert out.shape == (N, output_n, Hs, Ws), out.shape
    # bf16 activations/weights with f32 accumulation -> ~1e-2 relative tolerance.
    np.testing.assert_allclose(np.asarray(out), np.asarray(ref),
                               rtol=3e-2, atol=5e-2)

    print("KERNEL_OK")
</pallas_src>

<mosaic_0001>
module attributes {stable_mosaic.version = 11 : i64} {
  func.func @kernel(%arg0: i32, %arg1: i32, %arg2: memref<1x16x16x128xbf16, #tpu.memory_space<vmem>>, %arg3: memref<1152x128xbf16, #tpu.memory_space<vmem>>, %arg4: memref<1x8x16x128xbf16, #tpu.memory_space<vmem>>, %arg5: memref<1x1x8x128xf32, #tpu.memory_space<vmem>>, %arg6: memref<1x1x8x128xf32, #tpu.memory_space<vmem>>, %arg7: memref<10x18x128xbf16, #tpu.memory_space<vmem>>) attributes {dimension_semantics = [#tpu.dimension_semantics<parallel>, #tpu.dimension_semantics<parallel>], iteration_bounds = array<i64: 2, 2>, scalar_prefetch = 0 : i64, scratch_operands = 1 : i64, tpu.core_type = #tpu.core_type<tc>, window_params = [{transform_indices = @transform_0, window_bounds = array<i64: 1, 16, 16, 128>}, {pipeline_mode = #tpu.pipeline_mode<synchronous>, transform_indices = @transform_1, window_bounds = array<i64: 1152, 128>}, {transform_indices = @transform_2, window_bounds = array<i64: 1, 8, 16, 128>}, {transform_indices = @transform_3, window_bounds = array<i64: 1, 1, 8, 128>}, {transform_indices = @transform_4, window_bounds = array<i64: 1, 1, 8, 128>}]} {
    %c8_i32 = arith.constant 8 : i32
    %0 = arith.muli %arg1, %c8_i32 : i32
    %cst = arith.constant 0.000000e+00 : bf16
    %1 = vector.broadcast %cst : bf16 to vector<10x18x128xbf16>
    %c0 = arith.constant 0 : index
    %c0_0 = arith.constant 0 : index
    %c0_1 = arith.constant 0 : index
    %2 = vector.load %arg7[%c0, %c0_0, %c0_1] : memref<10x18x128xbf16, #tpu.memory_space<vmem>>, vector<10x18x128xbf16>
    tpu.vector_store %arg7[%c0, %c0_0, %c0_1], %1 {strides = array<i32>} : memref<10x18x128xbf16, #tpu.memory_space<vmem>>, vector<10x18x128xbf16>,
    %c0_i32 = arith.constant 0 : i32
    %3 = arith.cmpi eq, %arg1, %c0_i32 : i32
    %4 = arith.extui %3 : i1 to i32
    %c0_i32_2 = arith.constant 0 : i32
    %5 = arith.cmpi ne, %4, %c0_i32_2 : i32
    scf.if %5 {
      %c0_25 = arith.constant 0 : index
      %c0_26 = arith.constant 0 : index
      %c0_27 = arith.constant 0 : index
      %c0_28 = arith.constant 0 : index
      %55 = vector.load %arg2[%c0_25, %c0_26, %c0_27, %c0_28] : memref<1x16x16x128xbf16, #tpu.memory_space<vmem>>, vector<1x9x16x128xbf16>
      %56 = vector.shape_cast %55 : vector<1x9x16x128xbf16> to vector<9x16x128xbf16>
      %c1 = arith.constant 1 : index
      %c1_29 = arith.constant 1 : index
      %c0_30 = arith.constant 0 : index
      %57 = vector.load %arg7[%c1, %c1_29, %c0_30] : memref<10x18x128xbf16, #tpu.memory_space<vmem>>, vector<9x16x128xbf16>
      tpu.vector_store %arg7[%c1, %c1_29, %c0_30], %56 {strides = array<i32>} : memref<10x18x128xbf16, #tpu.memory_space<vmem>>, vector<9x16x128xbf16>,
    } else {
    }
    %c1_i32 = arith.constant 1 : i32
    %6 = arith.cmpi eq, %arg1, %c1_i32 : i32
    %7 = arith.extui %6 : i1 to i32
    %c0_i32_3 = arith.constant 0 : i32
    %8 = arith.cmpi ne, %7, %c0_i32_3 : i32
    scf.if %8 {
      %c1_i32_25 = arith.constant 1 : i32
      %55 = arith.subi %0, %c1_i32_25 : i32
      %c0_26 = arith.constant 0 : index
      %56 = arith.index_cast %55 : i32 to index
      %c0_27 = arith.constant 0 : index
      %c0_28 = arith.constant 0 : index
      %57 = vector.load %arg2[%c0_26, %56, %c0_27, %c0_28] : memref<1x16x16x128xbf16, #tpu.memory_space<vmem>>, vector<1x9x16x128xbf16>
      %58 = vector.shape_cast %57 : vector<1x9x16x128xbf16> to vector<9x16x128xbf16>
      %c0_29 = arith.constant 0 : index
      %c1 = arith.constant 1 : index
      %c0_30 = arith.constant 0 : index
      %59 = vector.load %arg7[%c0_29, %c1, %c0_30] : memref<10x18x128xbf16, #tpu.memory_space<vmem>>, vector<9x16x128xbf16>
      tpu.vector_store %arg7[%c0_29, %c1, %c0_30], %58 {strides = array<i32>} : memref<10x18x128xbf16, #tpu.memory_space<vmem>>, vector<9x16x128xbf16>,
    } else {
    }
    %c0_4 = arith.constant 0 : index
    %c0_5 = arith.constant 0 : index
    %c0_6 = arith.constant 0 : index
    %9 = vector.load %arg7[%c0_4, %c0_5, %c0_6] : memref<10x18x128xbf16, #tpu.memory_space<vmem>>, vector<10x18x128xbf16>
    %10 = vector.extract_strided_slice %9 {offsets = [0, 0, 0], sizes = [8, 16, 128], strides = [1, 1, 1]} : vector<10x18x128xbf16> to vector<8x16x128xbf16>
    %11 = vector.shape_cast %10 : vector<8x16x128xbf16> to vector<128x128xbf16>
    %12 = vector.extract_strided_slice %9 {offsets = [0, 1, 0], sizes = [8, 16, 128], strides = [1, 1, 1]} : vector<10x18x128xbf16> to vector<8x16x128xbf16>
    %13 = vector.shape_cast %12 : vector<8x16x128xbf16> to vector<128x128xbf16>
    %14 = vector.extract_strided_slice %9 {offsets = [0, 2, 0], sizes = [8, 16, 128], strides = [1, 1, 1]} : vector<10x18x128xbf16> to vector<8x16x128xbf16>
    %15 = vector.shape_cast %14 : vector<8x16x128xbf16> to vector<128x128xbf16>
    %16 = vector.extract_strided_slice %9 {offsets = [1, 0, 0], sizes = [8, 16, 128], strides = [1, 1, 1]} : vector<10x18x128xbf16> to vector<8x16x128xbf16>
    %17 = vector.shape_cast %16 : vector<8x16x128xbf16> to vector<128x128xbf16>
    %18 = vector.extract_strided_slice %9 {offsets = [1, 1, 0], sizes = [8, 16, 128], strides = [1, 1, 1]} : vector<10x18x128xbf16> to vector<8x16x128xbf16>
    %19 = vector.shape_cast %18 : vector<8x16x128xbf16> to vector<128x128xbf16>
    %20 = vector.extract_strided_slice %9 {offsets = [1, 2, 0], sizes = [8, 16, 128], strides = [1, 1, 1]} : vector<10x18x128xbf16> to vector<8x16x128xbf16>
    %21 = vector.shape_cast %20 : vector<8x16x128xbf16> to vector<128x128xbf16>
    %22 = vector.extract_strided_slice %9 {offsets = [2, 0, 0], sizes = [8, 16, 128], strides = [1, 1, 1]} : vector<10x18x128xbf16> to vector<8x16x128xbf16>
    %23 = vector.shape_cast %22 : vector<8x16x128xbf16> to vector<128x128xbf16>
    %24 = vector.extract_strided_slice %9 {offsets = [2, 1, 0], sizes = [8, 16, 128], strides = [1, 1, 1]} : vector<10x18x128xbf16> to vector<8x16x128xbf16>
    %25 = vector.shape_cast %24 : vector<8x16x128xbf16> to vector<128x128xbf16>
    %26 = vector.extract_strided_slice %9 {offsets = [2, 2, 0], sizes = [8, 16, 128], strides = [1, 1, 1]} : vector<10x18x128xbf16> to vector<8x16x128xbf16>
    %27 = vector.shape_cast %26 : vector<8x16x128xbf16> to vector<128x128xbf16>
    %28 = tpu.concatenate %11, %13, %15, %17, %19, %21, %23, %25, %27 in 1 : vector<128x128xbf16>, vector<128x128xbf16>, vector<128x128xbf16>, vector<128x128xbf16>, vector<128x128xbf16>, vector<128x128xbf16>, vector<128x128xbf16>, vector<128x128xbf16>, vector<128x128xbf16> -> vector<128x1152xbf16>
    %c0_7 = arith.constant 0 : index
    %c0_8 = arith.constant 0 : index
    %29 = vector.load %arg3[%c0_7, %c0_8] : memref<1152x128xbf16, #tpu.memory_space<vmem>>, vector<1152x128xbf16>
    %cst_9 = arith.constant dense<0.000000e+00> : vector<128x128xf32>
    %30 = tpu.matmul %28, %29, %cst_9 {dimension_numbers = #tpu.dot_dimension_numbers<[1], [0], [0], [1], [0, 0, 1, 1], [], []>} : vector<128x1152xbf16>, vector<1152x128xbf16>, vector<128x128xf32> -> vector<128x128xf32>
    %31 = vector.shape_cast %30 : vector<128x128xf32> to vector<8x16x128xf32>
    %32 = arith.truncf %31 : vector<8x16x128xf32> to vector<8x16x128xbf16>
    %c0_10 = arith.constant 0 : index
    %c0_11 = arith.constant 0 : index
    %c0_12 = arith.constant 0 : index
    %c0_13 = arith.constant 0 : index
    %33 = vector.load %arg4[%c0_10, %c0_11, %c0_12, %c0_13] : memref<1x8x16x128xbf16, #tpu.memory_space<vmem>>, vector<1x8x16x128xbf16>
    %34 = vector.shape_cast %33 : vector<1x8x16x128xbf16> to vector<8x16x128xbf16>
    %35 = vector.shape_cast %32 : vector<8x16x128xbf16> to vector<1x8x16x128xbf16>
    tpu.vector_store %arg4[%c0_10, %c0_11, %c0_12, %c0_13], %35 {strides = array<i32>} : memref<1x8x16x128xbf16, #tpu.memory_space<vmem>>, vector<1x8x16x128xbf16>,
    %cst_14 = arith.constant dense<0.000000e+00> : vector<128xf32>
    %36 = vector.multi_reduction <add>, %30, %cst_14 [0] : vector<128x128xf32> to vector<128xf32>
    %37 = vector.shape_cast %36 : vector<128xf32> to vector<1x128xf32>
    %cst_15 = arith.constant 7.812500e-03 : f32
    %38 = vector.broadcast %cst_15 : f32 to vector<1x128xf32>
    %39 = arith.mulf %37, %38 : vector<1x128xf32>
    %40 = vector.broadcast %39 : vector<1x128xf32> to vector<128x128xf32>
    %41 = arith.subf %30, %40 : vector<128x128xf32>
    %42 = arith.mulf %41, %41 : vector<128x128xf32>
    %cst_16 = arith.constant dense<0.000000e+00> : vector<128xf32>
    %43 = vector.multi_reduction <add>, %42, %cst_16 [0] : vector<128x128xf32> to vector<128xf32>
    %44 = vector.shape_cast %43 : vector<128xf32> to vector<1x128xf32>
    %45 = vector.shape_cast %37 : vector<1x128xf32> to vector<1x128xf32>
    %46 = vector.broadcast %45 : vector<1x128xf32> to vector<8x128xf32>
    %c0_17 = arith.constant 0 : index
    %c0_18 = arith.constant 0 : index
    %c0_19 = arith.constant 0 : index
    %c0_20 = arith.constant 0 : index
    %47 = vector.load %arg5[%c0_17, %c0_18, %c0_19, %c0_20] : memref<1x1x8x128xf32, #tpu.memory_space<vmem>>, vector<1x1x8x128xf32>
    %48 = vector.shape_cast %47 : vector<1x1x8x128xf32> to vector<8x128xf32>
    %49 = vector.shape_cast %46 : vector<8x128xf32> to vector<1x1x8x128xf32>
    tpu.vector_store %arg5[%c0_17, %c0_18, %c0_19, %c0_20], %49 {strides = array<i32>} : memref<1x1x8x128xf32, #tpu.memory_space<vmem>>, vector<1x1x8x128xf32>,
    %50 = vector.shape_cast %44 : vector<1x128xf32> to vector<1x128xf32>
    %51 = vector.broadcast %50 : vector<1x128xf32> to vector<8x128xf32>
    %c0_21 = arith.constant 0 : index
    %c0_22 = arith.constant 0 : index
    %c0_23 = arith.constant 0 : index
    %c0_24 = arith.constant 0 : index
    %52 = vector.load %arg6[%c0_21, %c0_22, %c0_23, %c0_24] : memref<1x1x8x128xf32, #tpu.memory_space<vmem>>, vector<1x1x8x128xf32>
    %53 = vector.shape_cast %52 : vector<1x1x8x128xf32> to vector<8x128xf32>
    %54 = vector.shape_cast %51 : vector<8x128xf32> to vector<1x1x8x128xf32>
    tpu.vector_store %arg6[%c0_21, %c0_22, %c0_23, %c0_24], %54 {strides = array<i32>} : memref<1x1x8x128xf32, #tpu.memory_space<vmem>>, vector<1x1x8x128xf32>,
    return
  }
  func.func @transform_0(%arg0: i32, %arg1: i32) -> (i32, i32, i32, i32) {
    %c0_i32 = arith.constant 0 : i32
    %c0_i32_0 = arith.constant 0 : i32
    %c0_i32_1 = arith.constant 0 : i32
    %c0_i32_2 = arith.constant 0 : i32
    return %arg0, %c0_i32, %c0_i32_0, %c0_i32_1 : i32, i32, i32, i32
  }
  func.func @transform_1(%arg0: i32, %arg1: i32) -> (i32, i32) {
    %c0_i32 = arith.constant 0 : i32
    %c0_i32_0 = arith.constant 0 : i32
    %c0_i32_1 = arith.constant 0 : i32
    return %c0_i32, %c0_i32_0 : i32, i32
  }
  func.func @transform_2(%arg0: i32, %arg1: i32) -> (i32, i32, i32, i32) {
    %c0_i32 = arith.constant 0 : i32
    %c0_i32_0 = arith.constant 0 : i32
    %c0_i32_1 = arith.constant 0 : i32
    return %arg0, %arg1, %c0_i32, %c0_i32_0 : i32, i32, i32, i32
  }
  func.func @transform_3(%arg0: i32, %arg1: i32) -> (i32, i32, i32, i32) {
    %c0_i32 = arith.constant 0 : i32
    %c0_i32_0 = arith.constant 0 : i32
    %c0_i32_1 = arith.constant 0 : i32
    return %arg0, %arg1, %c0_i32, %c0_i32_0 : i32, i32, i32, i32
  }
  func.func @transform_4(%arg0: i32, %arg1: i32) -> (i32, i32, i32, i32) {
    %c0_i32 = arith.constant 0 : i32
    %c0_i32_0 = arith.constant 0 : i32
    %c0_i32_1 = arith.constant 0 : i32
    return %arg0, %arg1, %c0_i32, %c0_i32_0 : i32, i32, i32, i32
  }
}

module attributes {stable_mosaic.version = 11 : i64} {
  func.func @kernel(%arg0: i32, %arg1: i32, %arg2: memref<1x16x16x128xbf16, #tpu.memory_space<vmem>>, %arg3: memref<1152x128xbf16, #tpu.memory_space<vmem>>, %arg4: memref<1x128xf32, #tpu.memory_space<vmem>>, %arg5: memref<1x128xf32, #tpu.memory_space<vmem>>, %arg6: memref<1x8x16x128xf32, #tpu.memory_space<vmem>>, %arg7: memref<1x1x8x128xf32, #tpu.memory_space<vmem>>, %arg8: memref<1x1x8x128xf32, #tpu.memory_space<vmem>>, %arg9: memref<10x18x128xbf16, #tpu.memory_space<vmem>>) attributes {dimension_semantics = [#tpu.dimension_semantics<parallel>, #tpu.dimension_semantics<parallel>], iteration_bounds = array<i64: 2, 2>, scalar_prefetch = 0 : i64, scratch_operands = 1 : i64, tpu.core_type = #tpu.core_type<tc>, window_params = [{transform_indices = @transform_0, window_bounds = array<i64: 1, 16, 16, 128>}, {pipeline_mode = #tpu.pipeline_mode<synchronous>, transform_indices = @transform_1, window_bounds = array<i64: 1152, 128>}, {pipeline_mode = #tpu.pipeline_mode<synchronous>, transform_indices = @transform_2, window_bounds = array<i64: 1, 128>}, {pipeline_mode = #tpu.pipeline_mode<synchronous>, transform_indices = @transform_3, window_bounds = array<i64: 1, 128>}, {transform_indices = @transform_4, window_bounds = array<i64: 1, 8, 16, 128>}, {transform_indices = @transform_5, window_bounds = array<i64: 1, 1, 8, 128>}, {transform_indices = @transform_6, window_bounds = array<i64: 1, 1, 8, 128>}]} {
    %c8_i32 = arith.constant 8 : i32
    %0 = arith.muli %arg1, %c8_i32 : i32
    %cst = arith.constant 0.000000e+00 : bf16
    %1 = vector.broadcast %cst : bf16 to vector<10x18x128xbf16>
    %c0 = arith.constant 0 : index
    %c0_0 = arith.constant 0 : index
    %c0_1 = arith.constant 0 : index
    %2 = vector.load %arg9[%c0, %c0_0, %c0_1] : memref<10x18x128xbf16, #tpu.memory_space<vmem>>, vector<10x18x128xbf16>
    tpu.vector_store %arg9[%c0, %c0_0, %c0_1], %1 {strides = array<i32>} : memref<10x18x128xbf16, #tpu.memory_space<vmem>>, vector<10x18x128xbf16>,
    %c0_i32 = arith.constant 0 : i32
    %3 = arith.cmpi eq, %arg1, %c0_i32 : i32
    %4 = arith.extui %3 : i1 to i32
    %c0_i32_2 = arith.constant 0 : i32
    %5 = arith.cmpi ne, %4, %c0_i32_2 : i32
    scf.if %5 {
      %c0_25 = arith.constant 0 : index
      %c0_26 = arith.constant 0 : index
      %c0_27 = arith.constant 0 : index
      %c0_28 = arith.constant 0 : index
      %54 = vector.load %arg2[%c0_25, %c0_26, %c0_27, %c0_28] : memref<1x16x16x128xbf16, #tpu.memory_space<vmem>>, vector<1x9x16x128xbf16>
      %55 = vector.shape_cast %54 : vector<1x9x16x128xbf16> to vector<9x16x128xbf16>
      %56 = arith.extf %55 : vector<9x16x128xbf16> to vector<9x16x128xf32>
      %c0_29 = arith.constant 0 : index
      %c0_30 = arith.constant 0 : index
      %57 = vector.load %arg4[%c0_29, %c0_30] : memref<1x128xf32, #tpu.memory_space<vmem>>, vector<1x128xf32>
      %58 = vector.shape_cast %57 : vector<1x128xf32> to vector<1x1x128xf32>
      %c0_31 = arith.constant 0 : index
      %c0_32 = arith.constant 0 : index
      %59 = vector.load %arg5[%c0_31, %c0_32] : memref<1x128xf32, #tpu.memory_space<vmem>>, vector<1x128xf32>
      %60 = vector.shape_cast %59 : vector<1x128xf32> to vector<1x1x128xf32>
      %61 = vector.broadcast %58 : vector<1x1x128xf32> to vector<9x16x128xf32>
      %62 = arith.mulf %56, %61 : vector<9x16x128xf32>
      %63 = vector.broadcast %60 : vector<1x1x128xf32> to vector<9x16x128xf32>
      %64 = arith.addf %62, %63 : vector<9x16x128xf32>
      %cst_33 = arith.constant 0.000000e+00 : f32
      %65 = vector.broadcast %cst_33 : f32 to vector<9x16x128xf32>
      %66 = arith.maximumf %64, %65 : vector<9x16x128xf32>
      %67 = arith.truncf %66 : vector<9x16x128xf32> to vector<9x16x128xbf16>
      %c1 = arith.constant 1 : index
      %c1_34 = arith.constant 1 : index
      %c0_35 = arith.constant 0 : index
      %68 = vector.load %arg9[%c1, %c1_34, %c0_35] : memref<10x18x128xbf16, #tpu.memory_space<vmem>>, vector<9x16x128xbf16>
      tpu.vector_store %arg9[%c1, %c1_34, %c0_35], %67 {strides = array<i32>} : memref<10x18x128xbf16, #tpu.memory_space<vmem>>, vector<9x16x128xbf16>,
    } else {
    }
    %c1_i32 = arith.constant 1 : i32
    %6 = arith.cmpi eq, %arg1, %c1_i32 : i32
    %7 = arith.extui %6 : i1 to i32
    %c0_i32_3 = arith.constant 0 : i32
    %8 = arith.cmpi ne, %7, %c0_i32_3 : i32
    scf.if %8 {
      %c1_i32_25 = arith.constant 1 : i32
      %54 = arith.subi %0, %c1_i32_25 : i32
      %c0_26 = arith.constant 0 : index
      %55 = arith.index_cast %54 : i32 to index
      %c0_27 = arith.constant 0 : index
      %c0_28 = arith.constant 0 : index
      %56 = vector.load %arg2[%c0_26, %55, %c0_27, %c0_28] : memref<1x16x16x128xbf16, #tpu.memory_space<vmem>>, vector<1x9x16x128xbf16>
      %57 = vector.shape_cast %56 : vector<1x9x16x128xbf16> to vector<9x16x128xbf16>
      %58 = arith.extf %57 : vector<9x16x128xbf16> to vector<9x16x128xf32>
      %c0_29 = arith.constant 0 : index
      %c0_30 = arith.constant 0 : index
      %59 = vector.load %arg4[%c0_29, %c0_30] : memref<1x128xf32, #tpu.memory_space<vmem>>, vector<1x128xf32>
      %60 = vector.shape_cast %59 : vector<1x128xf32> to vector<1x1x128xf32>
      %c0_31 = arith.constant 0 : index
      %c0_32 = arith.constant 0 : index
      %61 = vector.load %arg5[%c0_31, %c0_32] : memref<1x128xf32, #tpu.memory_space<vmem>>, vector<1x128xf32>
      %62 = vector.shape_cast %61 : vector<1x128xf32> to vector<1x1x128xf32>
      %63 = vector.broadcast %60 : vector<1x1x128xf32> to vector<9x16x128xf32>
      %64 = arith.mulf %58, %63 : vector<9x16x128xf32>
      %65 = vector.broadcast %62 : vector<1x1x128xf32> to vector<9x16x128xf32>
      %66 = arith.addf %64, %65 : vector<9x16x128xf32>
      %cst_33 = arith.constant 0.000000e+00 : f32
      %67 = vector.broadcast %cst_33 : f32 to vector<9x16x128xf32>
      %68 = arith.maximumf %66, %67 : vector<9x16x128xf32>
      %69 = arith.truncf %68 : vector<9x16x128xf32> to vector<9x16x128xbf16>
      %c0_34 = arith.constant 0 : index
      %c1 = arith.constant 1 : index
      %c0_35 = arith.constant 0 : index
      %70 = vector.load %arg9[%c0_34, %c1, %c0_35] : memref<10x18x128xbf16, #tpu.memory_space<vmem>>, vector<9x16x128xbf16>
      tpu.vector_store %arg9[%c0_34, %c1, %c0_35], %69 {strides = array<i32>} : memref<10x18x128xbf16, #tpu.memory_space<vmem>>, vector<9x16x128xbf16>,
    } else {
    }
    %c0_4 = arith.constant 0 : index
    %c0_5 = arith.constant 0 : index
    %c0_6 = arith.constant 0 : index
    %9 = vector.load %arg9[%c0_4, %c0_5, %c0_6] : memref<10x18x128xbf16, #tpu.memory_space<vmem>>, vector<10x18x128xbf16>
    %10 = vector.extract_strided_slice %9 {offsets = [0, 0, 0], sizes = [8, 16, 128], strides = [1, 1, 1]} : vector<10x18x128xbf16> to vector<8x16x128xbf16>
    %11 = vector.shape_cast %10 : vector<8x16x128xbf16> to vector<128x128xbf16>
    %12 = vector.extract_strided_slice %9 {offsets = [0, 1, 0], sizes = [8, 16, 128], strides = [1, 1, 1]} : vector<10x18x128xbf16> to vector<8x16x128xbf16>
    %13 = vector.shape_cast %12 : vector<8x16x128xbf16> to vector<128x128xbf16>
    %14 = vector.extract_strided_slice %9 {offsets = [0, 2, 0], sizes = [8, 16, 128], strides = [1, 1, 1]} : vector<10x18x128xbf16> to vector<8x16x128xbf16>
    %15 = vector.shape_cast %14 : vector<8x16x128xbf16> to vector<128x128xbf16>
    %16 = vector.extract_strided_slice %9 {offsets = [1, 0, 0], sizes = [8, 16, 128], strides = [1, 1, 1]} : vector<10x18x128xbf16> to vector<8x16x128xbf16>
    %17 = vector.shape_cast %16 : vector<8x16x128xbf16> to vector<128x128xbf16>
    %18 = vector.extract_strided_slice %9 {offsets = [1, 1, 0], sizes = [8, 16, 128], strides = [1, 1, 1]} : vector<10x18x128xbf16> to vector<8x16x128xbf16>
    %19 = vector.shape_cast %18 : vector<8x16x128xbf16> to vector<128x128xbf16>
    %20 = vector.extract_strided_slice %9 {offsets = [1, 2, 0], sizes = [8, 16, 128], strides = [1, 1, 1]} : vector<10x18x128xbf16> to vector<8x16x128xbf16>
    %21 = vector.shape_cast %20 : vector<8x16x128xbf16> to vector<128x128xbf16>
    %22 = vector.extract_strided_slice %9 {offsets = [2, 0, 0], sizes = [8, 16, 128], strides = [1, 1, 1]} : vector<10x18x128xbf16> to vector<8x16x128xbf16>
    %23 = vector.shape_cast %22 : vector<8x16x128xbf16> to vector<128x128xbf16>
    %24 = vector.extract_strided_slice %9 {offsets = [2, 1, 0], sizes = [8, 16, 128], strides = [1, 1, 1]} : vector<10x18x128xbf16> to vector<8x16x128xbf16>
    %25 = vector.shape_cast %24 : vector<8x16x128xbf16> to vector<128x128xbf16>
    %26 = vector.extract_strided_slice %9 {offsets = [2, 2, 0], sizes = [8, 16, 128], strides = [1, 1, 1]} : vector<10x18x128xbf16> to vector<8x16x128xbf16>
    %27 = vector.shape_cast %26 : vector<8x16x128xbf16> to vector<128x128xbf16>
    %28 = tpu.concatenate %11, %13, %15, %17, %19, %21, %23, %25, %27 in 1 : vector<128x128xbf16>, vector<128x128xbf16>, vector<128x128xbf16>, vector<128x128xbf16>, vector<128x128xbf16>, vector<128x128xbf16>, vector<128x128xbf16>, vector<128x128xbf16>, vector<128x128xbf16> -> vector<128x1152xbf16>
    %c0_7 = arith.constant 0 : index
    %c0_8 = arith.constant 0 : index
    %29 = vector.load %arg3[%c0_7, %c0_8] : memref<1152x128xbf16, #tpu.memory_space<vmem>>, vector<1152x128xbf16>
    %cst_9 = arith.constant dense<0.000000e+00> : vector<128x128xf32>
    %30 = tpu.matmul %28, %29, %cst_9 {dimension_numbers = #tpu.dot_dimension_numbers<[1], [0], [0], [1], [0, 0, 1, 1], [], []>} : vector<128x1152xbf16>, vector<1152x128xbf16>, vector<128x128xf32> -> vector<128x128xf32>
    %31 = vector.shape_cast %30 : vector<128x128xf32> to vector<8x16x128xf32>
    %c0_10 = arith.constant 0 : index
    %c0_11 = arith.constant 0 : index
    %c0_12 = arith.constant 0 : index
    %c0_13 = arith.constant 0 : index
    %32 = vector.load %arg6[%c0_10, %c0_11, %c0_12, %c0_13] : memref<1x8x16x128xf32, #tpu.memory_space<vmem>>, vector<1x8x16x128xf32>
    %33 = vector.shape_cast %32 : vector<1x8x16x128xf32> to vector<8x16x128xf32>
    %34 = vector.shape_cast %31 : vector<8x16x128xf32> to vector<1x8x16x128xf32>
    tpu.vector_store %arg6[%c0_10, %c0_11, %c0_12, %c0_13], %34 {strides = array<i32>} : memref<1x8x16x128xf32, #tpu.memory_space<vmem>>, vector<1x8x16x128xf32>,
    %cst_14 = arith.constant dense<0.000000e+00> : vector<128xf32>
    %35 = vector.multi_reduction <add>, %30, %cst_14 [0] : vector<128x128xf32> to vector<128xf32>
    %36 = vector.shape_cast %35 : vector<128xf32> to vector<1x128xf32>
    %cst_15 = arith.constant 7.812500e-03 : f32
    %37 = vector.broadcast %cst_15 : f32 to vector<1x128xf32>
    %38 = arith.mulf %36, %37 : vector<1x128xf32>
    %39 = vector.broadcast %38 : vector<1x128xf32> to vector<128x128xf32>
    %40 = arith.subf %30, %39 : vector<128x128xf32>
    %41 = arith.mulf %40, %40 : vector<128x128xf32>
    %cst_16 = arith.constant dense<0.000000e+00> : vector<128xf32>
    %42 = vector.multi_reduction <add>, %41, %cst_16 [0] : vector<128x128xf32> to vector<128xf32>
    %43 = vector.shape_cast %42 : vector<128xf32> to vector<1x128xf32>
    %44 = vector.shape_cast %36 : vector<1x128xf32> to vector<1x128xf32>
    %45 = vector.broadcast %44 : vector<1x128xf32> to vector<8x128xf32>
    %c0_17 = arith.constant 0 : index
    %c0_18 = arith.constant 0 : index
    %c0_19 = arith.constant 0 : index
    %c0_20 = arith.constant 0 : index
    %46 = vector.load %arg7[%c0_17, %c0_18, %c0_19, %c0_20] : memref<1x1x8x128xf32, #tpu.memory_space<vmem>>, vector<1x1x8x128xf32>
    %47 = vector.shape_cast %46 : vector<1x1x8x128xf32> to vector<8x128xf32>
    %48 = vector.shape_cast %45 : vector<8x128xf32> to vector<1x1x8x128xf32>
    tpu.vector_store %arg7[%c0_17, %c0_18, %c0_19, %c0_20], %48 {strides = array<i32>} : memref<1x1x8x128xf32, #tpu.memory_space<vmem>>, vector<1x1x8x128xf32>,
    %49 = vector.shape_cast %43 : vector<1x128xf32> to vector<1x128xf32>
    %50 = vector.broadcast %49 : vector<1x128xf32> to vector<8x128xf32>
    %c0_21 = arith.constant 0 : index
    %c0_22 = arith.constant 0 : index
    %c0_23 = arith.constant 0 : index
    %c0_24 = arith.constant 0 : index
    %51 = vector.load %arg8[%c0_21, %c0_22, %c0_23, %c0_24] : memref<1x1x8x128xf32, #tpu.memory_space<vmem>>, vector<1x1x8x128xf32>
    %52 = vector.shape_cast %51 : vector<1x1x8x128xf32> to vector<8x128xf32>
    %53 = vector.shape_cast %50 : vector<8x128xf32> to vector<1x1x8x128xf32>
    tpu.vector_store %arg8[%c0_21, %c0_22, %c0_23, %c0_24], %53 {strides = array<i32>} : memref<1x1x8x128xf32, #tpu.memory_space<vmem>>, vector<1x1x8x128xf32>,
    return
  }
  func.func @transform_0(%arg0: i32, %arg1: i32) -> (i32, i32, i32, i32) {
    %c0_i32 = arith.constant 0 : i32
    %c0_i32_0 = arith.constant 0 : i32
    %c0_i32_1 = arith.constant 0 : i32
    %c0_i32_2 = arith.constant 0 : i32
    return %arg0, %c0_i32, %c0_i32_0, %c0_i32_1 : i32, i32, i32, i32
  }
  func.func @transform_1(%arg0: i32, %arg1: i32) -> (i32, i32) {
    %c0_i32 = arith.constant 0 : i32
    %c0_i32_0 = arith.constant 0 : i32
    %c0_i32_1 = arith.constant 0 : i32
    return %c0_i32, %c0_i32_0 : i32, i32
  }
  func.func @transform_2(%arg0: i32, %arg1: i32) -> (i32, i32) {
    %c0_i32 = arith.constant 0 : i32
    %c0_i32_0 = arith.constant 0 : i32
    %c0_i32_1 = arith.constant 0 : i32
    return %c0_i32, %c0_i32_0 : i32, i32
  }
  func.func @transform_3(%arg0: i32, %arg1: i32) -> (i32, i32) {
    %c0_i32 = arith.constant 0 : i32
    %c0_i32_0 = arith.constant 0 : i32
    %c0_i32_1 = arith.constant 0 : i32
    return %c0_i32, %c0_i32_0 : i32, i32
  }
  func.func @transform_4(%arg0: i32, %arg1: i32) -> (i32, i32, i32, i32) {
    %c0_i32 = arith.constant 0 : i32
    %c0_i32_0 = arith.constant 0 : i32
    %c0_i32_1 = arith.constant 0 : i32
    return %arg0, %arg1, %c0_i32, %c0_i32_0 : i32, i32, i32, i32
  }
  func.func @transform_5(%arg0: i32, %arg1: i32) -> (i32, i32, i32, i32) {
    %c0_i32 = arith.constant 0 : i32
    %c0_i32_0 = arith.constant 0 : i32
    %c0_i32_1 = arith.constant 0 : i32
    return %arg0, %arg1, %c0_i32, %c0_i32_0 : i32, i32, i32, i32
  }
  func.func @transform_6(%arg0: i32, %arg1: i32) -> (i32, i32, i32, i32) {
    %c0_i32 = arith.constant 0 : i32
    %c0_i32_0 = arith.constant 0 : i32
    %c0_i32_1 = arith.constant 0 : i32
    return %arg0, %arg1, %c0_i32, %c0_i32_0 : i32, i32, i32, i32
  }
}

module attributes {stable_mosaic.version = 11 : i64} {
  func.func @kernel(%arg0: i32, %arg1: i32, %arg2: memref<1x8x16x128xf32, #tpu.memory_space<vmem>>, %arg3: memref<1x128xf32, #tpu.memory_space<vmem>>, %arg4: memref<1x128xf32, #tpu.memory_space<vmem>>, %arg5: memref<1x8x128xf32, #tpu.memory_space<vmem>>) attributes {dimension_semantics = [#tpu.dimension_semantics<parallel>, #tpu.dimension_semantics<parallel>], iteration_bounds = array<i64: 2, 2>, scalar_prefetch = 0 : i64, scratch_operands = 0 : i64, tpu.core_type = #tpu.core_type<tc>, window_params = [{transform_indices = @transform_0, window_bounds = array<i64: 1, 8, 16, 128>}, {pipeline_mode = #tpu.pipeline_mode<synchronous>, transform_indices = @transform_1, window_bounds = array<i64: 1, 128>}, {pipeline_mode = #tpu.pipeline_mode<synchronous>, transform_indices = @transform_2, window_bounds = array<i64: 1, 128>}, {transform_indices = @transform_3, window_bounds = array<i64: 1, 8, 128>}]} {
    %c0 = arith.constant 0 : index
    %c0_0 = arith.constant 0 : index
    %c0_1 = arith.constant 0 : index
    %c0_2 = arith.constant 0 : index
    %0 = vector.load %arg2[%c0, %c0_0, %c0_1, %c0_2] : memref<1x8x16x128xf32, #tpu.memory_space<vmem>>, vector<1x8x16x128xf32>
    %1 = vector.shape_cast %0 : vector<1x8x16x128xf32> to vector<8x16x128xf32>
    %2 = vector.shape_cast %1 : vector<8x16x128xf32> to vector<128x128xf32>
    %c0_3 = arith.constant 0 : index
    %c0_4 = arith.constant 0 : index
    %3 = vector.load %arg3[%c0_3, %c0_4] : memref<1x128xf32, #tpu.memory_space<vmem>>, vector<1x128xf32>
    %4 = vector.broadcast %3 : vector<1x128xf32> to vector<128x128xf32>
    %5 = arith.mulf %2, %4 : vector<128x128xf32>
    %c0_5 = arith.constant 0 : index
    %c0_6 = arith.constant 0 : index
    %6 = vector.load %arg4[%c0_5, %c0_6] : memref<1x128xf32, #tpu.memory_space<vmem>>, vector<1x128xf32>
    %7 = vector.broadcast %6 : vector<1x128xf32> to vector<128x128xf32>
    %8 = arith.addf %5, %7 : vector<128x128xf32>
    %cst = arith.constant 0.000000e+00 : f32
    %9 = vector.broadcast %cst : f32 to vector<128x128xf32>
    %10 = arith.maximumf %8, %9 : vector<128x128xf32>
    %11 = tpu.transpose %10, [1, 0] : vector<128x128xf32> -> vector<128x128xf32>
    %12 = vector.extract_strided_slice %11 {offsets = [0, 0], sizes = [8, 128], strides = [1, 1]} : vector<128x128xf32> to vector<8x128xf32>
    %c0_7 = arith.constant 0 : index
    %c0_8 = arith.constant 0 : index
    %c0_9 = arith.constant 0 : index
    %13 = vector.load %arg5[%c0_7, %c0_8, %c0_9] : memref<1x8x128xf32, #tpu.memory_space<vmem>>, vector<1x8x128xf32>
    %14 = vector.shape_cast %13 : vector<1x8x128xf32> to vector<8x128xf32>
    %15 = vector.shape_cast %12 : vector<8x128xf32> to vector<1x8x128xf32>
    tpu.vector_store %arg5[%c0_7, %c0_8, %c0_9], %15 {strides = array<i32>} : memref<1x8x128xf32, #tpu.memory_space<vmem>>, vector<1x8x128xf32>,
    return
  }
  func.func @transform_0(%arg0: i32, %arg1: i32) -> (i32, i32, i32, i32) {
    %c0_i32 = arith.constant 0 : i32
    %c0_i32_0 = arith.constant 0 : i32
    %c0_i32_1 = arith.constant 0 : i32
    return %arg0, %arg1, %c0_i32, %c0_i32_0 : i32, i32, i32, i32
  }
  func.func @transform_1(%arg0: i32, %arg1: i32) -> (i32, i32) {
    %c0_i32 = arith.constant 0 : i32
    %c0_i32_0 = arith.constant 0 : i32
    %c0_i32_1 = arith.constant 0 : i32
    return %c0_i32, %c0_i32_0 : i32, i32
  }
  func.func @transform_2(%arg0: i32, %arg1: i32) -> (i32, i32) {
    %c0_i32 = arith.constant 0 : i32
    %c0_i32_0 = arith.constant 0 : i32
    %c0_i32_1 = arith.constant 0 : i32
    return %c0_i32, %c0_i32_0 : i32, i32
  }
  func.func @transform_3(%arg0: i32, %arg1: i32) -> (i32, i32, i32) {
    %c0_i32 = arith.constant 0 : i32
    %c0_i32_0 = arith.constant 0 : i32
    return %arg0, %c0_i32, %arg1 : i32, i32, i32
  }
}

</mosaic_0001>

<llo_original>
// kernel: expanding_block_forward.5
$region0: #{expanding_block_forward.5}
  #allocation0 [shape = 'u32[]', space=smem, size = 0x4, offset = 0x4, fixed_abs, tag = 'smem constant byte address 0x4 - core index']
  #allocation1 [shape = 'u32[144,128]{1,0:T(1,128)}', space=vmem, size = 0x12000, scoped, tag = 'internal scratch']
  %s0 = inlined_call_operand.vmem [shape: f32[2,16,16,128], index: 0, kind: input, shape index: {}]
  %s1 = inlined_call_operand.vmem [shape: f32[1,128], index: 1, kind: input, shape index: {}]
  %s2 = inlined_call_operand.vmem [shape: f32[1,128], index: 2, kind: input, shape index: {}]
  %s3 = inlined_call_operand.vmem [shape: f32[2,8,256], index: 3, kind: output, shape index: {}]
  %s4 = sld [smem:[#allocation0]]
  $region45: #{expanding_block_forward.5} parent=0
    _
  %s6 = ssub.s32 1, %s4
  %s7 = scalar_select 0, %s6, %s4
  loop: start=0, step=1, limit=6
  $region2: #{expanding_block_forward.5} parent=0 // loop_pre_header
    _
  $region3: #{expanding_block_forward.5} parent=0 // loop_header
    %s9 = sphi 0, %s13
    %p10 = scmp.ge.s32.totalorder %s9, 6
    %s16 = sphi 0, %s28
    %s17 = sphi 0, %s24
    %s18 = sphi 0, %s16
    %s19 = sphi 0, %s17
    %s20 = sphi 0, %s18
    %s21 = sphi 0, %s19
    %s33 = sphi 0, %s35
    %s36 = sphi 0, %s33
    %s37 = sphi 0, %s36
    %s53 = sphi 0, %s37
    %s57 = sphi 0, %s57
    %s59 = sphi 0, %s57
    %s60 = sphi 0, %s59
    %s74 = sphi 0, %s60
    %s78 = sphi 0, %s78
    %s80 = sphi 0, %s78
    %s81 = sphi 0, %s80
    %s95 = sphi 0, %s81
    %s103 = sphi 0, %s105
    %s106 = sphi 0, %s103
    %s107 = sphi 0, %s106
    %s123 = sphi 0, %s107
  $region4: #{expanding_block_forward.5} parent=0 // loop_header_branch
    %12 = sbr.rel (%p10) target = $region8
  $region5: #{expanding_block_forward.5} parent=0 // loop_body
    %s14 = ssub.s32 %s9, 1
    %s15 = ssub.s32 %s9, 2
    %s22 = sadd.s32 1, %s17
    %p23 = scmp.ge.s32.totalorder %s22, 2
    %s24 = scalar_select %p23, 0, %s22
    %s25 = sadd.s32 1, %s16
    %s26 = scalar_select %p23, %s25, %s16
    %p27 = scmp.ge.s32.totalorder %s26, 2
    %s28 = scalar_select %p27, 0, %s26
    %s29 = ssub.s32 %s16, %s28
    %s30 = ssub.s32 %s17, %s24
    %s31 = sor.u32 %s29, %s30
    %p32 = scmp.eq.s32.totalorder %s31, 0
    %s34 = sadd.s32 %s33, 1
    %s35 = scalar_select %p32, %s33, %s34
    %p38 = pneg %p32
    %p39 = scmp.eq.s32.totalorder %s9, 3
    %p40 = por %p38, %p39
    %p41 = scmp.ne.s32.totalorder %s33, %s36
    %p42 = scmp.eq.s32.totalorder %s9, 0
    %p43 = por %p41, %p42
    %p44 = scmp.ne.s32.totalorder %s33, %s36
    %p45 = scmp.eq.s32.totalorder %s14, 3
    %p46 = por %p44, %p45
    %p47 = scmp.ne.s32.totalorder %s36, %s37
    %p48 = scmp.eq.s32.totalorder %s14, 0
    %p49 = por %p47, %p48
    %p50 = scmp.ne.s32.totalorder %s36, %s37
    %p51 = scmp.eq.s32.totalorder %s15, 3
    %p52 = por %p50, %p51
    %p54 = scmp.ne.s32.totalorder %s37, %s53
    %p55 = scmp.eq.s32.totalorder %s15, 0
    %p56 = por %p54, %p55
    %s58 = sadd.s32 %s57, 1
    %p61 = scmp.eq.s32.totalorder %s9, 3
    %p62 = scmp.ne.s32.totalorder %s57, %s59
    %p63 = scmp.eq.s32.totalorder %s9, 0
    %p64 = por %p62, %p63
    %p65 = scmp.ne.s32.totalorder %s57, %s59
    %p66 = scmp.eq.s32.totalorder %s14, 3
    %p67 = por %p65, %p66
    %p68 = scmp.ne.s32.totalorder %s59, %s60
    %p69 = scmp.eq.s32.totalorder %s14, 0
    %p70 = por %p68, %p69
    %p71 = scmp.ne.s32.totalorder %s59, %s60
    %p72 = scmp.eq.s32.totalorder %s15, 3
    %p73 = por %p71, %p72
    %p75 = scmp.ne.s32.totalorder %s60, %s74
    %p76 = scmp.eq.s32.totalorder %s15, 0
    %p77 = por %p75, %p76
    %s79 = sadd.s32 %s78, 1
    %p82 = scmp.eq.s32.totalorder %s9, 3
    %p83 = scmp.ne.s32.totalorder %s78, %s80
    %p84 = scmp.eq.s32.totalorder %s9, 0
    %p85 = por %p83, %p84
    %p86 = scmp.ne.s32.totalorder %s78, %s80
    %p87 = scmp.eq.s32.totalorder %s14, 3
    %p88 = por %p86, %p87
    %p89 = scmp.ne.s32.totalorder %s80, %s81
    %p90 = scmp.eq.s32.totalorder %s14, 0
    %p91 = por %p89, %p90
    %p92 = scmp.ne.s32.totalorder %s80, %s81
    %p93 = scmp.eq.s32.totalorder %s15, 3
    %p94 = por %p92, %p93
    %p96 = scmp.ne.s32.totalorder %s81, %s95
    %p97 = scmp.eq.s32.totalorder %s15, 0
    %p98 = por %p96, %p97
    %s99 = ssub.s32 %s16, %s28
    %s100 = ssub.s32 %s17, %s24
    %s101 = sor.u32 %s99, %s100
    %p102 = scmp.eq.s32.totalorder %s101, 0
    %s104 = sadd.s32 %s103, 1
    %s105 = scalar_select %p102, %s103, %s104
    %p108 = pneg %p102
    %p109 = scmp.eq.s32.totalorder %s9, 3
    %p110 = por %p108, %p109
    %p111 = scmp.ne.s32.totalorder %s103, %s106
    %p112 = scmp.eq.s32.totalorder %s9, 0
    %p113 = por %p111, %p112
    %p114 = scmp.ne.s32.totalorder %s103, %s106
    %p115 = scmp.eq.s32.totalorder %s14, 3
    %p116 = por %p114, %p115
    %p117 = scmp.ne.s32.totalorder %s106, %s107
    %p118 = scmp.eq.s32.totalorder %s14, 0
    %p119 = por %p117, %p118
    %p120 = scmp.ne.s32.totalorder %s106, %s107
    %p121 = scmp.eq.s32.totalorder %s15, 3
    %p122 = por %p120, %p121
    %p124 = scmp.ne.s32.totalorder %s107, %s123
    %p125 = scmp.eq.s32.totalorder %s15, 0
    %p126 = por %p124, %p125
    %p127 = scmp.le.s32.totalorder 1, %s9
    %p128 = scmp.lt.s32.totalorder %s9, 5
    %p129 = pnand %p127, %p128
    %p130 = pneg %p129
    // Predicated region
    $region9: #{expanding_block_forward.5} parent=5 // pred_check
      _
    $region10: #{expanding_block_forward.5} parent=5 // pred_check_branch
      %132 = sbr.rel (%p129) target = $region12
    $region11: #{expanding_block_forward.5} parent=5 // pred_region
      %s133 = ssub.s32 %s9, 1
      // Predicated region
      $region13: #{expanding_block_forward.5} parent=11 // pred_check
        %p134 = pneg %p70
      $region14: #{expanding_block_forward.5} parent=11 // pred_check_branch
        %136 = sbr.rel (%p134) target = $region16
      $region15: #{expanding_block_forward.5} parent=11 // pred_region
        _
      $region16: #{expanding_block_forward.5} parent=11 // pred_fallthru
        _
      // Predicated region
      $region17: #{expanding_block_forward.5} parent=11 // pred_check
        %p137 = pneg %p91
      $region18: #{expanding_block_forward.5} parent=11 // pred_check_branch
        %139 = sbr.rel (%p137) target = $region20
      $region19: #{expanding_block_forward.5} parent=11 // pred_region
        _
      $region20: #{expanding_block_forward.5} parent=11 // pred_fallthru
        _
    $region12: #{expanding_block_forward.5} parent=5 // pred_fallthru
      _
    %p140 = scmp.lt.s32.totalorder %s9, 4
    // Predicated region
    $region21: #{expanding_block_forward.5} parent=5 // pred_check
      %p141 = pneg %p140
    $region22: #{expanding_block_forward.5} parent=5 // pred_check_branch
      %143 = sbr.rel (%p141) target = $region24
    $region23: #{expanding_block_forward.5} parent=5 // pred_region
      // Predicated region
      $region25: #{expanding_block_forward.5} parent=23 // pred_check
        %p144 = pneg %p43
      $region26: #{expanding_block_forward.5} parent=23 // pred_check_branch
        %146 = sbr.rel (%p144) target = $region28
      $region27: #{expanding_block_forward.5} parent=23 // pred_region
        %s147 = smul.u32 8, %s17
        %p148 = scmp.lt.s32.totalorder %s16, 1
        %s149 = scalar_select %p148, %s16, 1
        %p150 = scmp.lt.s32.totalorder %s147, 15
        %s151 = scalar_select %p150, %s147, 15
        %s152 = smul.addr %s151, 2
        %s153 = smul.addr %s149, 32
        %s154 = sadd.s32 %s152, %s153
        %s155 = smul.addr %s154, 8
        %s156 = scalar_lea.vmem %s0, %s155
        %s157 = smul.u32 8, %s17
      $region28: #{expanding_block_forward.5} parent=23 // pred_fallthru
        _
    $region24: #{expanding_block_forward.5} parent=5 // pred_fallthru
      _
    %p158 = scmp.le.s32.totalorder 1, %s9
    %p159 = scmp.lt.s32.totalorder %s9, 5
    %p160 = pnand %p158, %p159
    %p161 = pneg %p160
    // Predicated region
    $region29: #{expanding_block_forward.5} parent=5 // pred_check
      _
    $region30: #{expanding_block_forward.5} parent=5 // pred_check_branch
      %163 = sbr.rel (%p160) target = $region32
    $region31: #{expanding_block_forward.5} parent=5 // pred_region
      %s164 = ssub.s32 %s9, 1
      %s165 = smul.u32 8, %s19
      %p166 = scmp.lt.s32.totalorder %s18, 1
      %s167 = scalar_select %p166, %s18, 1
      %p168 = scmp.lt.s32.totalorder %s165, 15
      %s169 = scalar_select %p168, %s165, 15
      %s170 = smul.addr %s169, 2
      %s171 = smul.addr %s167, 32
      %s172 = sadd.s32 %s170, %s171
      %s173 = smul.addr %s172, 8
      %s174 = scalar_lea.vmem %s0, %s173
      %p175 = pneg %p49
      %p176 = pneg %p46
      %p177 = pneg %p70
      %p178 = pneg %p67
      %p179 = pneg %p91
      %p180 = pneg %p88
      %p181 = pneg %p119
      %p182 = pneg %p116
      %p183 = scmp.lt.s32.totalorder %s18, 1
      %s184 = scalar_select %p183, %s18, 1
      %p185 = scmp.lt.s32.totalorder %s19, 1
      %s186 = scalar_select %p185, %s19, 1
      %s187 = smul.addr %s184, 2
      %s188 = sadd.s32 %s186, %s187
      %s189 = smul.addr %s188, 8
      %s190 = scalar_lea.vmem %s3, %s189
      %s191 = smul.u32 8, %s19
      %p192 = scmp.lt.s32.totalorder %s18, 1
      %s193 = scalar_select %p192, %s18, 1
      %p194 = scmp.lt.s32.totalorder %s191, 15
      %s195 = scalar_select %p194, %s191, 15
      %s196 = smul.addr %s195, 2
      %s197 = smul.addr %s193, 32
      %s198 = sadd.s32 %s196, %s197
      %s199 = smul.addr %s198, 8
      %s200 = scalar_lea.vmem %s0, %s199
      %s201 = smul.u32 8, %s19
      %p202 = scmp.lt.s32.totalorder %s18, 1
      %s203 = scalar_select %p202, %s18, 1
      %p204 = scmp.lt.s32.totalorder %s19, 1
      %s205 = scalar_select %p204, %s19, 1
      %s206 = smul.addr %s203, 2
      %s207 = sadd.s32 %s205, %s206
      %s208 = smul.addr %s207, 8
      %s209 = scalar_lea.vmem %s3, %s208
      %v210 = vld [vmem:[%s200] sm:$0xff]
      %v211 = vld [vmem:[%s200 + $0x8] sm:$0xff]
      %v212 = vld [vmem:[%s200 + $0x10] sm:$0xff]
      %v213 = vld [vmem:[%s200 + $0x18] sm:$0xff]
      %v214 = vld [vmem:[%s200 + $0x20] sm:$0xff]
      %v215 = vld [vmem:[%s200 + $0x28] sm:$0xff]
      %v216 = vld [vmem:[%s200 + $0x30] sm:$0xff]
      %v217 = vld [vmem:[%s200 + $0x38] sm:$0xff]
      %v218 = vld [vmem:[%s200 + $0x40] sm:$0xff]
      %v219 = vld [vmem:[%s200 + $0x48] sm:$0xff]
      %v220 = vld [vmem:[%s200 + $0x50] sm:$0xff]
      %v221 = vld [vmem:[%s200 + $0x58] sm:$0xff]
      %v222 = vld [vmem:[%s200 + $0x60] sm:$0xff]
      %v223 = vld [vmem:[%s200 + $0x68] sm:$0xff]
      %v224 = vld [vmem:[%s200 + $0x70] sm:$0xff]
      %v225 = vld [vmem:[%s200 + $0x78] sm:$0xff]
      %v226 = vld [vmem:[%s1] sm:$0x1]
      %v228 = vlaneseq
      %v229 = vshrl.u32 %v228, 7
      %v230 = vsub.s32 0, %v229
      %v231 = vrot.slane %v226, %v230
      %v233 = vmul.f32 %v210, %v231
      %v234 = vmul.f32 %v211, %v231
      %v235 = vmul.f32 %v212, %v231
      %v236 = vmul.f32 %v213, %v231
      %v237 = vmul.f32 %v214, %v231
      %v238 = vmul.f32 %v215, %v231
      %v239 = vmul.f32 %v216, %v231
      %v240 = vmul.f32 %v217, %v231
      %v241 = vmul.f32 %v218, %v231
      %v242 = vmul.f32 %v219, %v231
      %v243 = vmul.f32 %v220, %v231
      %v244 = vmul.f32 %v221, %v231
      %v245 = vmul.f32 %v222, %v231
      %v246 = vmul.f32 %v223, %v231
      %v247 = vmul.f32 %v224, %v231
      %v248 = vmul.f32 %v225, %v231
      %v249 = vld [vmem:[%s2] sm:$0x1]
      %v251 = vlaneseq
      %v252 = vshrl.u32 %v251, 7
      %v253 = vsub.s32 0, %v252
      %v254 = vrot.slane %v249, %v253
      %v256 = vadd.f32 %v233, %v254
      %v257 = vadd.f32 %v234, %v254
      %v258 = vadd.f32 %v235, %v254
      %v259 = vadd.f32 %v236, %v254
      %v260 = vadd.f32 %v237, %v254
      %v261 = vadd.f32 %v238, %v254
      %v262 = vadd.f32 %v239, %v254
      %v263 = vadd.f32 %v240, %v254
      %v264 = vadd.f32 %v241, %v254
      %v265 = vadd.f32 %v242, %v254
      %v266 = vadd.f32 %v243, %v254
      %v267 = vadd.f32 %v244, %v254
      %v268 = vadd.f32 %v245, %v254
      %v269 = vadd.f32 %v246, %v254
      %v270 = vadd.f32 %v247, %v254
      %v271 = vadd.f32 %v248, %v254
      %v272 = vmax.f32 %v256, 0.0
      %v273 = vmax.f32 %v257, 0.0
      %v274 = vmax.f32 %v258, 0.0
      %v275 = vmax.f32 %v259, 0.0
      %v276 = vmax.f32 %v260, 0.0
      %v277 = vmax.f32 %v261, 0.0
      %v278 = vmax.f32 %v262, 0.0
      %v279 = vmax.f32 %v263, 0.0
      %v280 = vmax.f32 %v264, 0.0
      %v281 = vmax.f32 %v265, 0.0
      %v282 = vmax.f32 %v266, 0.0
      %v283 = vmax.f32 %v267, 0.0
      %v284 = vmax.f32 %v268, 0.0
      %v285 = vmax.f32 %v269, 0.0
      %v286 = vmax.f32 %v270, 0.0
      %v287 = vmax.f32 %v271, 0.0
      %288 = vxpose.xlu0.b32.start [1/16] %v272, 128
      %289 = vxpose.xlu0.b32.cont [2/16] %v273, 128
      %290 = vxpose.xlu0.b32.cont [3/16] %v274, 128
      %291 = vxpose.xlu0.b32.cont [4/16] %v275, 128
      %292 = vxpose.xlu0.b32.cont [5/16] %v276, 128
      %293 = vxpose.xlu0.b32.cont [6/16] %v277, 128
      %294 = vxpose.xlu0.b32.cont [7/16] %v278, 128
      %295 = vxpose.xlu0.b32.cont [8/16] %v279, 128
      %296 = vxpose.xlu0.b32.cont [9/16] %v280, 128
      %297 = vxpose.xlu0.b32.cont [10/16] %v281, 128
      %298 = vxpose.xlu0.b32.cont [11/16] %v282, 128
      %299 = vxpose.xlu0.b32.cont [12/16] %v283, 128
      %300 = vxpose.xlu0.b32.cont [13/16] %v284, 128
      %301 = vxpose.xlu0.b32.cont [14/16] %v285, 128
      %302 = vxpose.xlu0.b32.cont [15/16] %v286, 128
      %303 = vxpose.xlu0.b32.end [16/16] %v287, 128
      %v304 = vpop.trf.xlu0
      %v305 = vpop.trf.xlu0
      %v306 = vpop.trf.xlu0
      %v307 = vpop.trf.xlu0
      %v308 = vpop.trf.xlu0
      %v309 = vpop.trf.xlu0
      %v310 = vpop.trf.xlu0
      %v311 = vpop.trf.xlu0
      %v312 = vpop.trf.xlu0
      %v313 = vpop.trf.xlu0
      %v314 = vpop.trf.xlu0
      %v315 = vpop.trf.xlu0
      %v316 = vpop.trf.xlu0
      %v317 = vpop.trf.xlu0
      %v318 = vpop.trf.xlu0
      %v319 = vpop.trf.xlu0
      %320 = vst [vmem:[%s209] sm:$0xff] %v304
      %p321 = scmp.lt.s32.totalorder %s18, 1
      %s322 = scalar_select %p321, %s18, 1
      %p323 = scmp.lt.s32.totalorder %s19, 1
      %s324 = scalar_select %p323, %s19, 1
      %s325 = smul.addr %s322, 2
      %s326 = sadd.s32 %s324, %s325
      %s327 = smul.addr %s326, 8
      %s328 = scalar_lea.vmem %s3, %s327
      // Predicated region
      $region33: #{expanding_block_forward.5} parent=31 // pred_check
        %p329 = pneg %p116
      $region34: #{expanding_block_forward.5} parent=31 // pred_check_branch
        %331 = sbr.rel (%p329) target = $region36
      $region35: #{expanding_block_forward.5} parent=31 // pred_region
        _
      $region36: #{expanding_block_forward.5} parent=31 // pred_fallthru
        _
    $region32: #{expanding_block_forward.5} parent=5 // pred_fallthru
      _
    %p332 = scmp.le.s32.totalorder 2, %s9
    // Predicated region
    $region37: #{expanding_block_forward.5} parent=5 // pred_check
      %p333 = pneg %p332
    $region38: #{expanding_block_forward.5} parent=5 // pred_check_branch
      %335 = sbr.rel (%p333) target = $region40
    $region39: #{expanding_block_forward.5} parent=5 // pred_region
      %s336 = ssub.s32 %s9, 2
      // Predicated region
      $region41: #{expanding_block_forward.5} parent=39 // pred_check
        %p337 = pneg %p122
      $region42: #{expanding_block_forward.5} parent=39 // pred_check_branch
        %339 = sbr.rel (%p337) target = $region44
      $region43: #{expanding_block_forward.5} parent=39 // pred_region
        %p340 = scmp.lt.s32.totalorder %s20, 1
        %s341 = scalar_select %p340, %s20, 1
        %p342 = scmp.lt.s32.totalorder %s21, 1
        %s343 = scalar_select %p342, %s21, 1
        %s344 = smul.addr %s341, 2
        %s345 = sadd.s32 %s343, %s344
        %s346 = smul.addr %s345, 8
        %s347 = scalar_lea.vmem %s3, %s346
      $region44: #{expanding_block_forward.5} parent=39 // pred_fallthru
        _
    $region40: #{expanding_block_forward.5} parent=5 // pred_fallthru
      _
  $region6: #{expanding_block_forward.5} parent=0 // loop_footer
    %s13 = sadd.s32 1, %s9
  $region7: #{expanding_block_forward.5} parent=0 // loop_footer_branch
    %8 = sbr.rel target = $region3
  $region8: #{expanding_block_forward.5} parent=0 // loop_exit
    _

// kernel: expanding_block_forward.3
$region0: #{expanding_block_forward.3}
  #allocation0 [shape = 'u32[]', space=smem, size = 0x4, offset = 0x4, fixed_abs, tag = 'smem constant byte address 0x4 - core index']
  #allocation1 [shape = 'u32[144,128]{1,0:T(1,128)}', space=vmem, size = 0x12000, scoped, tag = 'internal scratch']
  #allocation2 [shape = 'bf16[10,18,128]{2,1,0:T(8,128)(2,1)}', space=vmem, size = 0xf000, scoped, tag = 'scratch operand']
  %s0 = inlined_call_operand.vmem [shape: bf16[2,16,16,128], index: 0, kind: input, shape index: {}]
  %s1 = inlined_call_operand.vmem [shape: bf16[1152,128], index: 1, kind: input, shape index: {}]
  %s2 = inlined_call_operand.vmem [shape: bf16[2,16,16,128], index: 2, kind: output, shape index: {0}]
  %s3 = inlined_call_operand.vmem [shape: f32[2,2,8,128], index: 3, kind: output, shape index: {1}]
  %s4 = inlined_call_operand.vmem [shape: f32[2,2,8,128], index: 4, kind: output, shape index: {2}]
  %5 = xla_tuple %s2, %s3, %s4
  %s6 = sld [smem:[#allocation0]]
  $region65: #{expanding_block_forward.3} parent=0
    _
  %s8 = ssub.s32 1, %s6
  %s9 = scalar_select 0, %s8, %s6
  loop: start=0, step=1, limit=6
  $region2: #{expanding_block_forward.3} parent=0 // loop_pre_header
    _
  $region3: #{expanding_block_forward.3} parent=0 // loop_header
    %s11 = sphi 0, %s15
    %p12 = scmp.ge.s32.totalorder %s11, 6
    %s18 = sphi 0, %s30
    %s19 = sphi 0, %s26
    %s20 = sphi 0, %s18
    %s21 = sphi 0, %s19
    %s22 = sphi 0, %s20
    %s23 = sphi 0, %s21
    %s33 = sphi 0, %s35
    %s36 = sphi 0, %s33
    %s37 = sphi 0, %s36
    %s53 = sphi 0, %s37
    %s57 = sphi 0, %s57
    %s59 = sphi 0, %s57
    %s60 = sphi 0, %s59
    %s74 = sphi 0, %s60
    %s82 = sphi 0, %s84
    %s85 = sphi 0, %s82
    %s86 = sphi 0, %s85
    %s102 = sphi 0, %s86
    %s110 = sphi 0, %s112
    %s113 = sphi 0, %s110
    %s114 = sphi 0, %s113
    %s130 = sphi 0, %s114
    %s138 = sphi 0, %s140
    %s141 = sphi 0, %s138
    %s142 = sphi 0, %s141
    %s158 = sphi 0, %s142
  $region4: #{expanding_block_forward.3} parent=0 // loop_header_branch
    %14 = sbr.rel (%p12) target = $region8
  $region5: #{expanding_block_forward.3} parent=0 // loop_body
    %s16 = ssub.s32 %s11, 1
    %s17 = ssub.s32 %s11, 2
    %s24 = sadd.s32 1, %s19
    %p25 = scmp.ge.s32.totalorder %s24, 2
    %s26 = scalar_select %p25, 0, %s24
    %s27 = sadd.s32 1, %s18
    %s28 = scalar_select %p25, %s27, %s18
    %p29 = scmp.ge.s32.totalorder %s28, 2
    %s30 = scalar_select %p29, 0, %s28
    %s31 = ssub.s32 %s18, %s30
    %p32 = scmp.eq.s32.totalorder %s31, 0
    %s34 = sadd.s32 %s33, 1
    %s35 = scalar_select %p32, %s33, %s34
    %p38 = pneg %p32
    %p39 = scmp.eq.s32.totalorder %s11, 3
    %p40 = por %p38, %p39
    %p41 = scmp.ne.s32.totalorder %s33, %s36
    %p42 = scmp.eq.s32.totalorder %s11, 0
    %p43 = por %p41, %p42
    %p44 = scmp.ne.s32.totalorder %s33, %s36
    %p45 = scmp.eq.s32.totalorder %s16, 3
    %p46 = por %p44, %p45
    %p47 = scmp.ne.s32.totalorder %s36, %s37
    %p48 = scmp.eq.s32.totalorder %s16, 0
    %p49 = por %p47, %p48
    %p50 = scmp.ne.s32.totalorder %s36, %s37
    %p51 = scmp.eq.s32.totalorder %s17, 3
    %p52 = por %p50, %p51
    %p54 = scmp.ne.s32.totalorder %s37, %s53
    %p55 = scmp.eq.s32.totalorder %s17, 0
    %p56 = por %p54, %p55
    %s58 = sadd.s32 %s57, 1
    %p61 = scmp.eq.s32.totalorder %s11, 3
    %p62 = scmp.ne.s32.totalorder %s57, %s59
    %p63 = scmp.eq.s32.totalorder %s11, 0
    %p64 = por %p62, %p63
    %p65 = scmp.ne.s32.totalorder %s57, %s59
    %p66 = scmp.eq.s32.totalorder %s16, 3
    %p67 = por %p65, %p66
    %p68 = scmp.ne.s32.totalorder %s59, %s60
    %p69 = scmp.eq.s32.totalorder %s16, 0
    %p70 = por %p68, %p69
    %p71 = scmp.ne.s32.totalorder %s59, %s60
    %p72 = scmp.eq.s32.totalorder %s17, 3
    %p73 = por %p71, %p72
    %p75 = scmp.ne.s32.totalorder %s60, %s74
    %p76 = scmp.eq.s32.totalorder %s17, 0
    %p77 = por %p75, %p76
    %s78 = ssub.s32 %s18, %s30
    %s79 = ssub.s32 %s19, %s26
    %s80 = sor.u32 %s78, %s79
    %p81 = scmp.eq.s32.totalorder %s80, 0
    %s83 = sadd.s32 %s82, 1
    %s84 = scalar_select %p81, %s82, %s83
    %p87 = pneg %p81
    %p88 = scmp.eq.s32.totalorder %s11, 3
    %p89 = por %p87, %p88
    %p90 = scmp.ne.s32.totalorder %s82, %s85
    %p91 = scmp.eq.s32.totalorder %s11, 0
    %p92 = por %p90, %p91
    %p93 = scmp.ne.s32.totalorder %s82, %s85
    %p94 = scmp.eq.s32.totalorder %s16, 3
    %p95 = por %p93, %p94
    %p96 = scmp.ne.s32.totalorder %s85, %s86
    %p97 = scmp.eq.s32.totalorder %s16, 0
    %p98 = por %p96, %p97
    %p99 = scmp.ne.s32.totalorder %s85, %s86
    %p100 = scmp.eq.s32.totalorder %s17, 3
    %p101 = por %p99, %p100
    %p103 = scmp.ne.s32.totalorder %s86, %s102
    %p104 = scmp.eq.s32.totalorder %s17, 0
    %p105 = por %p103, %p104
    %s106 = ssub.s32 %s18, %s30
    %s107 = ssub.s32 %s19, %s26
    %s108 = sor.u32 %s106, %s107
    %p109 = scmp.eq.s32.totalorder %s108, 0
    %s111 = sadd.s32 %s110, 1
    %s112 = scalar_select %p109, %s110, %s111
    %p115 = pneg %p109
    %p116 = scmp.eq.s32.totalorder %s11, 3
    %p117 = por %p115, %p116
    %p118 = scmp.ne.s32.totalorder %s110, %s113
    %p119 = scmp.eq.s32.totalorder %s11, 0
    %p120 = por %p118, %p119
    %p121 = scmp.ne.s32.totalorder %s110, %s113
    %p122 = scmp.eq.s32.totalorder %s16, 3
    %p123 = por %p121, %p122
    %p124 = scmp.ne.s32.totalorder %s113, %s114
    %p125 = scmp.eq.s32.totalorder %s16, 0
    %p126 = por %p124, %p125
    %p127 = scmp.ne.s32.totalorder %s113, %s114
    %p128 = scmp.eq.s32.totalorder %s17, 3
    %p129 = por %p127, %p128
    %p131 = scmp.ne.s32.totalorder %s114, %s130
    %p132 = scmp.eq.s32.totalorder %s17, 0
    %p133 = por %p131, %p132
    %s134 = ssub.s32 %s18, %s30
    %s135 = ssub.s32 %s19, %s26
    %s136 = sor.u32 %s134, %s135
    %p137 = scmp.eq.s32.totalorder %s136, 0
    %s139 = sadd.s32 %s138, 1
    %s140 = scalar_select %p137, %s138, %s139
    %p143 = pneg %p137
    %p144 = scmp.eq.s32.totalorder %s11, 3
    %p145 = por %p143, %p144
    %p146 = scmp.ne.s32.totalorder %s138, %s141
    %p147 = scmp.eq.s32.totalorder %s11, 0
    %p148 = por %p146, %p147
    %p149 = scmp.ne.s32.totalorder %s138, %s141
    %p150 = scmp.eq.s32.totalorder %s16, 3
    %p151 = por %p149, %p150
    %p152 = scmp.ne.s32.totalorder %s141, %s142
    %p153 = scmp.eq.s32.totalorder %s16, 0
    %p154 = por %p152, %p153
    %p155 = scmp.ne.s32.totalorder %s141, %s142
    %p156 = scmp.eq.s32.totalorder %s17, 3
    %p157 = por %p155, %p156
    %p159 = scmp.ne.s32.totalorder %s142, %s158
    %p160 = scmp.eq.s32.totalorder %s17, 0
    %p161 = por %p159, %p160
    %p162 = scmp.le.s32.totalorder 1, %s11
    %p163 = scmp.lt.s32.totalorder %s11, 5
    %p164 = pnand %p162, %p163
    %p165 = pneg %p164
    // Predicated region
    $region9: #{expanding_block_forward.3} parent=5 // pred_check
      _
    $region10: #{expanding_block_forward.3} parent=5 // pred_check_branch
      %167 = sbr.rel (%p164) target = $region12
    $region11: #{expanding_block_forward.3} parent=5 // pred_region
      %s168 = ssub.s32 %s11, 1
      // Predicated region
      $region13: #{expanding_block_forward.3} parent=11 // pred_check
        %p169 = pneg %p70
      $region14: #{expanding_block_forward.3} parent=11 // pred_check_branch
        %171 = sbr.rel (%p169) target = $region16
      $region15: #{expanding_block_forward.3} parent=11 // pred_region
        _
      $region16: #{expanding_block_forward.3} parent=11 // pred_fallthru
        _
    $region12: #{expanding_block_forward.3} parent=5 // pred_fallthru
      _
    %p172 = scmp.lt.s32.totalorder %s11, 4
    // Predicated region
    $region17: #{expanding_block_forward.3} parent=5 // pred_check
      %p173 = pneg %p172
    $region18: #{expanding_block_forward.3} parent=5 // pred_check_branch
      %175 = sbr.rel (%p173) target = $region20
    $region19: #{expanding_block_forward.3} parent=5 // pred_region
      // Predicated region
      $region21: #{expanding_block_forward.3} parent=19 // pred_check
        %p176 = pneg %p43
      $region22: #{expanding_block_forward.3} parent=19 // pred_check_branch
        %178 = sbr.rel (%p176) target = $region24
      $region23: #{expanding_block_forward.3} parent=19 // pred_region
        %p179 = scmp.lt.s32.totalorder %s18, 1
        %s180 = scalar_select %p179, %s18, 1
        %s181 = smul.addr %s180, 32
        %s182 = smul.addr %s181, 4
        %s183 = scalar_lea.vmem %s0, %s182
      $region24: #{expanding_block_forward.3} parent=19 // pred_fallthru
        _
    $region20: #{expanding_block_forward.3} parent=5 // pred_fallthru
      _
    %p184 = scmp.le.s32.totalorder 1, %s11
    %p185 = scmp.lt.s32.totalorder %s11, 5
    %p186 = pnand %p184, %p185
    %p187 = pneg %p186
    // Predicated region
    $region25: #{expanding_block_forward.3} parent=5 // pred_check
      _
    $region26: #{expanding_block_forward.3} parent=5 // pred_check_branch
      %189 = sbr.rel (%p186) target = $region28
    $region27: #{expanding_block_forward.3} parent=5 // pred_region
      %s190 = ssub.s32 %s11, 1
      %p191 = scmp.lt.s32.totalorder %s20, 1
      %s192 = scalar_select %p191, %s20, 1
      %s193 = smul.addr %s192, 32
      %s194 = smul.addr %s193, 4
      %s195 = scalar_lea.vmem %s0, %s194
      %p196 = pneg %p49
      %p197 = pneg %p46
      %p198 = pneg %p70
      %p199 = pneg %p67
      %p200 = pneg %p98
      %p201 = pneg %p95
      %s202 = smul.u32 8, %s21
      %p203 = scmp.lt.s32.totalorder %s20, 1
      %s204 = scalar_select %p203, %s20, 1
      %p205 = scmp.lt.s32.totalorder %s202, 15
      %s206 = scalar_select %p205, %s202, 15
      %s207 = smul.addr %s206, 2
      %s208 = smul.addr %s204, 32
      %s209 = sadd.s32 %s207, %s208
      %s210 = smul.addr %s209, 4
      %s211 = scalar_lea.vmem %s2, %s210
      %p212 = pneg %p126
      %p213 = pneg %p123
      %p214 = scmp.lt.s32.totalorder %s20, 1
      %s215 = scalar_select %p214, %s20, 1
      %p216 = scmp.lt.s32.totalorder %s21, 1
      %s217 = scalar_select %p216, %s21, 1
      %s218 = smul.addr %s215, 2
      %s219 = sadd.s32 %s217, %s218
      %s220 = smul.addr %s219, 8
      %s221 = scalar_lea.vmem %s3, %s220
      %p222 = pneg %p154
      %p223 = pneg %p151
      %p224 = scmp.lt.s32.totalorder %s20, 1
      %s225 = scalar_select %p224, %s20, 1
      %p226 = scmp.lt.s32.totalorder %s21, 1
      %s227 = scalar_select %p226, %s21, 1
      %s228 = smul.addr %s225, 2
      %s229 = sadd.s32 %s227, %s228
      %s230 = smul.addr %s229, 8
      %s231 = scalar_lea.vmem %s4, %s230
      %p232 = scmp.lt.s32.totalorder %s20, 1
      %s233 = scalar_select %p232, %s20, 1
      %s234 = smul.addr %s233, 32
      %s235 = smul.addr %s234, 4
      %s236 = scalar_lea.vmem %s0, %s235
      %s237 = smul.u32 8, %s21
      %p238 = scmp.lt.s32.totalorder %s20, 1
      %s239 = scalar_select %p238, %s20, 1
      %p240 = scmp.lt.s32.totalorder %s237, 15
      %s241 = scalar_select %p240, %s237, 15
      %s242 = smul.addr %s241, 2
      %s243 = smul.addr %s239, 32
      %s244 = sadd.s32 %s242, %s243
      %s245 = smul.addr %s244, 4
      %s246 = scalar_lea.vmem %s2, %s245
      %s247 = smul.u32 8, %s21
      %p248 = scmp.lt.s32.totalorder %s20, 1
      %s249 = scalar_select %p248, %s20, 1
      %p250 = scmp.lt.s32.totalorder %s21, 1
      %s251 = scalar_select %p250, %s21, 1
      %s252 = smul.addr %s249, 2
      %s253 = sadd.s32 %s251, %s252
      %s254 = smul.addr %s253, 8
      %s255 = scalar_lea.vmem %s3, %s254
      %p256 = scmp.lt.s32.totalorder %s20, 1
      %s257 = scalar_select %p256, %s20, 1
      %p258 = scmp.lt.s32.totalorder %s21, 1
      %s259 = scalar_select %p258, %s21, 1
      %s260 = smul.addr %s257, 2
      %s261 = sadd.s32 %s259, %s260
      %s262 = smul.addr %s261, 8
      %s263 = scalar_lea.vmem %s4, %s262
      %s265 = smul.u32 %s21, 8
      %266 = vst [vmem:[#allocation2] sm:$0xf] 0
      %267 = vst [vmem:[#allocation2 + $0x4] sm:$0xf] 0
      %268 = vst [vmem:[#allocation2 + $0x8] sm:$0x1] 0
      %269 = vst [vmem:[#allocation2 + $0xc] sm:$0xf] 0
      %270 = vst [vmem:[#allocation2 + $0x10] sm:$0xf] 0
      %271 = vst [vmem:[#allocation2 + $0x14] sm:$0x1] 0
      %272 = vst [vmem:[#allocation2 + $0x18] sm:$0xf] 0
      %273 = vst [vmem:[#allocation2 + $0x1c] sm:$0xf] 0
      %274 = vst [vmem:[#allocation2 + $0x20] sm:$0x1] 0
      %275 = vst [vmem:[#allocation2 + $0x24] sm:$0xf] 0
      %276 = vst [vmem:[#allocation2 + $0x28] sm:$0xf] 0
      %277 = vst [vmem:[#allocation2 + $0x2c] sm:$0x1] 0
      %278 = vst [vmem:[#allocation2 + $0x30] sm:$0xf] 0
      %279 = vst [vmem:[#allocation2 + $0x34] sm:$0xf] 0
      %280 = vst [vmem:[#allocation2 + $0x38] sm:$0x1] 0
      %281 = vst [vmem:[#allocation2 + $0x3c] sm:$0xf] 0
      %282 = vst [vmem:[#allocation2 + $0x40] sm:$0xf] 0
      %283 = vst [vmem:[#allocation2 + $0x44] sm:$0x1] 0
      %284 = vst [vmem:[#allocation2 + $0x48] sm:$0xf] 0
      %285 = vst [vmem:[#allocation2 + $0x4c] sm:$0xf] 0
      %286 = vst [vmem:[#allocation2 + $0x50] sm:$0x1] 0
      %287 = vst [vmem:[#allocation2 + $0x54] sm:$0xf] 0
      %288 = vst [vmem:[#allocation2 + $0x58] sm:$0xf] 0
      %289 = vst [vmem:[#allocation2 + $0x5c] sm:$0x1] 0
      %290 = vst [vmem:[#allocation2 + $0x60] sm:$0xf] 0
      %291 = vst [vmem:[#allocation2 + $0x64] sm:$0xf] 0
      %292 = vst [vmem:[#allocation2 + $0x68] sm:$0x1] 0
      %293 = vst [vmem:[#allocation2 + $0x6c] sm:$0xf] 0
      %294 = vst [vmem:[#allocation2 + $0x70] sm:$0xf] 0
      %295 = vst [vmem:[#allocation2 + $0x74] sm:$0x1] 0
      %p296 = scmp.eq.s32.totalorder %s21, 0
      // Predicated region
      $region29: #{expanding_block_forward.3} parent=27 // pred_check
        %p297 = pneg %p296
      $region30: #{expanding_block_forward.3} parent=27 // pred_check_branch
        %299 = sbr.rel (%p297) target = $region32
      $region31: #{expanding_block_forward.3} parent=27 // pred_region
        %v300 = vld [vmem:[%s236] sm:$0xf]
        %v301 = vld [vmem:[%s236 + $0x4] sm:$0xf]
        %v302 = vld [vmem:[%s236 + $0x8] sm:$0xf]
        %v303 = vld [vmem:[%s236 + $0xc] sm:$0xf]
        %v304 = vld [vmem:[%s236 + $0x10] sm:$0xf]
        %v305 = vld [vmem:[%s236 + $0x14] sm:$0xf]
        %v306 = vld [vmem:[%s236 + $0x18] sm:$0xf]
        %v307 = vld [vmem:[%s236 + $0x1c] sm:$0xf]
        %v308 = vld [vmem:[%s236 + $0x20] sm:$0xf]
        %v309 = vld [vmem:[%s236 + $0x24] sm:$0xf]
        %v310 = vld [vmem:[%s236 + $0x28] sm:$0xf]
        %v311 = vld [vmem:[%s236 + $0x2c] sm:$0xf]
        %v312 = vld [vmem:[%s236 + $0x30] sm:$0xf]
        %v313 = vld [vmem:[%s236 + $0x34] sm:$0xf]
        %v314 = vld [vmem:[%s236 + $0x38] sm:$0xf]
        %v315 = vld [vmem:[%s236 + $0x3c] sm:$0xf]
        %v316 = vld [vmem:[%s236 + $0x40] sm:$0xf]
        %v317 = vld [vmem:[%s236 + $0x44] sm:$0xf]
        %vm318 = vsmask.f32 256
        %vm319 = vsmask.f32 4368
        %vm320 = vmor %vm318, %vm319
        %v322 = vshrl.u32 %v300, 16
        %v324 = vrot.slane %v322, 7
        %v325 = vshll.u32 %v300, 16
        %v327 = vor.u32 %v324, %v325
        %v328 = vrot.slane %v324, 4
        %v330 = vshrl.u32 %v301, 16
        %v332 = vrot.slane %v330, 7
        %v333 = vshll.u32 %v301, 16
        %v335 = vor.u32 %v332, %v333
        %v336 = vsel %vm320, %v328, %v335
        %v337 = vrot.slane %v332, 4
        %v339 = vshrl.u32 %v302, 16
        %v341 = vrot.slane %v339, 7
        %v342 = vshll.u32 %v302, 16
        %v344 = vor.u32 %v341, %v342
        %v345 = vrot.slane %v341, 4
        %v347 = vshrl.u32 %v303, 16
        %v349 = vrot.slane %v347, 7
        %v350 = vshll.u32 %v303, 16
        %v352 = vor.u32 %v349, %v350
        %v353 = vsel %vm320, %v345, %v352
        %v354 = vrot.slane %v349, 4
        %v356 = vshrl.u32 %v304, 16
        %v358 = vrot.slane %v356, 7
        %v359 = vshll.u32 %v304, 16
        %v361 = vor.u32 %v358, %v359
        %v362 = vrot.slane %v358, 4
        %v364 = vshrl.u32 %v305, 16
        %v366 = vrot.slane %v364, 7
        %v367 = vshll.u32 %v305, 16
        %v369 = vor.u32 %v366, %v367
        %v370 = vsel %vm320, %v362, %v369
        %v371 = vrot.slane %v366, 4
        %v373 = vshrl.u32 %v306, 16
        %v375 = vrot.slane %v373, 7
        %v376 = vshll.u32 %v306, 16
        %v378 = vor.u32 %v375, %v376
        %v379 = vrot.slane %v375, 4
        %v381 = vshrl.u32 %v307, 16
        %v383 = vrot.slane %v381, 7
        %v384 = vshll.u32 %v307, 16
        %v386 = vor.u32 %v383, %v384
        %v387 = vsel %vm320, %v379, %v386
        %v388 = vrot.slane %v383, 4
        %v390 = vshrl.u32 %v308, 16
        %v392 = vrot.slane %v390, 7
        %v393 = vshll.u32 %v308, 16
        %v395 = vor.u32 %v392, %v393
        %v396 = vrot.slane %v392, 4
        %v398 = vshrl.u32 %v309, 16
        %v400 = vrot.slane %v398, 7
        %v401 = vshll.u32 %v309, 16
        %v403 = vor.u32 %v400, %v401
        %v404 = vsel %vm320, %v396, %v403
        %v405 = vrot.slane %v400, 4
        %v407 = vshrl.u32 %v310, 16
        %v409 = vrot.slane %v407, 7
        %v410 = vshll.u32 %v310, 16
        %v412 = vor.u32 %v409, %v410
        %v413 = vrot.slane %v409, 4
        %v415 = vshrl.u32 %v311, 16
        %v417 = vrot.slane %v415, 7
        %v418 = vshll.u32 %v311, 16
        %v420 = vor.u32 %v417, %v418
        %v421 = vsel %vm320, %v413, %v420
        %v422 = vrot.slane %v417, 4
        %v424 = vshrl.u32 %v312, 16
        %v426 = vrot.slane %v424, 7
        %v427 = vshll.u32 %v312, 16
        %v429 = vor.u32 %v426, %v427
        %v430 = vrot.slane %v426, 4
        %v432 = vshrl.u32 %v313, 16
        %v434 = vrot.slane %v432, 7
        %v435 = vshll.u32 %v313, 16
        %v437 = vor.u32 %v434, %v435
        %v438 = vsel %vm320, %v430, %v437
        %v439 = vrot.slane %v434, 4
        %v441 = vshrl.u32 %v314, 16
        %v443 = vrot.slane %v441, 7
        %v444 = vshll.u32 %v314, 16
        %v446 = vor.u32 %v443, %v444
        %v447 = vrot.slane %v443, 4
        %v449 = vshrl.u32 %v315, 16
        %v451 = vrot.slane %v449, 7
        %v452 = vshll.u32 %v315, 16
        %v454 = vor.u32 %v451, %v452
        %v455 = vsel %vm320, %v447, %v454
        %v456 = vrot.slane %v451, 4
        %v458 = vshrl.u32 %v316, 16
        %v460 = vrot.slane %v458, 7
        %v461 = vshll.u32 %v316, 16
        %v463 = vor.u32 %v460, %v461
        %v464 = vrot.slane %v460, 4
        %v466 = vshrl.u32 %v317, 16
        %v468 = vrot.slane %v466, 7
        %v469 = vshll.u32 %v317, 16
        %v471 = vor.u32 %v468, %v469
        %v472 = vsel %vm320, %v464, %v471
        %v473 = vrot.slane %v468, 4
        %s501 = scalar_lea.vmem [#allocation2], 12
        %vm502 = vcmask 1043456
        %vm503 = vsmask.f32 7938
        %vm504 = vmand %vm502, %vm503
        %v505 = vld [vmem:[%s501] sm:$0xf]
        %v506 = vsel %vm504, %v327, %v505
        %507 = vst [vmem:[%s501] sm:$0xf] %v506
        %508 = vst [vmem:[%s501 + $0x4] sm:$0xf] %v336
        %vm509 = vcmask 1040384
        %vm510 = vmand %vm509, %vm318
        %v511 = vld [vmem:[%s501 + $0x8] sm:$0x1]
        %v512 = vsel %vm510, %v337, %v511
        %513 = vst [vmem:[%s501 + $0x8] sm:$0x1] %v512
        %v514 = vld [vmem:[%s501 + $0xc] sm:$0xf]
        %v515 = vsel %vm504, %v344, %v514
        %516 = vst [vmem:[%s501 + $0xc] sm:$0xf] %v515
        %517 = vst [vmem:[%s501 + $0x10] sm:$0xf] %v353
        %v518 = vld [vmem:[%s501 + $0x14] sm:$0x1]
        %v519 = vsel %vm510, %v354, %v518
        %520 = vst [vmem:[%s501 + $0x14] sm:$0x1] %v519
        %v521 = vld [vmem:[%s501 + $0x18] sm:$0xf]
        %v522 = vsel %vm504, %v361, %v521
        %523 = vst [vmem:[%s501 + $0x18] sm:$0xf] %v522
        %524 = vst [vmem:[%s501 + $0x1c] sm:$0xf] %v370
        %v525 = vld [vmem:[%s501 + $0x20] sm:$0x1]
        %v526 = vsel %vm510, %v371, %v525
        %527 = vst [vmem:[%s501 + $0x20] sm:$0x1] %v526
        %v528 = vld [vmem:[%s501 + $0x24] sm:$0xf]
        %v529 = vsel %vm504, %v378, %v528
        %530 = vst [vmem:[%s501 + $0x24] sm:$0xf] %v529
        %531 = vst [vmem:[%s501 + $0x28] sm:$0xf] %v387
        %v532 = vld [vmem:[%s501 + $0x2c] sm:$0x1]
        %v533 = vsel %vm510, %v388, %v532
        %534 = vst [vmem:[%s501 + $0x2c] sm:$0x1] %v533
        %v535 = vld [vmem:[%s501 + $0x30] sm:$0xf]
        %v536 = vsel %vm504, %v395, %v535
        %537 = vst [vmem:[%s501 + $0x30] sm:$0xf] %v536
        %538 = vst [vmem:[%s501 + $0x34] sm:$0xf] %v404
        %v539 = vld [vmem:[%s501 + $0x38] sm:$0x1]
        %v540 = vsel %vm510, %v405, %v539
        %541 = vst [vmem:[%s501 + $0x38] sm:$0x1] %v540
        %v542 = vld [vmem:[%s501 + $0x3c] sm:$0xf]
        %v543 = vsel %vm504, %v412, %v542
        %544 = vst [vmem:[%s501 + $0x3c] sm:$0xf] %v543
        %545 = vst [vmem:[%s501 + $0x40] sm:$0xf] %v421
        %v546 = vld [vmem:[%s501 + $0x44] sm:$0x1]
        %v547 = vsel %vm510, %v422, %v546
        %548 = vst [vmem:[%s501 + $0x44] sm:$0x1] %v547
        %v549 = vld [vmem:[%s501 + $0x48] sm:$0xf]
        %v550 = vsel %vm504, %v429, %v549
        %551 = vst [vmem:[%s501 + $0x48] sm:$0xf] %v550
        %552 = vst [vmem:[%s501 + $0x4c] sm:$0xf] %v438
        %v553 = vld [vmem:[%s501 + $0x50] sm:$0x1]
        %v554 = vsel %vm510, %v439, %v553
        %555 = vst [vmem:[%s501 + $0x50] sm:$0x1] %v554
        %v556 = vld [vmem:[%s501 + $0x54] sm:$0xf]
        %v557 = vsel %vm504, %v446, %v556
        %558 = vst [vmem:[%s501 + $0x54] sm:$0xf] %v557
        %559 = vst [vmem:[%s501 + $0x58] sm:$0xf] %v455
        %v560 = vld [vmem:[%s501 + $0x5c] sm:$0x1]
        %v561 = vsel %vm510, %v456, %v560
        %562 = vst [vmem:[%s501 + $0x5c] sm:$0x1] %v561
        %v563 = vld [vmem:[%s501 + $0x60] sm:$0xf]
        %v564 = vsel %vm504, %v463, %v563
        %565 = vst [vmem:[%s501 + $0x60] sm:$0xf] %v564
        %566 = vst [vmem:[%s501 + $0x64] sm:$0xf] %v472
        %v567 = vld [vmem:[%s501 + $0x68] sm:$0x1]
        %v568 = vsel %vm510, %v473, %v567
        %569 = vst [vmem:[%s501 + $0x68] sm:$0x1] %v568
      $region32: #{expanding_block_forward.3} parent=27 // pred_fallthru
        _
      %p570 = scmp.eq.s32.totalorder %s21, 1
      // Predicated region
      $region33: #{expanding_block_forward.3} parent=27 // pred_check
        %p571 = pneg %p570
      $region34: #{expanding_block_forward.3} parent=27 // pred_check_branch
        %573 = sbr.rel (%p571) target = $region36
      $region35: #{expanding_block_forward.3} parent=27 // pred_region
        %s574 = ssub.s32 %s265, 1
        %s575 = smul.u32 %s574, 2
        %s576 = smul.addr %s575, 4
        %s577 = scalar_lea.vmem %s236, %s576
        %v578 = vld [vmem:[%s577] sm:$0xf]
        %v579 = vld [vmem:[%s577 + $0x4] sm:$0xf]
        %v580 = vld [vmem:[%s577 + $0x8] sm:$0xf]
        %v581 = vld [vmem:[%s577 + $0xc] sm:$0xf]
        %v582 = vld [vmem:[%s577 + $0x10] sm:$0xf]
        %v583 = vld [vmem:[%s577 + $0x14] sm:$0xf]
        %v584 = vld [vmem:[%s577 + $0x18] sm:$0xf]
        %v585 = vld [vmem:[%s577 + $0x1c] sm:$0xf]
        %v586 = vld [vmem:[%s577 + $0x20] sm:$0xf]
        %v587 = vld [vmem:[%s577 + $0x24] sm:$0xf]
        %v588 = vld [vmem:[%s577 + $0x28] sm:$0xf]
        %v589 = vld [vmem:[%s577 + $0x2c] sm:$0xf]
        %v590 = vld [vmem:[%s577 + $0x30] sm:$0xf]
        %v591 = vld [vmem:[%s577 + $0x34] sm:$0xf]
        %v592 = vld [vmem:[%s577 + $0x38] sm:$0xf]
        %v593 = vld [vmem:[%s577 + $0x3c] sm:$0xf]
        %v594 = vld [vmem:[%s577 + $0x40] sm:$0xf]
        %v595 = vld [vmem:[%s577 + $0x44] sm:$0xf]
        %vm596 = vsmask.f32 256
        %vm597 = vsmask.f32 4368
        %vm598 = vmor %vm596, %vm597
        %v600 = vshrl.u32 %v578, 16
        %v602 = vrot.slane %v600, 7
        %v603 = vshll.u32 %v578, 16
        %v605 = vor.u32 %v602, %v603
        %v606 = vrot.slane %v602, 4
        %v608 = vshrl.u32 %v579, 16
        %v610 = vrot.slane %v608, 7
        %v611 = vshll.u32 %v579, 16
        %v613 = vor.u32 %v610, %v611
        %v614 = vsel %vm598, %v606, %v613
        %v615 = vrot.slane %v610, 4
        %v617 = vshrl.u32 %v580, 16
        %v619 = vrot.slane %v617, 7
        %v620 = vshll.u32 %v580, 16
        %v622 = vor.u32 %v619, %v620
        %v623 = vrot.slane %v619, 4
        %v625 = vshrl.u32 %v581, 16
        %v627 = vrot.slane %v625, 7
        %v628 = vshll.u32 %v581, 16
        %v630 = vor.u32 %v627, %v628
        %v631 = vsel %vm598, %v623, %v630
        %v632 = vrot.slane %v627, 4
        %v634 = vshrl.u32 %v582, 16
        %v636 = vrot.slane %v634, 7
        %v637 = vshll.u32 %v582, 16
        %v639 = vor.u32 %v636, %v637
        %v640 = vrot.slane %v636, 4
        %v642 = vshrl.u32 %v583, 16
        %v644 = vrot.slane %v642, 7
        %v645 = vshll.u32 %v583, 16
        %v647 = vor.u32 %v644, %v645
        %v648 = vsel %vm598, %v640, %v647
        %v649 = vrot.slane %v644, 4
        %v651 = vshrl.u32 %v584, 16
        %v653 = vrot.slane %v651, 7
        %v654 = vshll.u32 %v584, 16
        %v656 = vor.u32 %v653, %v654
        %v657 = vrot.slane %v653, 4
        %v659 = vshrl.u32 %v585, 16
        %v661 = vrot.slane %v659, 7
        %v662 = vshll.u32 %v585, 16
        %v664 = vor.u32 %v661, %v662
        %v665 = vsel %vm598, %v657, %v664
        %v666 = vrot.slane %v661, 4
        %v668 = vshrl.u32 %v586, 16
        %v670 = vrot.slane %v668, 7
        %v671 = vshll.u32 %v586, 16
        %v673 = vor.u32 %v670, %v671
        %v674 = vrot.slane %v670, 4
        %v676 = vshrl.u32 %v587, 16
        %v678 = vrot.slane %v676, 7
        %v679 = vshll.u32 %v587, 16
        %v681 = vor.u32 %v678, %v679
        %v682 = vsel %vm598, %v674, %v681
        %v683 = vrot.slane %v678, 4
        %v685 = vshrl.u32 %v588, 16
        %v687 = vrot.slane %v685, 7
        %v688 = vshll.u32 %v588, 16
        %v690 = vor.u32 %v687, %v688
        %v691 = vrot.slane %v687, 4
        %v693 = vshrl.u32 %v589, 16
        %v695 = vrot.slane %v693, 7
        %v696 = vshll.u32 %v589, 16
        %v698 = vor.u32 %v695, %v696
        %v699 = vsel %vm598, %v691, %v698
        %v700 = vrot.slane %v695, 4
        %v702 = vshrl.u32 %v590, 16
        %v704 = vrot.slane %v702, 7
        %v705 = vshll.u32 %v590, 16
        %v707 = vor.u32 %v704, %v705
        %v708 = vrot.slane %v704, 4
        %v710 = vshrl.u32 %v591, 16
        %v712 = vrot.slane %v710, 7
        %v713 = vshll.u32 %v591, 16
        %v715 = vor.u32 %v712, %v713
        %v716 = vsel %vm598, %v708, %v715
        %v717 = vrot.slane %v712, 4
        %v719 = vshrl.u32 %v592, 16
        %v721 = vrot.slane %v719, 7
        %v722 = vshll.u32 %v592, 16
        %v724 = vor.u32 %v721, %v722
        %v725 = vrot.slane %v721, 4
        %v727 = vshrl.u32 %v593, 16
        %v729 = vrot.slane %v727, 7
        %v730 = vshll.u32 %v593, 16
        %v732 = vor.u32 %v729, %v730
        %v733 = vsel %vm598, %v725, %v732
        %v734 = vrot.slane %v729, 4
        %v736 = vshrl.u32 %v594, 16
        %v738 = vrot.slane %v736, 7
        %v739 = vshll.u32 %v594, 16
        %v741 = vor.u32 %v738, %v739
        %v742 = vrot.slane %v738, 4
        %v744 = vshrl.u32 %v595, 16
        %v746 = vrot.slane %v744, 7
        %v747 = vshll.u32 %v595, 16
        %v749 = vor.u32 %v746, %v747
        %v750 = vsel %vm598, %v742, %v749
        %v751 = vrot.slane %v746, 4
        %vm779 = vcmask 1043456
        %vm780 = vsmask.f32 7938
        %vm781 = vmand %vm779, %vm780
        %v782 = vld [vmem:[#allocation2] sm:$0xf]
        %v783 = vsel %vm781, %v605, %v782
        %784 = vst [vmem:[#allocation2] sm:$0xf] %v783
        %785 = vst [vmem:[#allocation2 + $0x4] sm:$0xf] %v614
        %vm786 = vcmask 1040384
        %vm787 = vmand %vm786, %vm596
        %v788 = vld [vmem:[#allocation2 + $0x8] sm:$0x1]
        %v789 = vsel %vm787, %v615, %v788
        %790 = vst [vmem:[#allocation2 + $0x8] sm:$0x1] %v789
        %v791 = vld [vmem:[#allocation2 + $0xc] sm:$0xf]
        %v792 = vsel %vm781, %v622, %v791
        %793 = vst [vmem:[#allocation2 + $0xc] sm:$0xf] %v792
        %794 = vst [vmem:[#allocation2 + $0x10] sm:$0xf] %v631
        %v795 = vld [vmem:[#allocation2 + $0x14] sm:$0x1]
        %v796 = vsel %vm787, %v632, %v795
        %797 = vst [vmem:[#allocation2 + $0x14] sm:$0x1] %v796
        %v798 = vld [vmem:[#allocation2 + $0x18] sm:$0xf]
        %v799 = vsel %vm781, %v639, %v798
        %800 = vst [vmem:[#allocation2 + $0x18] sm:$0xf] %v799
        %801 = vst [vmem:[#allocation2 + $0x1c] sm:$0xf] %v648
        %v802 = vld [vmem:[#allocation2 + $0x20] sm:$0x1]
        %v803 = vsel %vm787, %v649, %v802
        %804 = vst [vmem:[#allocation2 + $0x20] sm:$0x1] %v803
        %v805 = vld [vmem:[#allocation2 + $0x24] sm:$0xf]
        %v806 = vsel %vm781, %v656, %v805
        %807 = vst [vmem:[#allocation2 + $0x24] sm:$0xf] %v806
        %808 = vst [vmem:[#allocation2 + $0x28] sm:$0xf] %v665
        %v809 = vld [vmem:[#allocation2 + $0x2c] sm:$0x1]
        %v810 = vsel %vm787, %v666, %v809
        %811 = vst [vmem:[#allocation2 + $0x2c] sm:$0x1] %v810
        %v812 = vld [vmem:[#allocation2 + $0x30] sm:$0xf]
        %v813 = vsel %vm781, %v673, %v812
        %814 = vst [vmem:[#allocation2 + $0x30] sm:$0xf] %v813
        %815 = vst [vmem:[#allocation2 + $0x34] sm:$0xf] %v682
        %v816 = vld [vmem:[#allocation2 + $0x38] sm:$0x1]
        %v817 = vsel %vm787, %v683, %v816
        %818 = vst [vmem:[#allocation2 + $0x38] sm:$0x1] %v817
        %v819 = vld [vmem:[#allocation2 + $0x3c] sm:$0xf]
        %v820 = vsel %vm781, %v690, %v819
        %821 = vst [vmem:[#allocation2 + $0x3c] sm:$0xf] %v820
        %822 = vst [vmem:[#allocation2 + $0x40] sm:$0xf] %v699
        %v823 = vld [vmem:[#allocation2 + $0x44] sm:$0x1]
        %v824 = vsel %vm787, %v700, %v823
        %825 = vst [vmem:[#allocation2 + $0x44] sm:$0x1] %v824
        %v826 = vld [vmem:[#allocation2 + $0x48] sm:$0xf]
        %v827 = vsel %vm781, %v707, %v826
        %828 = vst [vmem:[#allocation2 + $0x48] sm:$0xf] %v827
        %829 = vst [vmem:[#allocation2 + $0x4c] sm:$0xf] %v716
        %v830 = vld [vmem:[#allocation2 + $0x50] sm:$0x1]
        %v831 = vsel %vm787, %v717, %v830
        %832 = vst [vmem:[#allocation2 + $0x50] sm:$0x1] %v831
        %v833 = vld [vmem:[#allocation2 + $0x54] sm:$0xf]
        %v834 = vsel %vm781, %v724, %v833
        %835 = vst [vmem:[#allocation2 + $0x54] sm:$0xf] %v834
        %836 = vst [vmem:[#allocation2 + $0x58] sm:$0xf] %v733
        %v837 = vld [vmem:[#allocation2 + $0x5c] sm:$0x1]
        %v838 = vsel %vm787, %v734, %v837
        %839 = vst [vmem:[#allocation2 + $0x5c] sm:$0x1] %v838
        %v840 = vld [vmem:[#allocation2 + $0x60] sm:$0xf]
        %v841 = vsel %vm781, %v741, %v840
        %842 = vst [vmem:[#allocation2 + $0x60] sm:$0xf] %v841
        %843 = vst [vmem:[#allocation2 + $0x64] sm:$0xf] %v750
        %v844 = vld [vmem:[#allocation2 + $0x68] sm:$0x1]
        %v845 = vsel %vm787, %v751, %v844
        %846 = vst [vmem:[#allocation2 + $0x68] sm:$0x1] %v845
      $region36: #{expanding_block_forward.3} parent=27 // pred_fallthru
        _
      %v847 = vld [vmem:[#allocation2] sm:$0xf]
      %v848 = vld [vmem:[#allocation2 + $0x4] sm:$0xf]
      %v849 = vld [vmem:[#allocation2 + $0x8] sm:$0x1]
      %v850 = vld [vmem:[#allocation2 + $0xc] sm:$0xf]
      %v851 = vld [vmem:[#allocation2 + $0x10] sm:$0xf]
      %v852 = vld [vmem:[#allocation2 + $0x14] sm:$0x1]
      %v853 = vld [vmem:[#allocation2 + $0x18] sm:$0xf]
      %v854 = vld [vmem:[#allocation2 + $0x1c] sm:$0xf]
      %v855 = vld [vmem:[#allocation2 + $0x20] sm:$0x1]
      %v856 = vld [vmem:[#allocation2 + $0x24] sm:$0xf]
      %v857 = vld [vmem:[#allocation2 + $0x28] sm:$0xf]
      %v858 = vld [vmem:[#allocation2 + $0x2c] sm:$0x1]
      %v859 = vld [vmem:[#allocation2 + $0x30] sm:$0xf]
      %v860 = vld [vmem:[#allocation2 + $0x34] sm:$0xf]
      %v861 = vld [vmem:[#allocation2 + $0x38] sm:$0x1]
      %v862 = vld [vmem:[#allocation2 + $0x3c] sm:$0xf]
      %v863 = vld [vmem:[#allocation2 + $0x40] sm:$0xf]
      %v864 = vld [vmem:[#allocation2 + $0x44] sm:$0x1]
      %v865 = vld [vmem:[#allocation2 + $0x48] sm:$0xf]
      %v866 = vld [vmem:[#allocation2 + $0x4c] sm:$0xf]
      %v867 = vld [vmem:[#allocation2 + $0x50] sm:$0x1]
      %v868 = vld [vmem:[#allocation2 + $0x54] sm:$0xf]
      %v869 = vld [vmem:[#allocation2 + $0x58] sm:$0xf]
      %v870 = vld [vmem:[#allocation2 + $0x5c] sm:$0x1]
      %v871 = vld [vmem:[#allocation2 + $0x60] sm:$0xf]
      %v872 = vld [vmem:[#allocation2 + $0x64] sm:$0xf]
      %v873 = vld [vmem:[#allocation2 + $0x68] sm:$0x1]
      %v874 = vld [vmem:[#allocation2 + $0x6c] sm:$0xf]
      %v875 = vld [vmem:[#allocation2 + $0x70] sm:$0xf]
      %v876 = vld [vmem:[#allocation2 + $0x74] sm:$0x1]
      %vm877 = vsmask.f32 3328
      %vm878 = vsmask.f32 7440
      %vm879 = vmor %vm877, %vm878
      %v881 = vshrl.u32 %v847, 16
      %v883 = vrot.slane %v881, 4
      %v884 = vshll.u32 %v847, 16
      %v886 = vrot.slane %v884, 5
      %v887 = vor.u32 %v883, %v886
      %v888 = vrot.slane %v887, 4
      %v890 = vshll.u32 %v848, 16
      %v892 = vrot.slane %v890, 5
      %v893 = vsel %vm879, %v888, %v892
      %v894 = vshrl.u32 %v848, 16
      %v896 = vrot.slane %v894, 4
      %v897 = vor.u32 %v896, %v892
      %v898 = vrot.slane %v897, 4
      %v900 = vshll.u32 %v849, 16
      %v902 = vrot.slane %v900, 5
      %v903 = vsel %vm879, %v898, %v902
      %v905 = vshrl.u32 %v850, 16
      %v907 = vrot.slane %v905, 4
      %v908 = vshll.u32 %v850, 16
      %v910 = vrot.slane %v908, 5
      %v911 = vor.u32 %v907, %v910
      %v912 = vrot.slane %v911, 4
      %v914 = vshll.u32 %v851, 16
      %v916 = vrot.slane %v914, 5
      %v917 = vsel %vm879, %v912, %v916
      %v918 = vshrl.u32 %v851, 16
      %v920 = vrot.slane %v918, 4
      %v921 = vor.u32 %v920, %v916
      %v922 = vrot.slane %v921, 4
      %v924 = vshll.u32 %v852, 16
      %v926 = vrot.slane %v924, 5
      %v927 = vsel %vm879, %v922, %v926
      %v929 = vshrl.u32 %v853, 16
      %v931 = vrot.slane %v929, 4
      %v932 = vshll.u32 %v853, 16
      %v934 = vrot.slane %v932, 5
      %v935 = vor.u32 %v931, %v934
      %v936 = vrot.slane %v935, 4
      %v938 = vshll.u32 %v854, 16
      %v940 = vrot.slane %v938, 5
      %v941 = vsel %vm879, %v936, %v940
      %v942 = vshrl.u32 %v854, 16
      %v944 = vrot.slane %v942, 4
      %v945 = vor.u32 %v944, %v940
      %v946 = vrot.slane %v945, 4
      %v948 = vshll.u32 %v855, 16
      %v950 = vrot.slane %v948, 5
      %v951 = vsel %vm879, %v946, %v950
      %v953 = vshrl.u32 %v856, 16
      %v955 = vrot.slane %v953, 4
      %v956 = vshll.u32 %v856, 16
      %v958 = vrot.slane %v956, 5
      %v959 = vor.u32 %v955, %v958
      %v960 = vrot.slane %v959, 4
      %v962 = vshll.u32 %v857, 16
      %v964 = vrot.slane %v962, 5
      %v965 = vsel %vm879, %v960, %v964
      %v966 = vshrl.u32 %v857, 16
      %v968 = vrot.slane %v966, 4
      %v969 = vor.u32 %v968, %v964
      %v970 = vrot.slane %v969, 4
      %v972 = vshll.u32 %v858, 16
      %v974 = vrot.slane %v972, 5
      %v975 = vsel %vm879, %v970, %v974
      %v977 = vshrl.u32 %v859, 16
      %v979 = vrot.slane %v977, 4
      %v980 = vshll.u32 %v859, 16
      %v982 = vrot.slane %v980, 5
      %v983 = vor.u32 %v979, %v982
      %v984 = vrot.slane %v983, 4
      %v986 = vshll.u32 %v860, 16
      %v988 = vrot.slane %v986, 5
      %v989 = vsel %vm879, %v984, %v988
      %v990 = vshrl.u32 %v860, 16
      %v992 = vrot.slane %v990, 4
      %v993 = vor.u32 %v992, %v988
      %v994 = vrot.slane %v993, 4
      %v996 = vshll.u32 %v861, 16
      %v998 = vrot.slane %v996, 5
      %v999 = vsel %vm879, %v994, %v998
      %v1001 = vshrl.u32 %v862, 16
      %v1003 = vrot.slane %v1001, 4
      %v1004 = vshll.u32 %v862, 16
      %v1006 = vrot.slane %v1004, 5
      %v1007 = vor.u32 %v1003, %v1006
      %v1008 = vrot.slane %v1007, 4
      %v1010 = vshll.u32 %v863, 16
      %v1012 = vrot.slane %v1010, 5
      %v1013 = vsel %vm879, %v1008, %v1012
      %v1014 = vshrl.u32 %v863, 16
      %v1016 = vrot.slane %v1014, 4
      %v1017 = vor.u32 %v1016, %v1012
      %v1018 = vrot.slane %v1017, 4
      %v1020 = vshll.u32 %v864, 16
      %v1022 = vrot.slane %v1020, 5
      %v1023 = vsel %vm879, %v1018, %v1022
      %v1025 = vshrl.u32 %v865, 16
      %v1027 = vrot.slane %v1025, 4
      %v1028 = vshll.u32 %v865, 16
      %v1030 = vrot.slane %v1028, 5
      %v1031 = vor.u32 %v1027, %v1030
      %v1032 = vrot.slane %v1031, 4
      %v1034 = vshll.u32 %v866, 16
      %v1036 = vrot.slane %v1034, 5
      %v1037 = vsel %vm879, %v1032, %v1036
      %v1038 = vshrl.u32 %v866, 16
      %v1040 = vrot.slane %v1038, 4
      %v1041 = vor.u32 %v1040, %v1036
      %v1042 = vrot.slane %v1041, 4
      %v1044 = vshll.u32 %v867, 16
      %v1046 = vrot.slane %v1044, 5
      %v1047 = vsel %vm879, %v1042, %v1046
      %v1049 = vshrl.u32 %v868, 16
      %v1051 = vrot.slane %v1049, 4
      %v1052 = vshll.u32 %v868, 16
      %v1054 = vrot.slane %v1052, 5
      %v1055 = vor.u32 %v1051, %v1054
      %v1056 = vrot.slane %v1055, 4
      %v1058 = vshll.u32 %v869, 16
      %v1060 = vrot.slane %v1058, 5
      %v1061 = vsel %vm879, %v1056, %v1060
      %v1062 = vshrl.u32 %v869, 16
      %v1064 = vrot.slane %v1062, 4
      %v1065 = vor.u32 %v1064, %v1060
      %v1066 = vrot.slane %v1065, 4
      %v1068 = vshll.u32 %v870, 16
      %v1070 = vrot.slane %v1068, 5
      %v1071 = vsel %vm879, %v1066, %v1070
      %vm1096 = vcmask 1042432
      %vm1097 = vcmask 1046532
      %vm1098 = vmor %vm1096, %vm1097
      %v1099 = vrot.slane %v847, 5
      %v1100 = vrot.slane %v1099, 4
      %v1101 = vrot.slane %v848, 5
      %v1102 = vsel %vm1098, %v1100, %v1101
      %v1103 = vrot.slane %v1101, 4
      %v1104 = vrot.slane %v849, 5
      %v1105 = vsel %vm1098, %v1103, %v1104
      %v1106 = vrot.slane %v850, 5
      %v1107 = vrot.slane %v1106, 4
      %v1108 = vrot.slane %v851, 5
      %v1109 = vsel %vm1098, %v1107, %v1108
      %v1110 = vrot.slane %v1108, 4
      %v1111 = vrot.slane %v852, 5
      %v1112 = vsel %vm1098, %v1110, %v1111
      %v1113 = vrot.slane %v853, 5
      %v1114 = vrot.slane %v1113, 4
      %v1115 = vrot.slane %v854, 5
      %v1116 = vsel %vm1098, %v1114, %v1115
      %v1117 = vrot.slane %v1115, 4
      %v1118 = vrot.slane %v855, 5
      %v1119 = vsel %vm1098, %v1117, %v1118
      %v1120 = vrot.slane %v856, 5
      %v1121 = vrot.slane %v1120, 4
      %v1122 = vrot.slane %v857, 5
      %v1123 = vsel %vm1098, %v1121, %v1122
      %v1124 = vrot.slane %v1122, 4
      %v1125 = vrot.slane %v858, 5
      %v1126 = vsel %vm1098, %v1124, %v1125
      %v1127 = vrot.slane %v859, 5
      %v1128 = vrot.slane %v1127, 4
      %v1129 = vrot.slane %v860, 5
      %v1130 = vsel %vm1098, %v1128, %v1129
      %v1131 = vrot.slane %v1129, 4
      %v1132 = vrot.slane %v861, 5
      %v1133 = vsel %vm1098, %v1131, %v1132
      %v1134 = vrot.slane %v862, 5
      %v1135 = vrot.slane %v1134, 4
      %v1136 = vrot.slane %v863, 5
      %v1137 = vsel %vm1098, %v1135, %v1136
      %v1138 = vrot.slane %v1136, 4
      %v1139 = vrot.slane %v864, 5
      %v1140 = vsel %vm1098, %v1138, %v1139
      %v1141 = vrot.slane %v865, 5
      %v1142 = vrot.slane %v1141, 4
      %v1143 = vrot.slane %v866, 5
      %v1144 = vsel %vm1098, %v1142, %v1143
      %v1145 = vrot.slane %v1143, 4
      %v1146 = vrot.slane %v867, 5
      %v1147 = vsel %vm1098, %v1145, %v1146
      %v1148 = vrot.slane %v868, 5
      %v1149 = vrot.slane %v1148, 4
      %v1150 = vrot.slane %v869, 5
      %v1151 = vsel %vm1098, %v1149, %v1150
      %v1152 = vrot.slane %v1150, 4
      %v1153 = vrot.slane %v870, 5
      %v1154 = vsel %vm1098, %v1152, %v1153
      %v1156 = vshrl.u32 %v871, 16
      %v1158 = vrot.slane %v1156, 4
      %v1159 = vshll.u32 %v871, 16
      %v1161 = vrot.slane %v1159, 5
      %v1162 = vor.u32 %v1158, %v1161
      %v1163 = vrot.slane %v1162, 4
      %v1165 = vshll.u32 %v872, 16
      %v1167 = vrot.slane %v1165, 5
      %v1168 = vsel %vm879, %v1163, %v1167
      %v1169 = vshrl.u32 %v872, 16
      %v1171 = vrot.slane %v1169, 4
      %v1172 = vor.u32 %v1171, %v1167
      %v1173 = vrot.slane %v1172, 4
      %v1175 = vshll.u32 %v873, 16
      %v1177 = vrot.slane %v1175, 5
      %v1178 = vsel %vm879, %v1173, %v1177
      %v1182 = vrot.slane %v871, 5
      %v1183 = vrot.slane %v1182, 4
      %v1184 = vrot.slane %v872, 5
      %v1185 = vsel %vm1098, %v1183, %v1184
      %v1186 = vrot.slane %v1184, 4
      %v1187 = vrot.slane %v873, 5
      %v1188 = vsel %vm1098, %v1186, %v1187
      %v1190 = vshrl.u32 %v874, 16
      %v1192 = vrot.slane %v1190, 4
      %v1193 = vshll.u32 %v874, 16
      %v1195 = vrot.slane %v1193, 5
      %v1196 = vor.u32 %v1192, %v1195
      %v1197 = vrot.slane %v1196, 4
      %v1199 = vshll.u32 %v875, 16
      %v1201 = vrot.slane %v1199, 5
      %v1202 = vsel %vm879, %v1197, %v1201
      %v1203 = vshrl.u32 %v875, 16
      %v1205 = vrot.slane %v1203, 4
      %v1206 = vor.u32 %v1205, %v1201
      %v1207 = vrot.slane %v1206, 4
      %v1209 = vshll.u32 %v876, 16
      %v1211 = vrot.slane %v1209, 5
      %v1212 = vsel %vm879, %v1207, %v1211
      %v1216 = vrot.slane %v874, 5
      %v1217 = vrot.slane %v1216, 4
      %v1218 = vrot.slane %v875, 5
      %v1219 = vsel %vm1098, %v1217, %v1218
      %v1220 = vrot.slane %v1218, 4
      %v1221 = vrot.slane %v876, 5
      %v1222 = vsel %vm1098, %v1220, %v1221
      %v1223 = vunpack.c.l.b16 %v847
      %v1224 = vunpack.c.l.b16 %v848
      %v1225 = vunpack.c.l.b16 %v850
      %v1226 = vunpack.c.l.b16 %v851
      %v1227 = vunpack.c.l.b16 %v853
      %v1228 = vunpack.c.l.b16 %v854
      %v1229 = vunpack.c.l.b16 %v856
      %v1230 = vunpack.c.l.b16 %v857
      %v1231 = vunpack.c.l.b16 %v859
      %v1232 = vunpack.c.l.b16 %v860
      %v1233 = vunpack.c.l.b16 %v862
      %v1234 = vunpack.c.l.b16 %v863
      %v1235 = vunpack.c.l.b16 %v865
      %v1236 = vunpack.c.l.b16 %v866
      %v1237 = vunpack.c.l.b16 %v868
      %v1238 = vunpack.c.l.b16 %v869
      %v1239 = vpack.c.b16 %v1224, %v1223
      %v1240 = vpack.c.b16 %v1226, %v1225
      %v1241 = vpack.c.b16 %v1228, %v1227
      %v1242 = vpack.c.b16 %v1230, %v1229
      %v1243 = vpack.c.b16 %v1232, %v1231
      %v1244 = vpack.c.b16 %v1234, %v1233
      %v1245 = vpack.c.b16 %v1236, %v1235
      %v1246 = vpack.c.b16 %v1238, %v1237
      %v1255 = vunpack.c.l.b16 %v893
      %v1256 = vunpack.c.l.b16 %v903
      %v1257 = vunpack.c.l.b16 %v917
      %v1258 = vunpack.c.l.b16 %v927
      %v1259 = vunpack.c.l.b16 %v941
      %v1260 = vunpack.c.l.b16 %v951
      %v1261 = vunpack.c.l.b16 %v965
      %v1262 = vunpack.c.l.b16 %v975
      %v1263 = vunpack.c.l.b16 %v989
      %v1264 = vunpack.c.l.b16 %v999
      %v1265 = vunpack.c.l.b16 %v1013
      %v1266 = vunpack.c.l.b16 %v1023
      %v1267 = vunpack.c.l.b16 %v1037
      %v1268 = vunpack.c.l.b16 %v1047
      %v1269 = vunpack.c.l.b16 %v1061
      %v1270 = vunpack.c.l.b16 %v1071
      %v1271 = vpack.c.b16 %v1256, %v1255
      %v1272 = vpack.c.b16 %v1258, %v1257
      %v1273 = vpack.c.b16 %v1260, %v1259
      %v1274 = vpack.c.b16 %v1262, %v1261
      %v1275 = vpack.c.b16 %v1264, %v1263
      %v1276 = vpack.c.b16 %v1266, %v1265
      %v1277 = vpack.c.b16 %v1268, %v1267
      %v1278 = vpack.c.b16 %v1270, %v1269
      %v1287 = vunpack.c.l.b16 %v1102
      %v1288 = vunpack.c.l.b16 %v1105
      %v1289 = vunpack.c.l.b16 %v1109
      %v1290 = vunpack.c.l.b16 %v1112
      %v1291 = vunpack.c.l.b16 %v1116
      %v1292 = vunpack.c.l.b16 %v1119
      %v1293 = vunpack.c.l.b16 %v1123
      %v1294 = vunpack.c.l.b16 %v1126
      %v1295 = vunpack.c.l.b16 %v1130
      %v1296 = vunpack.c.l.b16 %v1133
      %v1297 = vunpack.c.l.b16 %v1137
      %v1298 = vunpack.c.l.b16 %v1140
      %v1299 = vunpack.c.l.b16 %v1144
      %v1300 = vunpack.c.l.b16 %v1147
      %v1301 = vunpack.c.l.b16 %v1151
      %v1302 = vunpack.c.l.b16 %v1154
      %v1303 = vpack.c.b16 %v1288, %v1287
      %v1304 = vpack.c.b16 %v1290, %v1289
      %v1305 = vpack.c.b16 %v1292, %v1291
      %v1306 = vpack.c.b16 %v1294, %v1293
      %v1307 = vpack.c.b16 %v1296, %v1295
      %v1308 = vpack.c.b16 %v1298, %v1297
      %v1309 = vpack.c.b16 %v1300, %v1299
      %v1310 = vpack.c.b16 %v1302, %v1301
      %v1319 = vunpack.c.l.b16 %v871
      %v1320 = vunpack.c.l.b16 %v872
      %v1321 = vpack.c.b16 %v1320, %v1319
      %v1323 = vunpack.c.l.b16 %v1168
      %v1324 = vunpack.c.l.b16 %v1178
      %v1325 = vpack.c.b16 %v1324, %v1323
      %v1327 = vunpack.c.l.b16 %v1185
      %v1328 = vunpack.c.l.b16 %v1188
      %v1329 = vpack.c.b16 %v1328, %v1327
      %v1331 = vunpack.c.l.b16 %v874
      %v1332 = vunpack.c.l.b16 %v875
      %v1333 = vpack.c.b16 %v1332, %v1331
      %v1335 = vunpack.c.l.b16 %v1202
      %v1336 = vunpack.c.l.b16 %v1212
      %v1337 = vpack.c.b16 %v1336, %v1335
      %v1339 = vunpack.c.l.b16 %v1219
      %v1340 = vunpack.c.l.b16 %v1222
      %v1341 = vpack.c.b16 %v1340, %v1339
      %v1343 = vld [vmem:[%s1] sm:$0xf]
      %v1344 = vld [vmem:[%s1 + $0x4] sm:$0xf]
      %v1345 = vld [vmem:[%s1 + $0x8] sm:$0xf]
      %v1346 = vld [vmem:[%s1 + $0xc] sm:$0xf]
      %v1347 = vld [vmem:[%s1 + $0x10] sm:$0xf]
      %v1348 = vld [vmem:[%s1 + $0x14] sm:$0xf]
      %v1349 = vld [vmem:[%s1 + $0x18] sm:$0xf]
      %v1350 = vld [vmem:[%s1 + $0x1c] sm:$0xf]
      %v1351 = vld [vmem:[%s1 + $0x20] sm:$0xf]
      %v1352 = vld [vmem:[%s1 + $0x24] sm:$0xf]
      %v1353 = vld [vmem:[%s1 + $0x28] sm:$0xf]
      %v1354 = vld [vmem:[%s1 + $0x2c] sm:$0xf]
      %v1355 = vld [vmem:[%s1 + $0x30] sm:$0xf]
      %v1356 = vld [vmem:[%s1 + $0x34] sm:$0xf]
      %v1357 = vld [vmem:[%s1 + $0x38] sm:$0xf]
      %v1358 = vld [vmem:[%s1 + $0x3c] sm:$0xf]
      %v1359 = vld [vmem:[%s1 + $0x40] sm:$0xf]
      %v1360 = vld [vmem:[%s1 + $0x44] sm:$0xf]
      %v1361 = vld [vmem:[%s1 + $0x48] sm:$0xf]
      %v1362 = vld [vmem:[%s1 + $0x4c] sm:$0xf]
      %v1363 = vld [vmem:[%s1 + $0x50] sm:$0xf]
      %v1364 = vld [vmem:[%s1 + $0x54] sm:$0xf]
      %v1365 = vld [vmem:[%s1 + $0x58] sm:$0xf]
      %v1366 = vld [vmem:[%s1 + $0x5c] sm:$0xf]
      %v1367 = vld [vmem:[%s1 + $0x60] sm:$0xf]
      %v1368 = vld [vmem:[%s1 + $0x64] sm:$0xf]
      %v1369 = vld [vmem:[%s1 + $0x68] sm:$0xf]
      %v1370 = vld [vmem:[%s1 + $0x6c] sm:$0xf]
      %v1371 = vld [vmem:[%s1 + $0x70] sm:$0xf]
      %v1372 = vld [vmem:[%s1 + $0x74] sm:$0xf]
      %v1373 = vld [vmem:[%s1 + $0x78] sm:$0xf]
      %v1374 = vld [vmem:[%s1 + $0x7c] sm:$0xf]
      %v1375 = vld [vmem:[%s1 + $0x80] sm:$0xf]
      %v1376 = vld [vmem:[%s1 + $0x84] sm:$0xf]
      %v1377 = vld [vmem:[%s1 + $0x88] sm:$0xf]
      %v1378 = vld [vmem:[%s1 + $0x8c] sm:$0xf]
      %v1379 = vld [vmem:[%s1 + $0x90] sm:$0xf]
      %v1380 = vld [vmem:[%s1 + $0x94] sm:$0xf]
      %v1381 = vld [vmem:[%s1 + $0x98] sm:$0xf]
      %v1382 = vld [vmem:[%s1 + $0x9c] sm:$0xf]
      %v1383 = vld [vmem:[%s1 + $0xa0] sm:$0xf]
      %v1384 = vld [vmem:[%s1 + $0xa4] sm:$0xf]
      %v1385 = vld [vmem:[%s1 + $0xa8] sm:$0xf]
      %v1386 = vld [vmem:[%s1 + $0xac] sm:$0xf]
      %v1387 = vld [vmem:[%s1 + $0xb0] sm:$0xf]
      %v1388 = vld [vmem:[%s1 + $0xb4] sm:$0xf]
      %v1389 = vld [vmem:[%s1 + $0xb8] sm:$0xf]
      %v1390 = vld [vmem:[%s1 + $0xbc] sm:$0xf]
      %v1391 = vld [vmem:[%s1 + $0xc0] sm:$0xf]
      %v1392 = vld [vmem:[%s1 + $0xc4] sm:$0xf]
      %v1393 = vld [vmem:[%s1 + $0xc8] sm:$0xf]
      %v1394 = vld [vmem:[%s1 + $0xcc] sm:$0xf]
      %v1395 = vld [vmem:[%s1 + $0xd0] sm:$0xf]
      %v1396 = vld [vmem:[%s1 + $0xd4] sm:$0xf]
      %v1397 = vld [vmem:[%s1 + $0xd8] sm:$0xf]
      %v1398 = vld [vmem:[%s1 + $0xdc] sm:$0xf]
      %v1399 = vld [vmem:[%s1 + $0xe0] sm:$0xf]
      %v1400 = vld [vmem:[%s1 + $0xe4] sm:$0xf]
      %v1401 = vld [vmem:[%s1 + $0xe8] sm:$0xf]
      %v1402 = vld [vmem:[%s1 + $0xec] sm:$0xf]
      %v1403 = vld [vmem:[%s1 + $0xf0] sm:$0xf]
      %v1404 = vld [vmem:[%s1 + $0xf4] sm:$0xf]
      %v1405 = vld [vmem:[%s1 + $0xf8] sm:$0xf]
      %v1406 = vld [vmem:[%s1 + $0xfc] sm:$0xf]
      %v1407 = vld [vmem:[%s1 + $0x100] sm:$0xf]
      %v1408 = vld [vmem:[%s1 + $0x104] sm:$0xf]
      %v1409 = vld [vmem:[%s1 + $0x108] sm:$0xf]
      %v1410 = vld [vmem:[%s1 + $0x10c] sm:$0xf]
      %v1411 = vld [vmem:[%s1 + $0x110] sm:$0xf]
      %v1412 = vld [vmem:[%s1 + $0x114] sm:$0xf]
      %v1413 = vld [vmem:[%s1 + $0x118] sm:$0xf]
      %v1414 = vld [vmem:[%s1 + $0x11c] sm:$0xf]
      %v1415 = vld [vmem:[%s1 + $0x120] sm:$0xf]
      %v1416 = vld [vmem:[%s1 + $0x124] sm:$0xf]
      %v1417 = vld [vmem:[%s1 + $0x128] sm:$0xf]
      %v1418 = vld [vmem:[%s1 + $0x12c] sm:$0xf]
      %v1419 = vld [vmem:[%s1 + $0x130] sm:$0xf]
      %v1420 = vld [vmem:[%s1 + $0x134] sm:$0xf]
      %v1421 = vld [vmem:[%s1 + $0x138] sm:$0xf]
      %v1422 = vld [vmem:[%s1 + $0x13c] sm:$0xf]
      %v1423 = vld [vmem:[%s1 + $0x140] sm:$0xf]
      %v1424 = vld [vmem:[%s1 + $0x144] sm:$0xf]
      %v1425 = vld [vmem:[%s1 + $0x148] sm:$0xf]
      %v1426 = vld [vmem:[%s1 + $0x14c] sm:$0xf]
      %v1427 = vld [vmem:[%s1 + $0x150] sm:$0xf]
      %v1428 = vld [vmem:[%s1 + $0x154] sm:$0xf]
      %v1429 = vld [vmem:[%s1 + $0x158] sm:$0xf]
      %v1430 = vld [vmem:[%s1 + $0x15c] sm:$0xf]
      %v1431 = vld [vmem:[%s1 + $0x160] sm:$0xf]
      %v1432 = vld [vmem:[%s1 + $0x164] sm:$0xf]
      %v1433 = vld [vmem:[%s1 + $0x168] sm:$0xf]
      %v1434 = vld [vmem:[%s1 + $0x16c] sm:$0xf]
      %v1435 = vld [vmem:[%s1 + $0x170] sm:$0xf]
      %v1436 = vld [vmem:[%s1 + $0x174] sm:$0xf]
      %v1437 = vld [vmem:[%s1 + $0x178] sm:$0xf]
      %v1438 = vld [vmem:[%s1 + $0x17c] sm:$0xf]
      %v1439 = vld [vmem:[%s1 + $0x180] sm:$0xf]
      %v1440 = vld [vmem:[%s1 + $0x184] sm:$0xf]
      %v1441 = vld [vmem:[%s1 + $0x188] sm:$0xf]
      %v1442 = vld [vmem:[%s1 + $0x18c] sm:$0xf]
      %v1443 = vld [vmem:[%s1 + $0x190] sm:$0xf]
      %v1444 = vld [vmem:[%s1 + $0x194] sm:$0xf]
      %v1445 = vld [vmem:[%s1 + $0x198] sm:$0xf]
      %v1446 = vld [vmem:[%s1 + $0x19c] sm:$0xf]
      %v1447 = vld [vmem:[%s1 + $0x1a0] sm:$0xf]
      %v1448 = vld [vmem:[%s1 + $0x1a4] sm:$0xf]
      %v1449 = vld [vmem:[%s1 + $0x1a8] sm:$0xf]
      %v1450 = vld [vmem:[%s1 + $0x1ac] sm:$0xf]
      %v1451 = vld [vmem:[%s1 + $0x1b0] sm:$0xf]
      %v1452 = vld [vmem:[%s1 + $0x1b4] sm:$0xf]
      %v1453 = vld [vmem:[%s1 + $0x1b8] sm:$0xf]
      %v1454 = vld [vmem:[%s1 + $0x1bc] sm:$0xf]
      %v1455 = vld [vmem:[%s1 + $0x1c0] sm:$0xf]
      %v1456 = vld [vmem:[%s1 + $0x1c4] sm:$0xf]
      %v1457 = vld [vmem:[%s1 + $0x1c8] sm:$0xf]
      %v1458 = vld [vmem:[%s1 + $0x1cc] sm:$0xf]
      %v1459 = vld [vmem:[%s1 + $0x1d0] sm:$0xf]
      %v1460 = vld [vmem:[%s1 + $0x1d4] sm:$0xf]
      %v1461 = vld [vmem:[%s1 + $0x1d8] sm:$0xf]
      %v1462 = vld [vmem:[%s1 + $0x1dc] sm:$0xf]
      %v1463 = vld [vmem:[%s1 + $0x1e0] sm:$0xf]
      %v1464 = vld [vmem:[%s1 + $0x1e4] sm:$0xf]
      %v1465 = vld [vmem:[%s1 + $0x1e8] sm:$0xf]
      %v1466 = vld [vmem:[%s1 + $0x1ec] sm:$0xf]
      %v1467 = vld [vmem:[%s1 + $0x1f0] sm:$0xf]
      %v1468 = vld [vmem:[%s1 + $0x1f4] sm:$0xf]
      %v1469 = vld [vmem:[%s1 + $0x1f8] sm:$0xf]
      %v1470 = vld [vmem:[%s1 + $0x1fc] sm:$0xf]
      %v1471 = vld [vmem:[%s1 + $0x200] sm:$0xf]
      %v1472 = vld [vmem:[%s1 + $0x204] sm:$0xf]
      %v1473 = vld [vmem:[%s1 + $0x208] sm:$0xf]
      %v1474 = vld [vmem:[%s1 + $0x20c] sm:$0xf]
      %v1475 = vld [vmem:[%s1 + $0x210] sm:$0xf]
      %v1476 = vld [vmem:[%s1 + $0x214] sm:$0xf]
      %v1477 = vld [vmem:[%s1 + $0x218] sm:$0xf]
      %v1478 = vld [vmem:[%s1 + $0x21c] sm:$0xf]
      %v1479 = vld [vmem:[%s1 + $0x220] sm:$0xf]
      %v1480 = vld [vmem:[%s1 + $0x224] sm:$0xf]
      %v1481 = vld [vmem:[%s1 + $0x228] sm:$0xf]
      %v1482 = vld [vmem:[%s1 + $0x22c] sm:$0xf]
      %v1483 = vld [vmem:[%s1 + $0x230] sm:$0xf]
      %v1484 = vld [vmem:[%s1 + $0x234] sm:$0xf]
      %v1485 = vld [vmem:[%s1 + $0x238] sm:$0xf]
      %v1486 = vld [vmem:[%s1 + $0x23c] sm:$0xf]
      %v1631 = vunpack.c.l.b16 %v1343
      %v1632 = vunpack.c.l.b16 %v1344
      %v1633 = vunpack.c.l.b16 %v1345
      %v1634 = vunpack.c.l.b16 %v1346
      %v1635 = vunpack.c.l.b16 %v1347
      %v1636 = vunpack.c.l.b16 %v1348
      %v1637 = vunpack.c.l.b16 %v1349
      %v1638 = vunpack.c.l.b16 %v1350
      %v1639 = vunpack.c.l.b16 %v1351
      %v1640 = vunpack.c.l.b16 %v1352
      %v1641 = vunpack.c.l.b16 %v1353
      %v1642 = vunpack.c.l.b16 %v1354
      %v1643 = vunpack.c.l.b16 %v1355
      %v1644 = vunpack.c.l.b16 %v1356
      %v1645 = vunpack.c.l.b16 %v1357
      %v1646 = vunpack.c.l.b16 %v1358
      %v1647 = vunpack.c.l.b16 %v1359
      %v1648 = vunpack.c.l.b16 %v1360
      %v1649 = vunpack.c.l.b16 %v1361
      %v1650 = vunpack.c.l.b16 %v1362
      %v1651 = vunpack.c.l.b16 %v1363
      %v1652 = vunpack.c.l.b16 %v1364
      %v1653 = vunpack.c.l.b16 %v1365
      %v1654 = vunpack.c.l.b16 %v1366
      %v1655 = vunpack.c.l.b16 %v1367
      %v1656 = vunpack.c.l.b16 %v1368
      %v1657 = vunpack.c.l.b16 %v1369
      %v1658 = vunpack.c.l.b16 %v1370
      %v1659 = vunpack.c.l.b16 %v1371
      %v1660 = vunpack.c.l.b16 %v1372
      %v1661 = vunpack.c.l.b16 %v1373
      %v1662 = vunpack.c.l.b16 %v1374
      %v1663 = vunpack.c.l.b16 %v1375
      %v1664 = vunpack.c.l.b16 %v1376
      %v1665 = vunpack.c.l.b16 %v1377
      %v1666 = vunpack.c.l.b16 %v1378
      %v1667 = vunpack.c.l.b16 %v1379
      %v1668 = vunpack.c.l.b16 %v1380
      %v1669 = vunpack.c.l.b16 %v1381
      %v1670 = vunpack.c.l.b16 %v1382
      %v1671 = vunpack.c.l.b16 %v1383
      %v1672 = vunpack.c.l.b16 %v1384
      %v1673 = vunpack.c.l.b16 %v1385
      %v1674 = vunpack.c.l.b16 %v1386
      %v1675 = vunpack.c.l.b16 %v1387
      %v1676 = vunpack.c.l.b16 %v1388
      %v1677 = vunpack.c.l.b16 %v1389
      %v1678 = vunpack.c.l.b16 %v1390
      %v1679 = vunpack.c.l.b16 %v1391
      %v1680 = vunpack.c.l.b16 %v1392
      %v1681 = vunpack.c.l.b16 %v1393
      %v1682 = vunpack.c.l.b16 %v1394
      %v1683 = vunpack.c.l.b16 %v1395
      %v1684 = vunpack.c.l.b16 %v1396
      %v1685 = vunpack.c.l.b16 %v1397
      %v1686 = vunpack.c.l.b16 %v1398
      %v1687 = vunpack.c.l.b16 %v1399
      %v1688 = vunpack.c.l.b16 %v1400
      %v1689 = vunpack.c.l.b16 %v1401
      %v1690 = vunpack.c.l.b16 %v1402
      %v1691 = vunpack.c.l.b16 %v1403
      %v1692 = vunpack.c.l.b16 %v1404
      %v1693 = vunpack.c.l.b16 %v1405
      %v1694 = vunpack.c.l.b16 %v1406
      %v1695 = vunpack.c.l.b16 %v1407
      %v1696 = vunpack.c.l.b16 %v1408
      %v1697 = vunpack.c.l.b16 %v1409
      %v1698 = vunpack.c.l.b16 %v1410
      %v1699 = vunpack.c.l.b16 %v1411
      %v1700 = vunpack.c.l.b16 %v1412
      %v1701 = vunpack.c.l.b16 %v1413
      %v1702 = vunpack.c.l.b16 %v1414
      %v1703 = vunpack.c.l.b16 %v1415
      %v1704 = vunpack.c.l.b16 %v1416
      %v1705 = vunpack.c.l.b16 %v1417
      %v1706 = vunpack.c.l.b16 %v1418
      %v1707 = vunpack.c.l.b16 %v1419
      %v1708 = vunpack.c.l.b16 %v1420
      %v1709 = vunpack.c.l.b16 %v1421
      %v1710 = vunpack.c.l.b16 %v1422
      %v1711 = vunpack.c.l.b16 %v1423
      %v1712 = vunpack.c.l.b16 %v1424
      %v1713 = vunpack.c.l.b16 %v1425
      %v1714 = vunpack.c.l.b16 %v1426
      %v1715 = vunpack.c.l.b16 %v1427
      %v1716 = vunpack.c.l.b16 %v1428
      %v1717 = vunpack.c.l.b16 %v1429
      %v1718 = vunpack.c.l.b16 %v1430
      %v1719 = vunpack.c.l.b16 %v1431
      %v1720 = vunpack.c.l.b16 %v1432
      %v1721 = vunpack.c.l.b16 %v1433
      %v1722 = vunpack.c.l.b16 %v1434
      %v1723 = vunpack.c.l.b16 %v1435
      %v1724 = vunpack.c.l.b16 %v1436
      %v1725 = vunpack.c.l.b16 %v1437
      %v1726 = vunpack.c.l.b16 %v1438
      %v1727 = vunpack.c.l.b16 %v1439
      %v1728 = vunpack.c.l.b16 %v1440
      %v1729 = vunpack.c.l.b16 %v1441
      %v1730 = vunpack.c.l.b16 %v1442
      %v1731 = vunpack.c.l.b16 %v1443
      %v1732 = vunpack.c.l.b16 %v1444
      %v1733 = vunpack.c.l.b16 %v1445
      %v1734 = vunpack.c.l.b16 %v1446
      %v1735 = vunpack.c.l.b16 %v1447
      %v1736 = vunpack.c.l.b16 %v1448
      %v1737 = vunpack.c.l.b16 %v1449
      %v1738 = vunpack.c.l.b16 %v1450
      %v1739 = vunpack.c.l.b16 %v1451
      %v1740 = vunpack.c.l.b16 %v1452
      %v1741 = vunpack.c.l.b16 %v1453
      %v1742 = vunpack.c.l.b16 %v1454
      %v1743 = vunpack.c.l.b16 %v1455
      %v1744 = vunpack.c.l.b16 %v1456
      %v1745 = vunpack.c.l.b16 %v1457
      %v1746 = vunpack.c.l.b16 %v1458
      %v1747 = vunpack.c.l.b16 %v1459
      %v1748 = vunpack.c.l.b16 %v1460
      %v1749 = vunpack.c.l.b16 %v1461
      %v1750 = vunpack.c.l.b16 %v1462
      %v1751 = vunpack.c.l.b16 %v1463
      %v1752 = vunpack.c.l.b16 %v1464
      %v1753 = vunpack.c.l.b16 %v1465
      %v1754 = vunpack.c.l.b16 %v1466
      %v1755 = vunpack.c.l.b16 %v1467
      %v1756 = vunpack.c.l.b16 %v1468
      %v1757 = vunpack.c.l.b16 %v1469
      %v1758 = vunpack.c.l.b16 %v1470
      %v1759 = vunpack.c.l.b16 %v1471
      %v1760 = vunpack.c.l.b16 %v1472
      %v1761 = vunpack.c.l.b16 %v1473
      %v1762 = vunpack.c.l.b16 %v1474
      %v1763 = vunpack.c.l.b16 %v1475
      %v1764 = vunpack.c.l.b16 %v1476
      %v1765 = vunpack.c.l.b16 %v1477
      %v1766 = vunpack.c.l.b16 %v1478
      %v1767 = vunpack.c.l.b16 %v1479
      %v1768 = vunpack.c.l.b16 %v1480
      %v1769 = vunpack.c.l.b16 %v1481
      %v1770 = vunpack.c.l.b16 %v1482
      %v1771 = vunpack.c.l.b16 %v1483
      %v1772 = vunpack.c.l.b16 %v1484
      %v1773 = vunpack.c.l.b16 %v1485
      %v1774 = vunpack.c.l.b16 %v1486
      %v1775 = vpack.c.b16 %v1632, %v1631
      %v1776 = vpack.c.b16 %v1634, %v1633
      %v1777 = vpack.c.b16 %v1636, %v1635
      %v1778 = vpack.c.b16 %v1638, %v1637
      %v1779 = vpack.c.b16 %v1640, %v1639
      %v1780 = vpack.c.b16 %v1642, %v1641
      %v1781 = vpack.c.b16 %v1644, %v1643
      %v1782 = vpack.c.b16 %v1646, %v1645
      %v1783 = vpack.c.b16 %v1648, %v1647
      %v1784 = vpack.c.b16 %v1650, %v1649
      %v1785 = vpack.c.b16 %v1652, %v1651
      %v1786 = vpack.c.b16 %v1654, %v1653
      %v1787 = vpack.c.b16 %v1656, %v1655
      %v1788 = vpack.c.b16 %v1658, %v1657
      %v1789 = vpack.c.b16 %v1660, %v1659
      %v1790 = vpack.c.b16 %v1662, %v1661
      %v1791 = vpack.c.b16 %v1664, %v1663
      %v1792 = vpack.c.b16 %v1666, %v1665
      %v1793 = vpack.c.b16 %v1668, %v1667
      %v1794 = vpack.c.b16 %v1670, %v1669
      %v1795 = vpack.c.b16 %v1672, %v1671
      %v1796 = vpack.c.b16 %v1674, %v1673
      %v1797 = vpack.c.b16 %v1676, %v1675
      %v1798 = vpack.c.b16 %v1678, %v1677
      %v1799 = vpack.c.b16 %v1680, %v1679
      %v1800 = vpack.c.b16 %v1682, %v1681
      %v1801 = vpack.c.b16 %v1684, %v1683
      %v1802 = vpack.c.b16 %v1686, %v1685
      %v1803 = vpack.c.b16 %v1688, %v1687
      %v1804 = vpack.c.b16 %v1690, %v1689
      %v1805 = vpack.c.b16 %v1692, %v1691
      %v1806 = vpack.c.b16 %v1694, %v1693
      %v1807 = vpack.c.b16 %v1696, %v1695
      %v1808 = vpack.c.b16 %v1698, %v1697
      %v1809 = vpack.c.b16 %v1700, %v1699
      %v1810 = vpack.c.b16 %v1702, %v1701
      %v1811 = vpack.c.b16 %v1704, %v1703
      %v1812 = vpack.c.b16 %v1706, %v1705
      %v1813 = vpack.c.b16 %v1708, %v1707
      %v1814 = vpack.c.b16 %v1710, %v1709
      %v1815 = vpack.c.b16 %v1712, %v1711
      %v1816 = vpack.c.b16 %v1714, %v1713
      %v1817 = vpack.c.b16 %v1716, %v1715
      %v1818 = vpack.c.b16 %v1718, %v1717
      %v1819 = vpack.c.b16 %v1720, %v1719
      %v1820 = vpack.c.b16 %v1722, %v1721
      %v1821 = vpack.c.b16 %v1724, %v1723
      %v1822 = vpack.c.b16 %v1726, %v1725
      %v1823 = vpack.c.b16 %v1728, %v1727
      %v1824 = vpack.c.b16 %v1730, %v1729
      %v1825 = vpack.c.b16 %v1732, %v1731
      %v1826 = vpack.c.b16 %v1734, %v1733
      %v1827 = vpack.c.b16 %v1736, %v1735
      %v1828 = vpack.c.b16 %v1738, %v1737
      %v1829 = vpack.c.b16 %v1740, %v1739
      %v1830 = vpack.c.b16 %v1742, %v1741
      %v1831 = vpack.c.b16 %v1744, %v1743
      %v1832 = vpack.c.b16 %v1746, %v1745
      %v1833 = vpack.c.b16 %v1748, %v1747
      %v1834 = vpack.c.b16 %v1750, %v1749
      %v1835 = vpack.c.b16 %v1752, %v1751
      %v1836 = vpack.c.b16 %v1754, %v1753
      %v1837 = vpack.c.b16 %v1756, %v1755
      %v1838 = vpack.c.b16 %v1758, %v1757
      %v1839 = vpack.c.b16 %v1760, %v1759
      %v1840 = vpack.c.b16 %v1762, %v1761
      %v1841 = vpack.c.b16 %v1764, %v1763
      %v1842 = vpack.c.b16 %v1766, %v1765
      %v1843 = vpack.c.b16 %v1768, %v1767
      %v1844 = vpack.c.b16 %v1770, %v1769
      %v1845 = vpack.c.b16 %v1772, %v1771
      %v1846 = vpack.c.b16 %v1774, %v1773
      %1919 = vmatprep.subr.bf16.mxu0 0
      %1920 = vmatpush1.bf16.msra.mxu0 %v1775
      %1921 = vmatprep.subr.bf16.mxu0 0
      %1922 = vmatpush1.bf16.msra.mxu0 %v1776
      %1923 = vmatprep.subr.bf16.mxu0 0
      %1924 = vmatpush1.bf16.msra.mxu0 %v1777
      %1925 = vmatprep.subr.bf16.mxu0 0
      %1926 = vmatpush1.bf16.msra.mxu0 %v1778
      %1927 = vmatprep.subr.bf16.mxu0 0
      %1928 = vmatpush1.bf16.msra.mxu0 %v1779
      %1929 = vmatprep.subr.bf16.mxu0 0
      %1930 = vmatpush1.bf16.msra.mxu0 %v1780
      %1931 = vmatprep.subr.bf16.mxu0 0
      %1932 = vmatpush1.bf16.msra.mxu0 %v1781
      %1933 = vmatprep.subr.bf16.mxu0 0
      %1934 = vmatpush1.bf16.msra.mxu0 %v1782
      %1935 = vmatprep.subr.bf16.mxu0 0
      %1936 = vmatpush1.bf16.msra.mxu0 %v1783
      %1937 = vmatprep.subr.bf16.mxu0 0
      %1938 = vmatpush1.bf16.msra.mxu0 %v1784
      %1939 = vmatprep.subr.bf16.mxu0 0
      %1940 = vmatpush1.bf16.msra.mxu0 %v1785
      %1941 = vmatprep.subr.bf16.mxu0 0
      %1942 = vmatpush1.bf16.msra.mxu0 %v1786
      %1943 = vmatprep.subr.bf16.mxu0 0
      %1944 = vmatpush1.bf16.msra.mxu0 %v1787
      %1945 = vmatprep.subr.bf16.mxu0 0
      %1946 = vmatpush1.bf16.msra.mxu0 %v1788
      %1947 = vmatprep.subr.bf16.mxu0 0
      %1948 = vmatpush1.bf16.msra.mxu0 %v1789
      %1949 = vmatprep.subr.bf16.mxu0 0
      %1950 = vmatpush1.bf16.msra.mxu0 %v1790
      %1951 = vmatprep.mubr.bf16.mxu0 %v1271
      %1952 = vmatmul.mubr.bf16.gmra.mrb[0].mxu0 %v1239
      %v1953 = vpop.f32.mrb[0].mxu0
      %v1954 = vadd.f32 0.0, %v1953
      %v1955 = vpop.f32.mrb[0].mxu0
      %v1956 = vpop.f32.mrb[0].mxu0
      %v1957 = vadd.f32 0.0, %v1956
      %v1958 = vpop.f32.mrb[0].mxu0
      %1959 = vmatprep.mubr.bf16.mxu0 %v1272
      %1960 = vmatmul.mubr.bf16.gmra.mrb[0].mxu0 %v1240
      %v1961 = vpop.f32.mrb[0].mxu0
      %v1962 = vadd.f32 0.0, %v1961
      %v1963 = vpop.f32.mrb[0].mxu0
      %v1964 = vpop.f32.mrb[0].mxu0
      %v1965 = vadd.f32 0.0, %v1964
      %v1966 = vpop.f32.mrb[0].mxu0
      %1967 = vmatprep.mubr.bf16.mxu0 %v1273
      %1968 = vmatmul.mubr.bf16.gmra.mrb[0].mxu0 %v1241
      %v1969 = vpop.f32.mrb[0].mxu0
      %v1970 = vadd.f32 0.0, %v1969
      %v1971 = vpop.f32.mrb[0].mxu0
      %v1972 = vpop.f32.mrb[0].mxu0
      %v1973 = vadd.f32 0.0, %v1972
      %v1974 = vpop.f32.mrb[0].mxu0
      %1975 = vmatprep.mubr.bf16.mxu0 %v1274
      %1976 = vmatmul.mubr.bf16.gmra.mrb[0].mxu0 %v1242
      %v1977 = vpop.f32.mrb[0].mxu0
      %v1978 = vadd.f32 0.0, %v1977
      %v1979 = vpop.f32.mrb[0].mxu0
      %v1980 = vpop.f32.mrb[0].mxu0
      %v1981 = vadd.f32 0.0, %v1980
      %v1982 = vpop.f32.mrb[0].mxu0
      %1983 = vmatprep.mubr.bf16.mxu0 %v1275
      %1984 = vmatmul.mubr.bf16.gmra.mrb[0].mxu0 %v1243
      %v1985 = vpop.f32.mrb[0].mxu0
      %v1986 = vadd.f32 0.0, %v1985
      %v1987 = vpop.f32.mrb[0].mxu0
      %v1988 = vpop.f32.mrb[0].mxu0
      %v1989 = vadd.f32 0.0, %v1988
      %v1990 = vpop.f32.mrb[0].mxu0
      %1991 = vmatprep.mubr.bf16.mxu0 %v1276
      %1992 = vmatmul.mubr.bf16.gmra.mrb[0].mxu0 %v1244
      %v1993 = vpop.f32.mrb[0].mxu0
      %v1994 = vadd.f32 0.0, %v1993
      %v1995 = vpop.f32.mrb[0].mxu0
      %v1996 = vpop.f32.mrb[0].mxu0
      %v1997 = vadd.f32 0.0, %v1996
      %v1998 = vpop.f32.mrb[0].mxu0
      %1999 = vmatprep.mubr.bf16.mxu0 %v1277
      %2000 = vmatmul.mubr.bf16.gmra.mrb[0].mxu0 %v1245
      %v2001 = vpop.f32.mrb[0].mxu0
      %v2002 = vadd.f32 0.0, %v2001
      %v2003 = vpop.f32.mrb[0].mxu0
      %v2004 = vpop.f32.mrb[0].mxu0
      %v2005 = vadd.f32 0.0, %v2004
      %v2006 = vpop.f32.mrb[0].mxu0
      %2007 = vmatprep.mubr.bf16.mxu0 %v1278
      %2008 = vmatmul.mubr.bf16.gmra.mrb[0].mxu0 %v1246
      %v2009 = vpop.f32.mrb[0].mxu0
      %v2010 = vadd.f32 0.0, %v2009
      %v2011 = vpop.f32.mrb[0].mxu0
      %v2012 = vpop.f32.mrb[0].mxu0
      %v2013 = vadd.f32 0.0, %v2012
      %v2014 = vpop.f32.mrb[0].mxu0
      %2015 = vdwg.mxu0
      %2016 = vmatprep.subr.bf16.mxu0 0
      %2017 = vmatpush1.bf16.msra.mxu0 %v1791
      %2018 = vmatprep.subr.bf16.mxu0 0
      %2019 = vmatpush1.bf16.msra.mxu0 %v1792
      %2020 = vmatprep.subr.bf16.mxu0 0
      %2021 = vmatpush1.bf16.msra.mxu0 %v1793
      %2022 = vmatprep.subr.bf16.mxu0 0
      %2023 = vmatpush1.bf16.msra.mxu0 %v1794
      %2024 = vmatprep.subr.bf16.mxu0 0
      %2025 = vmatpush1.bf16.msra.mxu0 %v1795
      %2026 = vmatprep.subr.bf16.mxu0 0
      %2027 = vmatpush1.bf16.msra.mxu0 %v1796
      %2028 = vmatprep.subr.bf16.mxu0 0
      %2029 = vmatpush1.bf16.msra.mxu0 %v1797
      %2030 = vmatprep.subr.bf16.mxu0 0
      %2031 = vmatpush1.bf16.msra.mxu0 %v1798
      %2032 = vmatprep.subr.bf16.mxu0 0
      %2033 = vmatpush1.bf16.msra.mxu0 %v1799
      %2034 = vmatprep.subr.bf16.mxu0 0
      %2035 = vmatpush1.bf16.msra.mxu0 %v1800
      %2036 = vmatprep.subr.bf16.mxu0 0
      %2037 = vmatpush1.bf16.msra.mxu0 %v1801
      %2038 = vmatprep.subr.bf16.mxu0 0
      %2039 = vmatpush1.bf16.msra.mxu0 %v1802
      %2040 = vmatprep.subr.bf16.mxu0 0
      %2041 = vmatpush1.bf16.msra.mxu0 %v1803
      %2042 = vmatprep.subr.bf16.mxu0 0
      %2043 = vmatpush1.bf16.msra.mxu0 %v1804
      %2044 = vmatprep.subr.bf16.mxu0 0
      %2045 = vmatpush1.bf16.msra.mxu0 %v1805
      %2046 = vmatprep.subr.bf16.mxu0 0
      %2047 = vmatpush1.bf16.msra.mxu0 %v1806
      %2048 = vmatprep.mubr.bf16.mxu0 %v1240
      %2049 = vmatmul.mubr.bf16.gmra.mrb[0].mxu0 %v1303
      %v2050 = vpop.f32.mrb[0].mxu0
      %v2051 = vadd.f32 %v1954, %v2050
      %v2052 = vpop.f32.mrb[0].mxu0
      %v2053 = vpop.f32.mrb[0].mxu0
      %v2054 = vadd.f32 %v1957, %v2053
      %v2055 = vpop.f32.mrb[0].mxu0
      %2056 = vmatprep.mubr.bf16.mxu0 %v1241
      %2057 = vmatmul.mubr.bf16.gmra.mrb[0].mxu0 %v1304
      %v2058 = vpop.f32.mrb[0].mxu0
      %v2059 = vadd.f32 %v1962, %v2058
      %v2060 = vpop.f32.mrb[0].mxu0
      %v2061 = vpop.f32.mrb[0].mxu0
      %v2062 = vadd.f32 %v1965, %v2061
      %v2063 = vpop.f32.mrb[0].mxu0
      %2064 = vmatprep.mubr.bf16.mxu0 %v1242
      %2065 = vmatmul.mubr.bf16.gmra.mrb[0].mxu0 %v1305
      %v2066 = vpop.f32.mrb[0].mxu0
      %v2067 = vadd.f32 %v1970, %v2066
      %v2068 = vpop.f32.mrb[0].mxu0
      %v2069 = vpop.f32.mrb[0].mxu0
      %v2070 = vadd.f32 %v1973, %v2069
      %v2071 = vpop.f32.mrb[0].mxu0
      %2072 = vmatprep.mubr.bf16.mxu0 %v1243
      %2073 = vmatmul.mubr.bf16.gmra.mrb[0].mxu0 %v1306
      %v2074 = vpop.f32.mrb[0].mxu0
      %v2075 = vadd.f32 %v1978, %v2074
      %v2076 = vpop.f32.mrb[0].mxu0
      %v2077 = vpop.f32.mrb[0].mxu0
      %v2078 = vadd.f32 %v1981, %v2077
      %v2079 = vpop.f32.mrb[0].mxu0
      %2080 = vmatprep.mubr.bf16.mxu0 %v1244
      %2081 = vmatmul.mubr.bf16.gmra.mrb[0].mxu0 %v1307
      %v2082 = vpop.f32.mrb[0].mxu0
      %v2083 = vadd.f32 %v1986, %v2082
      %v2084 = vpop.f32.mrb[0].mxu0
      %v2085 = vpop.f32.mrb[0].mxu0
      %v2086 = vadd.f32 %v1989, %v2085
      %v2087 = vpop.f32.mrb[0].mxu0
      %2088 = vmatprep.mubr.bf16.mxu0 %v1245
      %2089 = vmatmul.mubr.bf16.gmra.mrb[0].mxu0 %v1308
      %v2090 = vpop.f32.mrb[0].mxu0
      %v2091 = vadd.f32 %v1994, %v2090
      %v2092 = vpop.f32.mrb[0].mxu0
      %v2093 = vpop.f32.mrb[0].mxu0
      %v2094 = vadd.f32 %v1997, %v2093
      %v2095 = vpop.f32.mrb[0].mxu0
      %2096 = vmatprep.mubr.bf16.mxu0 %v1246
      %2097 = vmatmul.mubr.bf16.gmra.mrb[0].mxu0 %v1309
      %v2098 = vpop.f32.mrb[0].mxu0
      %v2099 = vadd.f32 %v2002, %v2098
      %v2100 = vpop.f32.mrb[0].mxu0
      %v2101 = vpop.f32.mrb[0].mxu0
      %v2102 = vadd.f32 %v2005, %v2101
      %v2103 = vpop.f32.mrb[0].mxu0
      %2104 = vmatprep.mubr.bf16.mxu0 %v1321
      %2105 = vmatmul.mubr.bf16.gmra.mrb[0].mxu0 %v1310
      %v2106 = vpop.f32.mrb[0].mxu0
      %v2107 = vadd.f32 %v2010, %v2106
      %v2108 = vpop.f32.mrb[0].mxu0
      %v2109 = vpop.f32.mrb[0].mxu0
      %v2110 = vadd.f32 %v2013, %v2109
      %v2111 = vpop.f32.mrb[0].mxu0
      %2112 = vdwg.mxu0
      %2113 = vmatprep.subr.bf16.mxu0 0
      %2114 = vmatpush1.bf16.msra.mxu0 %v1807
      %2115 = vmatprep.subr.bf16.mxu0 0
      %2116 = vmatpush1.bf16.msra.mxu0 %v1808
      %2117 = vmatprep.subr.bf16.mxu0 0
      %2118 = vmatpush1.bf16.msra.mxu0 %v1809
      %2119 = vmatprep.subr.bf16.mxu0 0
      %2120 = vmatpush1.bf16.msra.mxu0 %v1810
      %2121 = vmatprep.subr.bf16.mxu0 0
      %2122 = vmatpush1.bf16.msra.mxu0 %v1811
      %2123 = vmatprep.subr.bf16.mxu0 0
      %2124 = vmatpush1.bf16.msra.mxu0 %v1812
      %2125 = vmatprep.subr.bf16.mxu0 0
      %2126 = vmatpush1.bf16.msra.mxu0 %v1813
      %2127 = vmatprep.subr.bf16.mxu0 0
      %2128 = vmatpush1.bf16.msra.mxu0 %v1814
      %2129 = vmatprep.subr.bf16.mxu0 0
      %2130 = vmatpush1.bf16.msra.mxu0 %v1815
      %2131 = vmatprep.subr.bf16.mxu0 0
      %2132 = vmatpush1.bf16.msra.mxu0 %v1816
      %2133 = vmatprep.subr.bf16.mxu0 0
      %2134 = vmatpush1.bf16.msra.mxu0 %v1817
      %2135 = vmatprep.subr.bf16.mxu0 0
      %2136 = vmatpush1.bf16.msra.mxu0 %v1818
      %2137 = vmatprep.subr.bf16.mxu0 0
      %2138 = vmatpush1.bf16.msra.mxu0 %v1819
      %2139 = vmatprep.subr.bf16.mxu0 0
      %2140 = vmatpush1.bf16.msra.mxu0 %v1820
      %2141 = vmatprep.subr.bf16.mxu0 0
      %2142 = vmatpush1.bf16.msra.mxu0 %v1821
      %2143 = vmatprep.subr.bf16.mxu0 0
      %2144 = vmatpush1.bf16.msra.mxu0 %v1822
      %2145 = vmatprep.mubr.bf16.mxu0 %v1304
      %2146 = vmatmul.mubr.bf16.gmra.mrb[0].mxu0 %v1272
      %v2147 = vpop.f32.mrb[0].mxu0
      %v2148 = vadd.f32 %v2051, %v2147
      %v2149 = vpop.f32.mrb[0].mxu0
      %v2150 = vpop.f32.mrb[0].mxu0
      %v2151 = vadd.f32 %v2054, %v2150
      %v2152 = vpop.f32.mrb[0].mxu0
      %2153 = vmatprep.mubr.bf16.mxu0 %v1305
      %2154 = vmatmul.mubr.bf16.gmra.mrb[0].mxu0 %v1273
      %v2155 = vpop.f32.mrb[0].mxu0
      %v2156 = vadd.f32 %v2059, %v2155
      %v2157 = vpop.f32.mrb[0].mxu0
      %v2158 = vpop.f32.mrb[0].mxu0
      %v2159 = vadd.f32 %v2062, %v2158
      %v2160 = vpop.f32.mrb[0].mxu0
      %2161 = vmatprep.mubr.bf16.mxu0 %v1306
      %2162 = vmatmul.mubr.bf16.gmra.mrb[0].mxu0 %v1274
      %v2163 = vpop.f32.mrb[0].mxu0
      %v2164 = vadd.f32 %v2067, %v2163
      %v2165 = vpop.f32.mrb[0].mxu0
      %v2166 = vpop.f32.mrb[0].mxu0
      %v2167 = vadd.f32 %v2070, %v2166
      %v2168 = vpop.f32.mrb[0].mxu0
      %2169 = vmatprep.mubr.bf16.mxu0 %v1307
      %2170 = vmatmul.mubr.bf16.gmra.mrb[0].mxu0 %v1275
      %v2171 = vpop.f32.mrb[0].mxu0
      %v2172 = vadd.f32 %v2075, %v2171
      %v2173 = vpop.f32.mrb[0].mxu0
      %v2174 = vpop.f32.mrb[0].mxu0
      %v2175 = vadd.f32 %v2078, %v2174
      %v2176 = vpop.f32.mrb[0].mxu0
      %2177 = vmatprep.mubr.bf16.mxu0 %v1308
      %2178 = vmatmul.mubr.bf16.gmra.mrb[0].mxu0 %v1276
      %v2179 = vpop.f32.mrb[0].mxu0
      %v2180 = vadd.f32 %v2083, %v2179
      %v2181 = vpop.f32.mrb[0].mxu0
      %v2182 = vpop.f32.mrb[0].mxu0
      %v2183 = vadd.f32 %v2086, %v2182
      %v2184 = vpop.f32.mrb[0].mxu0
      %2185 = vmatprep.mubr.bf16.mxu0 %v1309
      %2186 = vmatmul.mubr.bf16.gmra.mrb[0].mxu0 %v1277
      %v2187 = vpop.f32.mrb[0].mxu0
      %v2188 = vadd.f32 %v2091, %v2187
      %v2189 = vpop.f32.mrb[0].mxu0
      %v2190 = vpop.f32.mrb[0].mxu0
      %v2191 = vadd.f32 %v2094, %v2190
      %v2192 = vpop.f32.mrb[0].mxu0
      %2193 = vmatprep.mubr.bf16.mxu0 %v1310
      %2194 = vmatmul.mubr.bf16.gmra.mrb[0].mxu0 %v1278
      %v2195 = vpop.f32.mrb[0].mxu0
      %v2196 = vadd.f32 %v2099, %v2195
      %v2197 = vpop.f32.mrb[0].mxu0
      %v2198 = vpop.f32.mrb[0].mxu0
      %v2199 = vadd.f32 %v2102, %v2198
      %v2200 = vpop.f32.mrb[0].mxu0
      %2201 = vmatprep.mubr.bf16.mxu0 %v1329
      %2202 = vmatmul.mubr.bf16.gmra.mrb[0].mxu0 %v1325
      %v2203 = vpop.f32.mrb[0].mxu0
      %v2204 = vadd.f32 %v2107, %v2203
      %v2205 = vpop.f32.mrb[0].mxu0
      %v2206 = vpop.f32.mrb[0].mxu0
      %v2207 = vadd.f32 %v2110, %v2206
      %v2208 = vpop.f32.mrb[0].mxu0
      %2209 = vdwg.mxu0
      %2210 = vmatprep.subr.bf16.mxu0 0
      %2211 = vmatpush1.bf16.msra.mxu0 %v1823
      %2212 = vmatprep.subr.bf16.mxu0 0
      %2213 = vmatpush1.bf16.msra.mxu0 %v1824
      %2214 = vmatprep.subr.bf16.mxu0 0
      %2215 = vmatpush1.bf16.msra.mxu0 %v1825
      %2216 = vmatprep.subr.bf16.mxu0 0
      %2217 = vmatpush1.bf16.msra.mxu0 %v1826
      %2218 = vmatprep.subr.bf16.mxu0 0
      %2219 = vmatpush1.bf16.msra.mxu0 %v1827
      %2220 = vmatprep.subr.bf16.mxu0 0
      %2221 = vmatpush1.bf16.msra.mxu0 %v1828
      %2222 = vmatprep.subr.bf16.mxu0 0
      %2223 = vmatpush1.bf16.msra.mxu0 %v1829
      %2224 = vmatprep.subr.bf16.mxu0 0
      %2225 = vmatpush1.bf16.msra.mxu0 %v1830
      %2226 = vmatprep.subr.bf16.mxu0 0
      %2227 = vmatpush1.bf16.msra.mxu0 %v1831
      %2228 = vmatprep.subr.bf16.mxu0 0
      %2229 = vmatpush1.bf16.msra.mxu0 %v1832
      %2230 = vmatprep.subr.bf16.mxu0 0
      %2231 = vmatpush1.bf16.msra.mxu0 %v1833
      %2232 = vmatprep.subr.bf16.mxu0 0
      %2233 = vmatpush1.bf16.msra.mxu0 %v1834
      %2234 = vmatprep.subr.bf16.mxu0 0
      %2235 = vmatpush1.bf16.msra.mxu0 %v1835
      %2236 = vmatprep.subr.bf16.mxu0 0
      %2237 = vmatpush1.bf16.msra.mxu0 %v1836
      %2238 = vmatprep.subr.bf16.mxu0 0
      %2239 = vmatpush1.bf16.msra.mxu0 %v1837
      %2240 = vmatprep.subr.bf16.mxu0 0
      %2241 = vmatpush1.bf16.msra.mxu0 %v1838
      %2242 = vmatprep.mubr.bf16.mxu0 %v1273
      %2243 = vmatmul.mubr.bf16.gmra.mrb[0].mxu0 %v1241
      %v2244 = vpop.f32.mrb[0].mxu0
      %v2245 = vadd.f32 %v2148, %v2244
      %v2246 = vpop.f32.mrb[0].mxu0
      %v2247 = vpop.f32.mrb[0].mxu0
      %v2248 = vadd.f32 %v2151, %v2247
      %v2249 = vpop.f32.mrb[0].mxu0
      %2250 = vmatprep.mubr.bf16.mxu0 %v1274
      %2251 = vmatmul.mubr.bf16.gmra.mrb[0].mxu0 %v1242
      %v2252 = vpop.f32.mrb[0].mxu0
      %v2253 = vadd.f32 %v2156, %v2252
      %v2254 = vpop.f32.mrb[0].mxu0
      %v2255 = vpop.f32.mrb[0].mxu0
      %v2256 = vadd.f32 %v2159, %v2255
      %v2257 = vpop.f32.mrb[0].mxu0
      %2258 = vmatprep.mubr.bf16.mxu0 %v1275
      %2259 = vmatmul.mubr.bf16.gmra.mrb[0].mxu0 %v1243
      %v2260 = vpop.f32.mrb[0].mxu0
      %v2261 = vadd.f32 %v2164, %v2260
      %v2262 = vpop.f32.mrb[0].mxu0
      %v2263 = vpop.f32.mrb[0].mxu0
      %v2264 = vadd.f32 %v2167, %v2263
      %v2265 = vpop.f32.mrb[0].mxu0
      %2266 = vmatprep.mubr.bf16.mxu0 %v1276
      %2267 = vmatmul.mubr.bf16.gmra.mrb[0].mxu0 %v1244
      %v2268 = vpop.f32.mrb[0].mxu0
      %v2269 = vadd.f32 %v2172, %v2268
      %v2270 = vpop.f32.mrb[0].mxu0
      %v2271 = vpop.f32.mrb[0].mxu0
      %v2272 = vadd.f32 %v2175, %v2271
      %v2273 = vpop.f32.mrb[0].mxu0
      %2274 = vmatprep.mubr.bf16.mxu0 %v1277
      %2275 = vmatmul.mubr.bf16.gmra.mrb[0].mxu0 %v1245
      %v2276 = vpop.f32.mrb[0].mxu0
      %v2277 = vadd.f32 %v2180, %v2276
      %v2278 = vpop.f32.mrb[0].mxu0
      %v2279 = vpop.f32.mrb[0].mxu0
      %v2280 = vadd.f32 %v2183, %v2279
      %v2281 = vpop.f32.mrb[0].mxu0
      %2282 = vmatprep.mubr.bf16.mxu0 %v1278
      %2283 = vmatmul.mubr.bf16.gmra.mrb[0].mxu0 %v1246
      %v2284 = vpop.f32.mrb[0].mxu0
      %v2285 = vadd.f32 %v2188, %v2284
      %v2286 = vpop.f32.mrb[0].mxu0
      %v2287 = vpop.f32.mrb[0].mxu0
      %v2288 = vadd.f32 %v2191, %v2287
      %v2289 = vpop.f32.mrb[0].mxu0
      %2290 = vmatprep.mubr.bf16.mxu0 %v1325
      %2291 = vmatmul.mubr.bf16.gmra.mrb[0].mxu0 %v1321
      %v2292 = vpop.f32.mrb[0].mxu0
      %v2293 = vadd.f32 %v2196, %v2292
      %v2294 = vpop.f32.mrb[0].mxu0
      %v2295 = vpop.f32.mrb[0].mxu0
      %v2296 = vadd.f32 %v2199, %v2295
      %v2297 = vpop.f32.mrb[0].mxu0
      %2298 = vmatprep.mubr.bf16.mxu0 %v1337
      %2299 = vmatmul.mubr.bf16.gmra.mrb[0].mxu0 %v1333
      %v2300 = vpop.f32.mrb[0].mxu0
      %v2301 = vadd.f32 %v2204, %v2300
      %v2302 = vpop.f32.mrb[0].mxu0
      %v2303 = vpop.f32.mrb[0].mxu0
      %v2304 = vadd.f32 %v2207, %v2303
      %v2305 = vpop.f32.mrb[0].mxu0
      %2306 = vdwg.mxu0
      %2307 = vmatprep.subr.bf16.mxu0 0
      %2308 = vmatpush1.bf16.msra.mxu0 %v1839
      %2309 = vmatprep.subr.bf16.mxu0 0
      %2310 = vmatpush1.bf16.msra.mxu0 %v1840
      %2311 = vmatprep.subr.bf16.mxu0 0
      %2312 = vmatpush1.bf16.msra.mxu0 %v1841
      %2313 = vmatprep.subr.bf16.mxu0 0
      %2314 = vmatpush1.bf16.msra.mxu0 %v1842
      %2315 = vmatprep.subr.bf16.mxu0 0
      %2316 = vmatpush1.bf16.msra.mxu0 %v1843
      %2317 = vmatprep.subr.bf16.mxu0 0
      %2318 = vmatpush1.bf16.msra.mxu0 %v1844
      %2319 = vmatprep.subr.bf16.mxu0 0
      %2320 = vmatpush1.bf16.msra.mxu0 %v1845
      %2321 = vmatprep.subr.bf16.mxu0 0
      %2322 = vmatpush1.bf16.msra.mxu0 %v1846
      %2323 = vmatprep.subr.bf16.mxu0 0
      %2324 = vmatpush1.bf16.msra.mxu0 0
      %2325 = vmatprep.subr.bf16.mxu0 0
      %2326 = vmatpush1.bf16.msra.mxu0 0
      %2327 = vmatprep.subr.bf16.mxu0 0
      %2328 = vmatpush1.bf16.msra.mxu0 0
      %2329 = vmatprep.subr.bf16.mxu0 0
      %2330 = vmatpush1.bf16.msra.mxu0 0
      %2331 = vmatprep.subr.bf16.mxu0 0
      %2332 = vmatpush1.bf16.msra.mxu0 0
      %2333 = vmatprep.subr.bf16.mxu0 0
      %2334 = vmatpush1.bf16.msra.mxu0 0
      %2335 = vmatprep.subr.bf16.mxu0 0
      %2336 = vmatpush1.bf16.msra.mxu0 0
      %2337 = vmatprep.subr.bf16.mxu0 0
      %2338 = vmatpush1.bf16.msra.mxu0 0
      %2339 = vmatprep.mubr.bf16.mxu0 0
      %2340 = vmatmul.mubr.bf16.gmra.mrb[0].mxu0 %v1305
      %v2341 = vpop.f32.mrb[0].mxu0
      %v2342 = vadd.f32 %v2245, %v2341
      %v2343 = vpop.f32.mrb[0].mxu0
      %v2344 = vpop.f32.mrb[0].mxu0
      %v2345 = vadd.f32 %v2248, %v2344
      %v2346 = vpop.f32.mrb[0].mxu0
      %2347 = vmatprep.mubr.bf16.mxu0 0
      %2348 = vmatmul.mubr.bf16.gmra.mrb[0].mxu0 %v1306
      %v2349 = vpop.f32.mrb[0].mxu0
      %v2350 = vadd.f32 %v2253, %v2349
      %v2351 = vpop.f32.mrb[0].mxu0
      %v2352 = vpop.f32.mrb[0].mxu0
      %v2353 = vadd.f32 %v2256, %v2352
      %v2354 = vpop.f32.mrb[0].mxu0
      %2355 = vmatprep.mubr.bf16.mxu0 0
      %2356 = vmatmul.mubr.bf16.gmra.mrb[0].mxu0 %v1307
      %v2357 = vpop.f32.mrb[0].mxu0
      %v2358 = vadd.f32 %v2261, %v2357
      %v2359 = vpop.f32.mrb[0].mxu0
      %v2360 = vpop.f32.mrb[0].mxu0
      %v2361 = vadd.f32 %v2264, %v2360
      %v2362 = vpop.f32.mrb[0].mxu0
      %2363 = vmatprep.mubr.bf16.mxu0 0
      %2364 = vmatmul.mubr.bf16.gmra.mrb[0].mxu0 %v1308
      %v2365 = vpop.f32.mrb[0].mxu0
      %v2366 = vadd.f32 %v2269, %v2365
      %v2367 = vpop.f32.mrb[0].mxu0
      %v2368 = vpop.f32.mrb[0].mxu0
      %v2369 = vadd.f32 %v2272, %v2368
      %v2370 = vpop.f32.mrb[0].mxu0
      %2371 = vmatprep.mubr.bf16.mxu0 0
      %2372 = vmatmul.mubr.bf16.gmra.mrb[0].mxu0 %v1309
      %v2373 = vpop.f32.mrb[0].mxu0
      %v2374 = vadd.f32 %v2277, %v2373
      %v2375 = vpop.f32.mrb[0].mxu0
      %v2376 = vpop.f32.mrb[0].mxu0
      %v2377 = vadd.f32 %v2280, %v2376
      %v2378 = vpop.f32.mrb[0].mxu0
      %2379 = vmatprep.mubr.bf16.mxu0 0
      %2380 = vmatmul.mubr.bf16.gmra.mrb[0].mxu0 %v1310
      %v2381 = vpop.f32.mrb[0].mxu0
      %v2382 = vadd.f32 %v2285, %v2381
      %v2383 = vpop.f32.mrb[0].mxu0
      %v2384 = vpop.f32.mrb[0].mxu0
      %v2385 = vadd.f32 %v2288, %v2384
      %v2386 = vpop.f32.mrb[0].mxu0
      %2387 = vmatprep.mubr.bf16.mxu0 0
      %2388 = vmatmul.mubr.bf16.gmra.mrb[0].mxu0 %v1329
      %v2389 = vpop.f32.mrb[0].mxu0
      %v2390 = vadd.f32 %v2293, %v2389
      %v2391 = vpop.f32.mrb[0].mxu0
      %v2392 = vpop.f32.mrb[0].mxu0
      %v2393 = vadd.f32 %v2296, %v2392
      %v2394 = vpop.f32.mrb[0].mxu0
      %2395 = vmatprep.mubr.bf16.mxu0 0
      %2396 = vmatmul.mubr.bf16.gmra.mrb[0].mxu0 %v1341
      %v2397 = vpop.f32.mrb[0].mxu0
      %v2398 = vadd.f32 %v2301, %v2397
      %v2399 = vpop.f32.mrb[0].mxu0
      %v2400 = vpop.f32.mrb[0].mxu0
      %v2401 = vadd.f32 %v2304, %v2400
      %v2402 = vpop.f32.mrb[0].mxu0
      %2403 = vdwg.mxu0
      %v2404 = vpack.c.bf16 %v2345, %v2342
      %v2405 = vpack.c.bf16 %v2353, %v2350
      %v2406 = vpack.c.bf16 %v2361, %v2358
      %v2407 = vpack.c.bf16 %v2369, %v2366
      %v2408 = vpack.c.bf16 %v2377, %v2374
      %v2409 = vpack.c.bf16 %v2385, %v2382
      %v2410 = vpack.c.bf16 %v2393, %v2390
      %v2411 = vpack.c.bf16 %v2401, %v2398
      %v2420 = vunpack.c.l.b16 %v2404
      %v2421 = vunpack.c.h.b16 %v2404
      %v2422 = vunpack.c.l.b16 %v2405
      %v2423 = vunpack.c.h.b16 %v2405
      %v2424 = vunpack.c.l.b16 %v2406
      %v2425 = vunpack.c.h.b16 %v2406
      %v2426 = vunpack.c.l.b16 %v2407
      %v2427 = vunpack.c.h.b16 %v2407
      %v2428 = vunpack.c.l.b16 %v2408
      %v2429 = vunpack.c.h.b16 %v2408
      %v2430 = vunpack.c.l.b16 %v2409
      %v2431 = vunpack.c.h.b16 %v2409
      %v2432 = vunpack.c.l.b16 %v2410
      %v2433 = vunpack.c.h.b16 %v2410
      %v2434 = vunpack.c.l.b16 %v2411
      %v2435 = vunpack.c.h.b16 %v2411
      %v2436 = vpack.c.b16 %v2420, %v2420
      %v2437 = vpack.c.b16 %v2421, %v2421
      %v2438 = vpack.c.b16 %v2422, %v2422
      %v2439 = vpack.c.b16 %v2423, %v2423
      %v2440 = vpack.c.b16 %v2424, %v2424
      %v2441 = vpack.c.b16 %v2425, %v2425
      %v2442 = vpack.c.b16 %v2426, %v2426
      %v2443 = vpack.c.b16 %v2427, %v2427
      %v2444 = vpack.c.b16 %v2428, %v2428
      %v2445 = vpack.c.b16 %v2429, %v2429
      %v2446 = vpack.c.b16 %v2430, %v2430
      %v2447 = vpack.c.b16 %v2431, %v2431
      %v2448 = vpack.c.b16 %v2432, %v2432
      %v2449 = vpack.c.b16 %v2433, %v2433
      %v2450 = vpack.c.b16 %v2434, %v2434
      %v2451 = vpack.c.b16 %v2435, %v2435
      %2468 = vst [vmem:[%s246] sm:$0xf] %v2436
      %2469 = vst [vmem:[%s246 + $0x4] sm:$0xf] %v2437
      %2470 = vst [vmem:[%s246 + $0x8] sm:$0xf] %v2438
      %2471 = vst [vmem:[%s246 + $0xc] sm:$0xf] %v2439
      %2472 = vst [vmem:[%s246 + $0x10] sm:$0xf] %v2440
      %2473 = vst [vmem:[%s246 + $0x14] sm:$0xf] %v2441
      %2474 = vst [vmem:[%s246 + $0x18] sm:$0xf] %v2442
      %2475 = vst [vmem:[%s246 + $0x1c] sm:$0xf] %v2443
      %2476 = vst [vmem:[%s246 + $0x20] sm:$0xf] %v2444
      %2477 = vst [vmem:[%s246 + $0x24] sm:$0xf] %v2445
      %2478 = vst [vmem:[%s246 + $0x28] sm:$0xf] %v2446
      %2479 = vst [vmem:[%s246 + $0x2c] sm:$0xf] %v2447
      %2480 = vst [vmem:[%s246 + $0x30] sm:$0xf] %v2448
      %2481 = vst [vmem:[%s246 + $0x34] sm:$0xf] %v2449
      %2482 = vst [vmem:[%s246 + $0x38] sm:$0xf] %v2450
      %2483 = vst [vmem:[%s246 + $0x3c] sm:$0xf] %v2451
      %v2484 = vadd.f32 %v2342, %v2345
      %v2485 = vadd.f32 %v2484, %v2350
      %v2486 = vadd.f32 %v2485, %v2353
      %v2487 = vadd.f32 %v2486, %v2358
      %v2488 = vadd.f32 %v2487, %v2361
      %v2489 = vadd.f32 %v2488, %v2366
      %v2490 = vadd.f32 %v2489, %v2369
      %v2491 = vadd.f32 %v2490, %v2374
      %v2492 = vadd.f32 %v2491, %v2377
      %v2493 = vadd.f32 %v2492, %v2382
      %v2494 = vadd.f32 %v2493, %v2385
      %v2495 = vadd.f32 %v2494, %v2390
      %v2496 = vadd.f32 %v2495, %v2393
      %v2497 = vadd.f32 %v2496, %v2398
      %v2498 = vadd.f32 %v2497, %v2401
      %v2499 = vrot.slane %v2498, 4
      %v2500 = vadd.f32 %v2498, %v2499
      %v2501 = vrot.slane %v2500, 2
      %v2502 = vadd.f32 %v2500, %v2501
      %v2503 = vrot.slane %v2502, 1
      %v2504 = vadd.f32 %v2502, %v2503
      %v2505 = vmul.f32 %v2504, 0.0078125
      %v2506 = vsub.f32 %v2342, %v2505
      %v2507 = vsub.f32 %v2345, %v2505
      %v2508 = vsub.f32 %v2350, %v2505
      %v2509 = vsub.f32 %v2353, %v2505
      %v2510 = vsub.f32 %v2358, %v2505
      %v2511 = vsub.f32 %v2361, %v2505
      %v2512 = vsub.f32 %v2366, %v2505
      %v2513 = vsub.f32 %v2369, %v2505
      %v2514 = vsub.f32 %v2374, %v2505
      %v2515 = vsub.f32 %v2377, %v2505
      %v2516 = vsub.f32 %v2382, %v2505
      %v2517 = vsub.f32 %v2385, %v2505
      %v2518 = vsub.f32 %v2390, %v2505
      %v2519 = vsub.f32 %v2393, %v2505
      %v2520 = vsub.f32 %v2398, %v2505
      %v2521 = vsub.f32 %v2401, %v2505
      %v2522 = vmul.f32 %v2506, %v2506
      %v2523 = vmul.f32 %v2507, %v2507
      %v2524 = vmul.f32 %v2508, %v2508
      %v2525 = vmul.f32 %v2509, %v2509
      %v2526 = vmul.f32 %v2510, %v2510
      %v2527 = vmul.f32 %v2511, %v2511
      %v2528 = vmul.f32 %v2512, %v2512
      %v2529 = vmul.f32 %v2513, %v2513
      %v2530 = vmul.f32 %v2514, %v2514
      %v2531 = vmul.f32 %v2515, %v2515
      %v2532 = vmul.f32 %v2516, %v2516
      %v2533 = vmul.f32 %v2517, %v2517
      %v2534 = vmul.f32 %v2518, %v2518
      %v2535 = vmul.f32 %v2519, %v2519
      %v2536 = vmul.f32 %v2520, %v2520
      %v2537 = vmul.f32 %v2521, %v2521
      %v2538 = vadd.f32 %v2522, %v2523
      %v2539 = vadd.f32 %v2538, %v2524
      %v2540 = vadd.f32 %v2539, %v2525
      %v2541 = vadd.f32 %v2540, %v2526
      %v2542 = vadd.f32 %v2541, %v2527
      %v2543 = vadd.f32 %v2542, %v2528
      %v2544 = vadd.f32 %v2543, %v2529
      %v2545 = vadd.f32 %v2544, %v2530
      %v2546 = vadd.f32 %v2545, %v2531
      %v2547 = vadd.f32 %v2546, %v2532
      %v2548 = vadd.f32 %v2547, %v2533
      %v2549 = vadd.f32 %v2548, %v2534
      %v2550 = vadd.f32 %v2549, %v2535
      %v2551 = vadd.f32 %v2550, %v2536
      %v2552 = vadd.f32 %v2551, %v2537
      %v2553 = vrot.slane %v2552, 4
      %v2554 = vadd.f32 %v2552, %v2553
      %v2555 = vrot.slane %v2554, 2
      %v2556 = vadd.f32 %v2554, %v2555
      %v2557 = vrot.slane %v2556, 1
      %v2558 = vadd.f32 %v2556, %v2557
      %2559 = vst [vmem:[%s255] sm:$0xff] %v2504
      %2560 = vst [vmem:[%s263] sm:$0xff] %v2558
      %s2561 = smul.u32 8, %s21
      %p2562 = scmp.lt.s32.totalorder %s20, 1
      %s2563 = scalar_select %p2562, %s20, 1
      %p2564 = scmp.lt.s32.totalorder %s2561, 15
      %s2565 = scalar_select %p2564, %s2561, 15
      %s2566 = smul.addr %s2565, 2
      %s2567 = smul.addr %s2563, 32
      %s2568 = sadd.s32 %s2566, %s2567
      %s2569 = smul.addr %s2568, 4
      %s2570 = scalar_lea.vmem %s2, %s2569
      %p2571 = scmp.lt.s32.totalorder %s20, 1
      %s2572 = scalar_select %p2571, %s20, 1
      %p2573 = scmp.lt.s32.totalorder %s21, 1
      %s2574 = scalar_select %p2573, %s21, 1
      %s2575 = smul.addr %s2572, 2
      %s2576 = sadd.s32 %s2574, %s2575
      %s2577 = smul.addr %s2576, 8
      %s2578 = scalar_lea.vmem %s3, %s2577
      %p2579 = scmp.lt.s32.totalorder %s20, 1
      %s2580 = scalar_select %p2579, %s20, 1
      %p2581 = scmp.lt.s32.totalorder %s21, 1
      %s2582 = scalar_select %p2581, %s21, 1
      %s2583 = smul.addr %s2580, 2
      %s2584 = sadd.s32 %s2582, %s2583
      %s2585 = smul.addr %s2584, 8
      %s2586 = scalar_lea.vmem %s4, %s2585
      // Predicated region
      $region37: #{expanding_block_forward.3} parent=27 // pred_check
        %p2587 = pneg %p95
      $region38: #{expanding_block_forward.3} parent=27 // pred_check_branch
        %2589 = sbr.rel (%p2587) target = $region40
      $region39: #{expanding_block_forward.3} parent=27 // pred_region
        %s2590 = smul.u32 8, %s21
      $region40: #{expanding_block_forward.3} parent=27 // pred_fallthru
        _
      // Predicated region
      $region41: #{expanding_block_forward.3} parent=27 // pred_check
        %p2591 = pneg %p123
      $region42: #{expanding_block_forward.3} parent=27 // pred_check_branch
        %2593 = sbr.rel (%p2591) target = $region44
      $region43: #{expanding_block_forward.3} parent=27 // pred_region
        _
      $region44: #{expanding_block_forward.3} parent=27 // pred_fallthru
        _
      // Predicated region
      $region45: #{expanding_block_forward.3} parent=27 // pred_check
        %p2594 = pneg %p151
      $region46: #{expanding_block_forward.3} parent=27 // pred_check_branch
        %2596 = sbr.rel (%p2594) target = $region48
      $region47: #{expanding_block_forward.3} parent=27 // pred_region
        _
      $region48: #{expanding_block_forward.3} parent=27 // pred_fallthru
        _
    $region28: #{expanding_block_forward.3} parent=5 // pred_fallthru
      _
    %p2597 = scmp.le.s32.totalorder 2, %s11
    // Predicated region
    $region49: #{expanding_block_forward.3} parent=5 // pred_check
      %p2598 = pneg %p2597
    $region50: #{expanding_block_forward.3} parent=5 // pred_check_branch
      %2600 = sbr.rel (%p2598) target = $region52
    $region51: #{expanding_block_forward.3} parent=5 // pred_region
      %s2601 = ssub.s32 %s11, 2
      // Predicated region
      $region53: #{expanding_block_forward.3} parent=51 // pred_check
        %p2602 = pneg %p101
      $region54: #{expanding_block_forward.3} parent=51 // pred_check_branch
        %2604 = sbr.rel (%p2602) target = $region56
      $region55: #{expanding_block_forward.3} parent=51 // pred_region
        %s2605 = smul.u32 8, %s23
        %p2606 = scmp.lt.s32.totalorder %s22, 1
        %s2607 = scalar_select %p2606, %s22, 1
        %p2608 = scmp.lt.s32.totalorder %s2605, 15
        %s2609 = scalar_select %p2608, %s2605, 15
        %s2610 = smul.addr %s2609, 2
        %s2611 = smul.addr %s2607, 32
        %s2612 = sadd.s32 %s2610, %s2611
        %s2613 = smul.addr %s2612, 4
        %s2614 = scalar_lea.vmem %s2, %s2613
      $region56: #{expanding_block_forward.3} parent=51 // pred_fallthru
        _
      // Predicated region
      $region57: #{expanding_block_forward.3} parent=51 // pred_check
        %p2615 = pneg %p129
      $region58: #{expanding_block_forward.3} parent=51 // pred_check_branch
        %2617 = sbr.rel (%p2615) target = $region60
      $region59: #{expanding_block_forward.3} parent=51 // pred_region
        %p2618 = scmp.lt.s32.totalorder %s22, 1
        %s2619 = scalar_select %p2618, %s22, 1
        %p2620 = scmp.lt.s32.totalorder %s23, 1
        %s2621 = scalar_select %p2620, %s23, 1
        %s2622 = smul.addr %s2619, 2
        %s2623 = sadd.s32 %s2621, %s2622
        %s2624 = smul.addr %s2623, 8
        %s2625 = scalar_lea.vmem %s3, %s2624
      $region60: #{expanding_block_forward.3} parent=51 // pred_fallthru
        _
      // Predicated region
      $region61: #{expanding_block_forward.3} parent=51 // pred_check
        %p2626 = pneg %p157
      $region62: #{expanding_block_forward.3} parent=51 // pred_check_branch
        %2628 = sbr.rel (%p2626) target = $region64
      $region63: #{expanding_block_forward.3} parent=51 // pred_region
        %p2629 = scmp.lt.s32.totalorder %s22, 1
        %s2630 = scalar_select %p2629, %s22, 1
        %p2631 = scmp.lt.s32.totalorder %s23, 1
        %s2632 = scalar_select %p2631, %s23, 1
        %s2633 = smul.addr %s2630, 2
        %s2634 = sadd.s32 %s2632, %s2633
        %s2635 = smul.addr %s2634, 8
        %s2636 = scalar_lea.vmem %s4, %s2635
      $region64: #{expanding_block_forward.3} parent=51 // pred_fallthru
        _
    $region52: #{expanding_block_forward.3} parent=5 // pred_fallthru
      _
  $region6: #{expanding_block_forward.3} parent=0 // loop_footer
    %s15 = sadd.s32 1, %s11
  $region7: #{expanding_block_forward.3} parent=0 // loop_footer_branch
    %10 = sbr.rel target = $region3
  $region8: #{expanding_block_forward.3} parent=0 // loop_exit
    _

// kernel: expanding_block_forward.4
$region0: #{expanding_block_forward.4}
  #allocation0 [shape = 'u32[]', space=smem, size = 0x4, offset = 0x4, fixed_abs, tag = 'smem constant byte address 0x4 - core index']
  #allocation1 [shape = 'u32[144,128]{1,0:T(1,128)}', space=vmem, size = 0x12000, scoped, tag = 'internal scratch']
  #allocation2 [shape = 'bf16[10,18,128]{2,1,0:T(8,128)(2,1)}', space=vmem, size = 0xf000, scoped, tag = 'scratch operand']
  %s0 = inlined_call_operand.vmem [shape: bf16[2,16,16,128], index: 0, kind: input, shape index: {}]
  %s1 = inlined_call_operand.vmem [shape: bf16[1152,128], index: 1, kind: input, shape index: {}]
  %s2 = inlined_call_operand.vmem [shape: f32[1,128], index: 2, kind: input, shape index: {}]
  %s3 = inlined_call_operand.vmem [shape: f32[1,128], index: 3, kind: input, shape index: {}]
  %s4 = inlined_call_operand.vmem [shape: f32[2,16,16,128], index: 4, kind: output, shape index: {0}]
  %s5 = inlined_call_operand.vmem [shape: f32[2,2,8,128], index: 5, kind: output, shape index: {1}]
  %s6 = inlined_call_operand.vmem [shape: f32[2,2,8,128], index: 6, kind: output, shape index: {2}]
  %7 = xla_tuple %s4, %s5, %s6
  %s8 = sld [smem:[#allocation0]]
  $region73: #{expanding_block_forward.4} parent=0
    _
  %s10 = ssub.s32 1, %s8
  %s11 = scalar_select 0, %s10, %s8
  loop: start=0, step=1, limit=6
  $region2: #{expanding_block_forward.4} parent=0 // loop_pre_header
    _
  $region3: #{expanding_block_forward.4} parent=0 // loop_header
    %s13 = sphi 0, %s17
    %p14 = scmp.ge.s32.totalorder %s13, 6
    %s20 = sphi 0, %s32
    %s21 = sphi 0, %s28
    %s22 = sphi 0, %s20
    %s23 = sphi 0, %s21
    %s24 = sphi 0, %s22
    %s25 = sphi 0, %s23
    %s35 = sphi 0, %s37
    %s38 = sphi 0, %s35
    %s39 = sphi 0, %s38
    %s55 = sphi 0, %s39
    %s59 = sphi 0, %s59
    %s61 = sphi 0, %s59
    %s62 = sphi 0, %s61
    %s76 = sphi 0, %s62
    %s80 = sphi 0, %s80
    %s82 = sphi 0, %s80
    %s83 = sphi 0, %s82
    %s97 = sphi 0, %s83
    %s101 = sphi 0, %s101
    %s103 = sphi 0, %s101
    %s104 = sphi 0, %s103
    %s118 = sphi 0, %s104
    %s126 = sphi 0, %s128
    %s129 = sphi 0, %s126
    %s130 = sphi 0, %s129
    %s146 = sphi 0, %s130
    %s154 = sphi 0, %s156
    %s157 = sphi 0, %s154
    %s158 = sphi 0, %s157
    %s174 = sphi 0, %s158
    %s182 = sphi 0, %s184
    %s185 = sphi 0, %s182
    %s186 = sphi 0, %s185
    %s202 = sphi 0, %s186
  $region4: #{expanding_block_forward.4} parent=0 // loop_header_branch
    %16 = sbr.rel (%p14) target = $region8
  $region5: #{expanding_block_forward.4} parent=0 // loop_body
    %s18 = ssub.s32 %s13, 1
    %s19 = ssub.s32 %s13, 2
    %s26 = sadd.s32 1, %s21
    %p27 = scmp.ge.s32.totalorder %s26, 2
    %s28 = scalar_select %p27, 0, %s26
    %s29 = sadd.s32 1, %s20
    %s30 = scalar_select %p27, %s29, %s20
    %p31 = scmp.ge.s32.totalorder %s30, 2
    %s32 = scalar_select %p31, 0, %s30
    %s33 = ssub.s32 %s20, %s32
    %p34 = scmp.eq.s32.totalorder %s33, 0
    %s36 = sadd.s32 %s35, 1
    %s37 = scalar_select %p34, %s35, %s36
    %p40 = pneg %p34
    %p41 = scmp.eq.s32.totalorder %s13, 3
    %p42 = por %p40, %p41
    %p43 = scmp.ne.s32.totalorder %s35, %s38
    %p44 = scmp.eq.s32.totalorder %s13, 0
    %p45 = por %p43, %p44
    %p46 = scmp.ne.s32.totalorder %s35, %s38
    %p47 = scmp.eq.s32.totalorder %s18, 3
    %p48 = por %p46, %p47
    %p49 = scmp.ne.s32.totalorder %s38, %s39
    %p50 = scmp.eq.s32.totalorder %s18, 0
    %p51 = por %p49, %p50
    %p52 = scmp.ne.s32.totalorder %s38, %s39
    %p53 = scmp.eq.s32.totalorder %s19, 3
    %p54 = por %p52, %p53
    %p56 = scmp.ne.s32.totalorder %s39, %s55
    %p57 = scmp.eq.s32.totalorder %s19, 0
    %p58 = por %p56, %p57
    %s60 = sadd.s32 %s59, 1
    %p63 = scmp.eq.s32.totalorder %s13, 3
    %p64 = scmp.ne.s32.totalorder %s59, %s61
    %p65 = scmp.eq.s32.totalorder %s13, 0
    %p66 = por %p64, %p65
    %p67 = scmp.ne.s32.totalorder %s59, %s61
    %p68 = scmp.eq.s32.totalorder %s18, 3
    %p69 = por %p67, %p68
    %p70 = scmp.ne.s32.totalorder %s61, %s62
    %p71 = scmp.eq.s32.totalorder %s18, 0
    %p72 = por %p70, %p71
    %p73 = scmp.ne.s32.totalorder %s61, %s62
    %p74 = scmp.eq.s32.totalorder %s19, 3
    %p75 = por %p73, %p74
    %p77 = scmp.ne.s32.totalorder %s62, %s76
    %p78 = scmp.eq.s32.totalorder %s19, 0
    %p79 = por %p77, %p78
    %s81 = sadd.s32 %s80, 1
    %p84 = scmp.eq.s32.totalorder %s13, 3
    %p85 = scmp.ne.s32.totalorder %s80, %s82
    %p86 = scmp.eq.s32.totalorder %s13, 0
    %p87 = por %p85, %p86
    %p88 = scmp.ne.s32.totalorder %s80, %s82
    %p89 = scmp.eq.s32.totalorder %s18, 3
    %p90 = por %p88, %p89
    %p91 = scmp.ne.s32.totalorder %s82, %s83
    %p92 = scmp.eq.s32.totalorder %s18, 0
    %p93 = por %p91, %p92
    %p94 = scmp.ne.s32.totalorder %s82, %s83
    %p95 = scmp.eq.s32.totalorder %s19, 3
    %p96 = por %p94, %p95
    %p98 = scmp.ne.s32.totalorder %s83, %s97
    %p99 = scmp.eq.s32.totalorder %s19, 0
    %p100 = por %p98, %p99
    %s102 = sadd.s32 %s101, 1
    %p105 = scmp.eq.s32.totalorder %s13, 3
    %p106 = scmp.ne.s32.totalorder %s101, %s103
    %p107 = scmp.eq.s32.totalorder %s13, 0
    %p108 = por %p106, %p107
    %p109 = scmp.ne.s32.totalorder %s101, %s103
    %p110 = scmp.eq.s32.totalorder %s18, 3
    %p111 = por %p109, %p110
    %p112 = scmp.ne.s32.totalorder %s103, %s104
    %p113 = scmp.eq.s32.totalorder %s18, 0
    %p114 = por %p112, %p113
    %p115 = scmp.ne.s32.totalorder %s103, %s104
    %p116 = scmp.eq.s32.totalorder %s19, 3
    %p117 = por %p115, %p116
    %p119 = scmp.ne.s32.totalorder %s104, %s118
    %p120 = scmp.eq.s32.totalorder %s19, 0
    %p121 = por %p119, %p120
    %s122 = ssub.s32 %s20, %s32
    %s123 = ssub.s32 %s21, %s28
    %s124 = sor.u32 %s122, %s123
    %p125 = scmp.eq.s32.totalorder %s124, 0
    %s127 = sadd.s32 %s126, 1
    %s128 = scalar_select %p125, %s126, %s127
    %p131 = pneg %p125
    %p132 = scmp.eq.s32.totalorder %s13, 3
    %p133 = por %p131, %p132
    %p134 = scmp.ne.s32.totalorder %s126, %s129
    %p135 = scmp.eq.s32.totalorder %s13, 0
    %p136 = por %p134, %p135
    %p137 = scmp.ne.s32.totalorder %s126, %s129
    %p138 = scmp.eq.s32.totalorder %s18, 3
    %p139 = por %p137, %p138
    %p140 = scmp.ne.s32.totalorder %s129, %s130
    %p141 = scmp.eq.s32.totalorder %s18, 0
    %p142 = por %p140, %p141
    %p143 = scmp.ne.s32.totalorder %s129, %s130
    %p144 = scmp.eq.s32.totalorder %s19, 3
    %p145 = por %p143, %p144
    %p147 = scmp.ne.s32.totalorder %s130, %s146
    %p148 = scmp.eq.s32.totalorder %s19, 0
    %p149 = por %p147, %p148
    %s150 = ssub.s32 %s20, %s32
    %s151 = ssub.s32 %s21, %s28
    %s152 = sor.u32 %s150, %s151
    %p153 = scmp.eq.s32.totalorder %s152, 0
    %s155 = sadd.s32 %s154, 1
    %s156 = scalar_select %p153, %s154, %s155
    %p159 = pneg %p153
    %p160 = scmp.eq.s32.totalorder %s13, 3
    %p161 = por %p159, %p160
    %p162 = scmp.ne.s32.totalorder %s154, %s157
    %p163 = scmp.eq.s32.totalorder %s13, 0
    %p164 = por %p162, %p163
    %p165 = scmp.ne.s32.totalorder %s154, %s157
    %p166 = scmp.eq.s32.totalorder %s18, 3
    %p167 = por %p165, %p166
    %p168 = scmp.ne.s32.totalorder %s157, %s158
    %p169 = scmp.eq.s32.totalorder %s18, 0
    %p170 = por %p168, %p169
    %p171 = scmp.ne.s32.totalorder %s157, %s158
    %p172 = scmp.eq.s32.totalorder %s19, 3
    %p173 = por %p171, %p172
    %p175 = scmp.ne.s32.totalorder %s158, %s174
    %p176 = scmp.eq.s32.totalorder %s19, 0
    %p177 = por %p175, %p176
    %s178 = ssub.s32 %s20, %s32
    %s179 = ssub.s32 %s21, %s28
    %s180 = sor.u32 %s178, %s179
    %p181 = scmp.eq.s32.totalorder %s180, 0
    %s183 = sadd.s32 %s182, 1
    %s184 = scalar_select %p181, %s182, %s183
    %p187 = pneg %p181
    %p188 = scmp.eq.s32.totalorder %s13, 3
    %p189 = por %p187, %p188
    %p190 = scmp.ne.s32.totalorder %s182, %s185
    %p191 = scmp.eq.s32.totalorder %s13, 0
    %p192 = por %p190, %p191
    %p193 = scmp.ne.s32.totalorder %s182, %s185
    %p194 = scmp.eq.s32.totalorder %s18, 3
    %p195 = por %p193, %p194
    %p196 = scmp.ne.s32.totalorder %s185, %s186
    %p197 = scmp.eq.s32.totalorder %s18, 0
    %p198 = por %p196, %p197
    %p199 = scmp.ne.s32.totalorder %s185, %s186
    %p200 = scmp.eq.s32.totalorder %s19, 3
    %p201 = por %p199, %p200
    %p203 = scmp.ne.s32.totalorder %s186, %s202
    %p204 = scmp.eq.s32.totalorder %s19, 0
    %p205 = por %p203, %p204
    %p206 = scmp.le.s32.totalorder 1, %s13
    %p207 = scmp.lt.s32.totalorder %s13, 5
    %p208 = pnand %p206, %p207
    %p209 = pneg %p208
    // Predicated region
    $region9: #{expanding_block_forward.4} parent=5 // pred_check
      _
    $region10: #{expanding_block_forward.4} parent=5 // pred_check_branch
      %211 = sbr.rel (%p208) target = $region12
    $region11: #{expanding_block_forward.4} parent=5 // pred_region
      %s212 = ssub.s32 %s13, 1
      // Predicated region
      $region13: #{expanding_block_forward.4} parent=11 // pred_check
        %p213 = pneg %p72
      $region14: #{expanding_block_forward.4} parent=11 // pred_check_branch
        %215 = sbr.rel (%p213) target = $region16
      $region15: #{expanding_block_forward.4} parent=11 // pred_region
        _
      $region16: #{expanding_block_forward.4} parent=11 // pred_fallthru
        _
      // Predicated region
      $region17: #{expanding_block_forward.4} parent=11 // pred_check
        %p216 = pneg %p93
      $region18: #{expanding_block_forward.4} parent=11 // pred_check_branch
        %218 = sbr.rel (%p216) target = $region20
      $region19: #{expanding_block_forward.4} parent=11 // pred_region
        _
      $region20: #{expanding_block_forward.4} parent=11 // pred_fallthru
        _
      // Predicated region
      $region21: #{expanding_block_forward.4} parent=11 // pred_check
        %p219 = pneg %p114
      $region22: #{expanding_block_forward.4} parent=11 // pred_check_branch
        %221 = sbr.rel (%p219) target = $region24
      $region23: #{expanding_block_forward.4} parent=11 // pred_region
        _
      $region24: #{expanding_block_forward.4} parent=11 // pred_fallthru
        _
    $region12: #{expanding_block_forward.4} parent=5 // pred_fallthru
      _
    %p222 = scmp.lt.s32.totalorder %s13, 4
    // Predicated region
    $region25: #{expanding_block_forward.4} parent=5 // pred_check
      %p223 = pneg %p222
    $region26: #{expanding_block_forward.4} parent=5 // pred_check_branch
      %225 = sbr.rel (%p223) target = $region28
    $region27: #{expanding_block_forward.4} parent=5 // pred_region
      // Predicated region
      $region29: #{expanding_block_forward.4} parent=27 // pred_check
        %p226 = pneg %p45
      $region30: #{expanding_block_forward.4} parent=27 // pred_check_branch
        %228 = sbr.rel (%p226) target = $region32
      $region31: #{expanding_block_forward.4} parent=27 // pred_region
        %p229 = scmp.lt.s32.totalorder %s20, 1
        %s230 = scalar_select %p229, %s20, 1
        %s231 = smul.addr %s230, 32
        %s232 = smul.addr %s231, 4
        %s233 = scalar_lea.vmem %s0, %s232
      $region32: #{expanding_block_forward.4} parent=27 // pred_fallthru
        _
    $region28: #{expanding_block_forward.4} parent=5 // pred_fallthru
      _
    %p234 = scmp.le.s32.totalorder 1, %s13
    %p235 = scmp.lt.s32.totalorder %s13, 5
    %p236 = pnand %p234, %p235
    %p237 = pneg %p236
    // Predicated region
    $region33: #{expanding_block_forward.4} parent=5 // pred_check
      _
    $region34: #{expanding_block_forward.4} parent=5 // pred_check_branch
      %239 = sbr.rel (%p236) target = $region36
    $region35: #{expanding_block_forward.4} parent=5 // pred_region
      %s240 = ssub.s32 %s13, 1
      %p241 = scmp.lt.s32.totalorder %s22, 1
      %s242 = scalar_select %p241, %s22, 1
      %s243 = smul.addr %s242, 32
      %s244 = smul.addr %s243, 4
      %s245 = scalar_lea.vmem %s0, %s244
      %p246 = pneg %p51
      %p247 = pneg %p48
      %p248 = pneg %p72
      %p249 = pneg %p69
      %p250 = pneg %p93
      %p251 = pneg %p90
      %p252 = pneg %p114
      %p253 = pneg %p111
      %p254 = pneg %p142
      %p255 = pneg %p139
      %s256 = smul.u32 8, %s23
      %p257 = scmp.lt.s32.totalorder %s22, 1
      %s258 = scalar_select %p257, %s22, 1
      %p259 = scmp.lt.s32.totalorder %s256, 15
      %s260 = scalar_select %p259, %s256, 15
      %s261 = smul.addr %s260, 2
      %s262 = smul.addr %s258, 32
      %s263 = sadd.s32 %s261, %s262
      %s264 = smul.addr %s263, 8
      %s265 = scalar_lea.vmem %s4, %s264
      %p266 = pneg %p170
      %p267 = pneg %p167
      %p268 = scmp.lt.s32.totalorder %s22, 1
      %s269 = scalar_select %p268, %s22, 1
      %p270 = scmp.lt.s32.totalorder %s23, 1
      %s271 = scalar_select %p270, %s23, 1
      %s272 = smul.addr %s269, 2
      %s273 = sadd.s32 %s271, %s272
      %s274 = smul.addr %s273, 8
      %s275 = scalar_lea.vmem %s5, %s274
      %p276 = pneg %p198
      %p277 = pneg %p195
      %p278 = scmp.lt.s32.totalorder %s22, 1
      %s279 = scalar_select %p278, %s22, 1
      %p280 = scmp.lt.s32.totalorder %s23, 1
      %s281 = scalar_select %p280, %s23, 1
      %s282 = smul.addr %s279, 2
      %s283 = sadd.s32 %s281, %s282
      %s284 = smul.addr %s283, 8
      %s285 = scalar_lea.vmem %s6, %s284
      %p286 = scmp.lt.s32.totalorder %s22, 1
      %s287 = scalar_select %p286, %s22, 1
      %s288 = smul.addr %s287, 32
      %s289 = smul.addr %s288, 4
      %s290 = scalar_lea.vmem %s0, %s289
      %s291 = smul.u32 8, %s23
      %p292 = scmp.lt.s32.totalorder %s22, 1
      %s293 = scalar_select %p292, %s22, 1
      %p294 = scmp.lt.s32.totalorder %s291, 15
      %s295 = scalar_select %p294, %s291, 15
      %s296 = smul.addr %s295, 2
      %s297 = smul.addr %s293, 32
      %s298 = sadd.s32 %s296, %s297
      %s299 = smul.addr %s298, 8
      %s300 = scalar_lea.vmem %s4, %s299
      %s301 = smul.u32 8, %s23
      %p302 = scmp.lt.s32.totalorder %s22, 1
      %s303 = scalar_select %p302, %s22, 1
      %p304 = scmp.lt.s32.totalorder %s23, 1
      %s305 = scalar_select %p304, %s23, 1
      %s306 = smul.addr %s303, 2
      %s307 = sadd.s32 %s305, %s306
      %s308 = smul.addr %s307, 8
      %s309 = scalar_lea.vmem %s5, %s308
      %p310 = scmp.lt.s32.totalorder %s22, 1
      %s311 = scalar_select %p310, %s22, 1
      %p312 = scmp.lt.s32.totalorder %s23, 1
      %s313 = scalar_select %p312, %s23, 1
      %s314 = smul.addr %s311, 2
      %s315 = sadd.s32 %s313, %s314
      %s316 = smul.addr %s315, 8
      %s317 = scalar_lea.vmem %s6, %s316
      %s319 = smul.u32 %s23, 8
      %320 = vst [vmem:[#allocation2] sm:$0xf] 0
      %321 = vst [vmem:[#allocation2 + $0x4] sm:$0xf] 0
      %322 = vst [vmem:[#allocation2 + $0x8] sm:$0x1] 0
      %323 = vst [vmem:[#allocation2 + $0xc] sm:$0xf] 0
      %324 = vst [vmem:[#allocation2 + $0x10] sm:$0xf] 0
      %325 = vst [vmem:[#allocation2 + $0x14] sm:$0x1] 0
      %326 = vst [vmem:[#allocation2 + $0x18] sm:$0xf] 0
      %327 = vst [vmem:[#allocation2 + $0x1c] sm:$0xf] 0
      %328 = vst [vmem:[#allocation2 + $0x20] sm:$0x1] 0
      %329 = vst [vmem:[#allocation2 + $0x24] sm:$0xf] 0
      %330 = vst [vmem:[#allocation2 + $0x28] sm:$0xf] 0
      %331 = vst [vmem:[#allocation2 + $0x2c] sm:$0x1] 0
      %332 = vst [vmem:[#allocation2 + $0x30] sm:$0xf] 0
      %333 = vst [vmem:[#allocation2 + $0x34] sm:$0xf] 0
      %334 = vst [vmem:[#allocation2 + $0x38] sm:$0x1] 0
      %335 = vst [vmem:[#allocation2 + $0x3c] sm:$0xf] 0
      %336 = vst [vmem:[#allocation2 + $0x40] sm:$0xf] 0
      %337 = vst [vmem:[#allocation2 + $0x44] sm:$0x1] 0
      %338 = vst [vmem:[#allocation2 + $0x48] sm:$0xf] 0
      %339 = vst [vmem:[#allocation2 + $0x4c] sm:$0xf] 0
      %340 = vst [vmem:[#allocation2 + $0x50] sm:$0x1] 0
      %341 = vst [vmem:[#allocation2 + $0x54] sm:$0xf] 0
      %342 = vst [vmem:[#allocation2 + $0x58] sm:$0xf] 0
      %343 = vst [vmem:[#allocation2 + $0x5c] sm:$0x1] 0
      %344 = vst [vmem:[#allocation2 + $0x60] sm:$0xf] 0
      %345 = vst [vmem:[#allocation2 + $0x64] sm:$0xf] 0
      %346 = vst [vmem:[#allocation2 + $0x68] sm:$0x1] 0
      %347 = vst [vmem:[#allocation2 + $0x6c] sm:$0xf] 0
      %348 = vst [vmem:[#allocation2 + $0x70] sm:$0xf] 0
      %349 = vst [vmem:[#allocation2 + $0x74] sm:$0x1] 0
      %p350 = scmp.eq.s32.totalorder %s23, 0
      // Predicated region
      $region37: #{expanding_block_forward.4} parent=35 // pred_check
        %p351 = pneg %p350
      $region38: #{expanding_block_forward.4} parent=35 // pred_check_branch
        %353 = sbr.rel (%p351) target = $region40
      $region39: #{expanding_block_forward.4} parent=35 // pred_region
        %v354 = vld [vmem:[%s290] sm:$0xf]
        %v355 = vld [vmem:[%s290 + $0x4] sm:$0xf]
        %v356 = vld [vmem:[%s290 + $0x8] sm:$0xf]
        %v357 = vld [vmem:[%s290 + $0xc] sm:$0xf]
        %v358 = vld [vmem:[%s290 + $0x10] sm:$0xf]
        %v359 = vld [vmem:[%s290 + $0x14] sm:$0xf]
        %v360 = vld [vmem:[%s290 + $0x18] sm:$0xf]
        %v361 = vld [vmem:[%s290 + $0x1c] sm:$0xf]
        %v362 = vld [vmem:[%s290 + $0x20] sm:$0xf]
        %v363 = vld [vmem:[%s290 + $0x24] sm:$0xf]
        %v364 = vld [vmem:[%s290 + $0x28] sm:$0xf]
        %v365 = vld [vmem:[%s290 + $0x2c] sm:$0xf]
        %v366 = vld [vmem:[%s290 + $0x30] sm:$0xf]
        %v367 = vld [vmem:[%s290 + $0x34] sm:$0xf]
        %v368 = vld [vmem:[%s290 + $0x38] sm:$0xf]
        %v369 = vld [vmem:[%s290 + $0x3c] sm:$0xf]
        %v370 = vld [vmem:[%s290 + $0x40] sm:$0xf]
        %v371 = vld [vmem:[%s290 + $0x44] sm:$0xf]
        %v372 = vunpack.c.l.bf16 %v354
        %v373 = vunpack.c.l.bf16 %v355
        %v374 = vunpack.c.l.bf16 %v356
        %v375 = vunpack.c.l.bf16 %v357
        %v376 = vunpack.c.l.bf16 %v358
        %v377 = vunpack.c.l.bf16 %v359
        %v378 = vunpack.c.l.bf16 %v360
        %v379 = vunpack.c.l.bf16 %v361
        %v380 = vunpack.c.l.bf16 %v362
        %v381 = vunpack.c.l.bf16 %v363
        %v382 = vunpack.c.l.bf16 %v364
        %v383 = vunpack.c.l.bf16 %v365
        %v384 = vunpack.c.l.bf16 %v366
        %v385 = vunpack.c.l.bf16 %v367
        %v386 = vunpack.c.l.bf16 %v368
        %v387 = vunpack.c.l.bf16 %v369
        %v388 = vunpack.c.l.bf16 %v370
        %v389 = vunpack.c.l.bf16 %v371
        %v390 = vld [vmem:[%s2] sm:$0x1]
        %v391 = vld [vmem:[%s3] sm:$0x1]
        %v393 = vlaneseq
        %v394 = vshrl.u32 %v393, 7
        %v395 = vsub.s32 0, %v394
        %v396 = vrot.slane %v390, %v395
        %v398 = vmul.f32 %v372, %v396
        %v399 = vmul.f32 %v373, %v396
        %v400 = vmul.f32 %v374, %v396
        %v401 = vmul.f32 %v375, %v396
        %v402 = vmul.f32 %v376, %v396
        %v403 = vmul.f32 %v377, %v396
        %v404 = vmul.f32 %v378, %v396
        %v405 = vmul.f32 %v379, %v396
        %v406 = vmul.f32 %v380, %v396
        %v407 = vmul.f32 %v381, %v396
        %v408 = vmul.f32 %v382, %v396
        %v409 = vmul.f32 %v383, %v396
        %v410 = vmul.f32 %v384, %v396
        %v411 = vmul.f32 %v385, %v396
        %v412 = vmul.f32 %v386, %v396
        %v413 = vmul.f32 %v387, %v396
        %v414 = vmul.f32 %v388, %v396
        %v415 = vmul.f32 %v389, %v396
        %v417 = vlaneseq
        %v418 = vshrl.u32 %v417, 7
        %v419 = vsub.s32 0, %v418
        %v420 = vrot.slane %v391, %v419
        %v422 = vadd.f32 %v398, %v420
        %v423 = vadd.f32 %v399, %v420
        %v424 = vadd.f32 %v400, %v420
        %v425 = vadd.f32 %v401, %v420
        %v426 = vadd.f32 %v402, %v420
        %v427 = vadd.f32 %v403, %v420
        %v428 = vadd.f32 %v404, %v420
        %v429 = vadd.f32 %v405, %v420
        %v430 = vadd.f32 %v406, %v420
        %v431 = vadd.f32 %v407, %v420
        %v432 = vadd.f32 %v408, %v420
        %v433 = vadd.f32 %v409, %v420
        %v434 = vadd.f32 %v410, %v420
        %v435 = vadd.f32 %v411, %v420
        %v436 = vadd.f32 %v412, %v420
        %v437 = vadd.f32 %v413, %v420
        %v438 = vadd.f32 %v414, %v420
        %v439 = vadd.f32 %v415, %v420
        %v440 = vmax.f32 %v422, 0.0
        %v441 = vmax.f32 %v423, 0.0
        %v442 = vmax.f32 %v424, 0.0
        %v443 = vmax.f32 %v425, 0.0
        %v444 = vmax.f32 %v426, 0.0
        %v445 = vmax.f32 %v427, 0.0
        %v446 = vmax.f32 %v428, 0.0
        %v447 = vmax.f32 %v429, 0.0
        %v448 = vmax.f32 %v430, 0.0
        %v449 = vmax.f32 %v431, 0.0
        %v450 = vmax.f32 %v432, 0.0
        %v451 = vmax.f32 %v433, 0.0
        %v452 = vmax.f32 %v434, 0.0
        %v453 = vmax.f32 %v435, 0.0
        %v454 = vmax.f32 %v436, 0.0
        %v455 = vmax.f32 %v437, 0.0
        %v456 = vmax.f32 %v438, 0.0
        %v457 = vmax.f32 %v439, 0.0
        %v458 = vpack.c.bf16 %v441, %v440
        %v459 = vpack.c.bf16 %v443, %v442
        %v460 = vpack.c.bf16 %v445, %v444
        %v461 = vpack.c.bf16 %v447, %v446
        %v462 = vpack.c.bf16 %v449, %v448
        %v463 = vpack.c.bf16 %v451, %v450
        %v464 = vpack.c.bf16 %v453, %v452
        %v465 = vpack.c.bf16 %v455, %v454
        %v466 = vpack.c.bf16 %v457, %v456
        %v476 = vunpack.c.l.b16 %v458
        %v477 = vunpack.c.h.b16 %v458
        %v478 = vunpack.c.l.b16 %v459
        %v479 = vunpack.c.h.b16 %v459
        %v480 = vunpack.c.l.b16 %v460
        %v481 = vunpack.c.h.b16 %v460
        %v482 = vunpack.c.l.b16 %v461
        %v483 = vunpack.c.h.b16 %v461
        %v484 = vunpack.c.l.b16 %v462
        %v485 = vunpack.c.h.b16 %v462
        %v486 = vunpack.c.l.b16 %v463
        %v487 = vunpack.c.h.b16 %v463
        %v488 = vunpack.c.l.b16 %v464
        %v489 = vunpack.c.h.b16 %v464
        %v490 = vunpack.c.l.b16 %v465
        %v491 = vunpack.c.h.b16 %v465
        %v492 = vunpack.c.l.b16 %v466
        %v493 = vunpack.c.h.b16 %v466
        %v494 = vpack.c.b16 %v476, %v476
        %v495 = vpack.c.b16 %v477, %v477
        %v496 = vpack.c.b16 %v478, %v478
        %v497 = vpack.c.b16 %v479, %v479
        %v498 = vpack.c.b16 %v480, %v480
        %v499 = vpack.c.b16 %v481, %v481
        %v500 = vpack.c.b16 %v482, %v482
        %v501 = vpack.c.b16 %v483, %v483
        %v502 = vpack.c.b16 %v484, %v484
        %v503 = vpack.c.b16 %v485, %v485
        %v504 = vpack.c.b16 %v486, %v486
        %v505 = vpack.c.b16 %v487, %v487
        %v506 = vpack.c.b16 %v488, %v488
        %v507 = vpack.c.b16 %v489, %v489
        %v508 = vpack.c.b16 %v490, %v490
        %v509 = vpack.c.b16 %v491, %v491
        %v510 = vpack.c.b16 %v492, %v492
        %v511 = vpack.c.b16 %v493, %v493
        %vm512 = vsmask.f32 256
        %vm513 = vsmask.f32 4368
        %vm514 = vmor %vm512, %vm513
        %v516 = vshrl.u32 %v494, 16
        %v518 = vrot.slane %v516, 7
        %v519 = vshll.u32 %v494, 16
        %v521 = vor.u32 %v518, %v519
        %v522 = vrot.slane %v518, 4
        %v524 = vshrl.u32 %v495, 16
        %v526 = vrot.slane %v524, 7
        %v527 = vshll.u32 %v495, 16
        %v529 = vor.u32 %v526, %v527
        %v530 = vsel %vm514, %v522, %v529
        %v531 = vrot.slane %v526, 4
        %v533 = vshrl.u32 %v496, 16
        %v535 = vrot.slane %v533, 7
        %v536 = vshll.u32 %v496, 16
        %v538 = vor.u32 %v535, %v536
        %v539 = vrot.slane %v535, 4
        %v541 = vshrl.u32 %v497, 16
        %v543 = vrot.slane %v541, 7
        %v544 = vshll.u32 %v497, 16
        %v546 = vor.u32 %v543, %v544
        %v547 = vsel %vm514, %v539, %v546
        %v548 = vrot.slane %v543, 4
        %v550 = vshrl.u32 %v498, 16
        %v552 = vrot.slane %v550, 7
        %v553 = vshll.u32 %v498, 16
        %v555 = vor.u32 %v552, %v553
        %v556 = vrot.slane %v552, 4
        %v558 = vshrl.u32 %v499, 16
        %v560 = vrot.slane %v558, 7
        %v561 = vshll.u32 %v499, 16
        %v563 = vor.u32 %v560, %v561
        %v564 = vsel %vm514, %v556, %v563
        %v565 = vrot.slane %v560, 4
        %v567 = vshrl.u32 %v500, 16
        %v569 = vrot.slane %v567, 7
        %v570 = vshll.u32 %v500, 16
        %v572 = vor.u32 %v569, %v570
        %v573 = vrot.slane %v569, 4
        %v575 = vshrl.u32 %v501, 16
        %v577 = vrot.slane %v575, 7
        %v578 = vshll.u32 %v501, 16
        %v580 = vor.u32 %v577, %v578
        %v581 = vsel %vm514, %v573, %v580
        %v582 = vrot.slane %v577, 4
        %v584 = vshrl.u32 %v502, 16
        %v586 = vrot.slane %v584, 7
        %v587 = vshll.u32 %v502, 16
        %v589 = vor.u32 %v586, %v587
        %v590 = vrot.slane %v586, 4
        %v592 = vshrl.u32 %v503, 16
        %v594 = vrot.slane %v592, 7
        %v595 = vshll.u32 %v503, 16
        %v597 = vor.u32 %v594, %v595
        %v598 = vsel %vm514, %v590, %v597
        %v599 = vrot.slane %v594, 4
        %v601 = vshrl.u32 %v504, 16
        %v603 = vrot.slane %v601, 7
        %v604 = vshll.u32 %v504, 16
        %v606 = vor.u32 %v603, %v604
        %v607 = vrot.slane %v603, 4
        %v609 = vshrl.u32 %v505, 16
        %v611 = vrot.slane %v609, 7
        %v612 = vshll.u32 %v505, 16
        %v614 = vor.u32 %v611, %v612
        %v615 = vsel %vm514, %v607, %v614
        %v616 = vrot.slane %v611, 4
        %v618 = vshrl.u32 %v506, 16
        %v620 = vrot.slane %v618, 7
        %v621 = vshll.u32 %v506, 16
        %v623 = vor.u32 %v620, %v621
        %v624 = vrot.slane %v620, 4
        %v626 = vshrl.u32 %v507, 16
        %v628 = vrot.slane %v626, 7
        %v629 = vshll.u32 %v507, 16
        %v631 = vor.u32 %v628, %v629
        %v632 = vsel %vm514, %v624, %v631
        %v633 = vrot.slane %v628, 4
        %v635 = vshrl.u32 %v508, 16
        %v637 = vrot.slane %v635, 7
        %v638 = vshll.u32 %v508, 16
        %v640 = vor.u32 %v637, %v638
        %v641 = vrot.slane %v637, 4
        %v643 = vshrl.u32 %v509, 16
        %v645 = vrot.slane %v643, 7
        %v646 = vshll.u32 %v509, 16
        %v648 = vor.u32 %v645, %v646
        %v649 = vsel %vm514, %v641, %v648
        %v650 = vrot.slane %v645, 4
        %v652 = vshrl.u32 %v510, 16
        %v654 = vrot.slane %v652, 7
        %v655 = vshll.u32 %v510, 16
        %v657 = vor.u32 %v654, %v655
        %v658 = vrot.slane %v654, 4
        %v660 = vshrl.u32 %v511, 16
        %v662 = vrot.slane %v660, 7
        %v663 = vshll.u32 %v511, 16
        %v665 = vor.u32 %v662, %v663
        %v666 = vsel %vm514, %v658, %v665
        %v667 = vrot.slane %v662, 4
        %s695 = scalar_lea.vmem [#allocation2], 12
        %vm696 = vcmask 1043456
        %vm697 = vsmask.f32 7938
        %vm698 = vmand %vm696, %vm697
        %v699 = vld [vmem:[%s695] sm:$0xf]
        %v700 = vsel %vm698, %v521, %v699
        %701 = vst [vmem:[%s695] sm:$0xf] %v700
        %702 = vst [vmem:[%s695 + $0x4] sm:$0xf] %v530
        %vm703 = vcmask 1040384
        %vm704 = vmand %vm703, %vm512
        %v705 = vld [vmem:[%s695 + $0x8] sm:$0x1]
        %v706 = vsel %vm704, %v531, %v705
        %707 = vst [vmem:[%s695 + $0x8] sm:$0x1] %v706
        %v708 = vld [vmem:[%s695 + $0xc] sm:$0xf]
        %v709 = vsel %vm698, %v538, %v708
        %710 = vst [vmem:[%s695 + $0xc] sm:$0xf] %v709
        %711 = vst [vmem:[%s695 + $0x10] sm:$0xf] %v547
        %v712 = vld [vmem:[%s695 + $0x14] sm:$0x1]
        %v713 = vsel %vm704, %v548, %v712
        %714 = vst [vmem:[%s695 + $0x14] sm:$0x1] %v713
        %v715 = vld [vmem:[%s695 + $0x18] sm:$0xf]
        %v716 = vsel %vm698, %v555, %v715
        %717 = vst [vmem:[%s695 + $0x18] sm:$0xf] %v716
        %718 = vst [vmem:[%s695 + $0x1c] sm:$0xf] %v564
        %v719 = vld [vmem:[%s695 + $0x20] sm:$0x1]
        %v720 = vsel %vm704, %v565, %v719
        %721 = vst [vmem:[%s695 + $0x20] sm:$0x1] %v720
        %v722 = vld [vmem:[%s695 + $0x24] sm:$0xf]
        %v723 = vsel %vm698, %v572, %v722
        %724 = vst [vmem:[%s695 + $0x24] sm:$0xf] %v723
        %725 = vst [vmem:[%s695 + $0x28] sm:$0xf] %v581
        %v726 = vld [vmem:[%s695 + $0x2c] sm:$0x1]
        %v727 = vsel %vm704, %v582, %v726
        %728 = vst [vmem:[%s695 + $0x2c] sm:$0x1] %v727
        %v729 = vld [vmem:[%s695 + $0x30] sm:$0xf]
        %v730 = vsel %vm698, %v589, %v729
        %731 = vst [vmem:[%s695 + $0x30] sm:$0xf] %v730
        %732 = vst [vmem:[%s695 + $0x34] sm:$0xf] %v598
        %v733 = vld [vmem:[%s695 + $0x38] sm:$0x1]
        %v734 = vsel %vm704, %v599, %v733
        %735 = vst [vmem:[%s695 + $0x38] sm:$0x1] %v734
        %v736 = vld [vmem:[%s695 + $0x3c] sm:$0xf]
        %v737 = vsel %vm698, %v606, %v736
        %738 = vst [vmem:[%s695 + $0x3c] sm:$0xf] %v737
        %739 = vst [vmem:[%s695 + $0x40] sm:$0xf] %v615
        %v740 = vld [vmem:[%s695 + $0x44] sm:$0x1]
        %v741 = vsel %vm704, %v616, %v740
        %742 = vst [vmem:[%s695 + $0x44] sm:$0x1] %v741
        %v743 = vld [vmem:[%s695 + $0x48] sm:$0xf]
        %v744 = vsel %vm698, %v623, %v743
        %745 = vst [vmem:[%s695 + $0x48] sm:$0xf] %v744
        %746 = vst [vmem:[%s695 + $0x4c] sm:$0xf] %v632
        %v747 = vld [vmem:[%s695 + $0x50] sm:$0x1]
        %v748 = vsel %vm704, %v633, %v747
        %749 = vst [vmem:[%s695 + $0x50] sm:$0x1] %v748
        %v750 = vld [vmem:[%s695 + $0x54] sm:$0xf]
        %v751 = vsel %vm698, %v640, %v750
        %752 = vst [vmem:[%s695 + $0x54] sm:$0xf] %v751
        %753 = vst [vmem:[%s695 + $0x58] sm:$0xf] %v649
        %v754 = vld [vmem:[%s695 + $0x5c] sm:$0x1]
        %v755 = vsel %vm704, %v650, %v754
        %756 = vst [vmem:[%s695 + $0x5c] sm:$0x1] %v755
        %v757 = vld [vmem:[%s695 + $0x60] sm:$0xf]
        %v758 = vsel %vm698, %v657, %v757
        %759 = vst [vmem:[%s695 + $0x60] sm:$0xf] %v758
        %760 = vst [vmem:[%s695 + $0x64] sm:$0xf] %v666
        %v761 = vld [vmem:[%s695 + $0x68] sm:$0x1]
        %v762 = vsel %vm704, %v667, %v761
        %763 = vst [vmem:[%s695 + $0x68] sm:$0x1] %v762
      $region40: #{expanding_block_forward.4} parent=35 // pred_fallthru
        _
      %p764 = scmp.eq.s32.totalorder %s23, 1
      // Predicated region
      $region41: #{expanding_block_forward.4} parent=35 // pred_check
        %p765 = pneg %p764
      $region42: #{expanding_block_forward.4} parent=35 // pred_check_branch
        %767 = sbr.rel (%p765) target = $region44
      $region43: #{expanding_block_forward.4} parent=35 // pred_region
        %s768 = ssub.s32 %s319, 1
        %s769 = smul.u32 %s768, 2
        %s770 = smul.addr %s769, 4
        %s771 = scalar_lea.vmem %s290, %s770
        %v772 = vld [vmem:[%s771] sm:$0xf]
        %v773 = vld [vmem:[%s771 + $0x4] sm:$0xf]
        %v774 = vld [vmem:[%s771 + $0x8] sm:$0xf]
        %v775 = vld [vmem:[%s771 + $0xc] sm:$0xf]
        %v776 = vld [vmem:[%s771 + $0x10] sm:$0xf]
        %v777 = vld [vmem:[%s771 + $0x14] sm:$0xf]
        %v778 = vld [vmem:[%s771 + $0x18] sm:$0xf]
        %v779 = vld [vmem:[%s771 + $0x1c] sm:$0xf]
        %v780 = vld [vmem:[%s771 + $0x20] sm:$0xf]
        %v781 = vld [vmem:[%s771 + $0x24] sm:$0xf]
        %v782 = vld [vmem:[%s771 + $0x28] sm:$0xf]
        %v783 = vld [vmem:[%s771 + $0x2c] sm:$0xf]
        %v784 = vld [vmem:[%s771 + $0x30] sm:$0xf]
        %v785 = vld [vmem:[%s771 + $0x34] sm:$0xf]
        %v786 = vld [vmem:[%s771 + $0x38] sm:$0xf]
        %v787 = vld [vmem:[%s771 + $0x3c] sm:$0xf]
        %v788 = vld [vmem:[%s771 + $0x40] sm:$0xf]
        %v789 = vld [vmem:[%s771 + $0x44] sm:$0xf]
        %v790 = vunpack.c.l.bf16 %v772
        %v791 = vunpack.c.l.bf16 %v773
        %v792 = vunpack.c.l.bf16 %v774
        %v793 = vunpack.c.l.bf16 %v775
        %v794 = vunpack.c.l.bf16 %v776
        %v795 = vunpack.c.l.bf16 %v777
        %v796 = vunpack.c.l.bf16 %v778
        %v797 = vunpack.c.l.bf16 %v779
        %v798 = vunpack.c.l.bf16 %v780
        %v799 = vunpack.c.l.bf16 %v781
        %v800 = vunpack.c.l.bf16 %v782
        %v801 = vunpack.c.l.bf16 %v783
        %v802 = vunpack.c.l.bf16 %v784
        %v803 = vunpack.c.l.bf16 %v785
        %v804 = vunpack.c.l.bf16 %v786
        %v805 = vunpack.c.l.bf16 %v787
        %v806 = vunpack.c.l.bf16 %v788
        %v807 = vunpack.c.l.bf16 %v789
        %v808 = vld [vmem:[%s2] sm:$0x1]
        %v809 = vld [vmem:[%s3] sm:$0x1]
        %v811 = vlaneseq
        %v812 = vshrl.u32 %v811, 7
        %v813 = vsub.s32 0, %v812
        %v814 = vrot.slane %v808, %v813
        %v816 = vmul.f32 %v790, %v814
        %v817 = vmul.f32 %v791, %v814
        %v818 = vmul.f32 %v792, %v814
        %v819 = vmul.f32 %v793, %v814
        %v820 = vmul.f32 %v794, %v814
        %v821 = vmul.f32 %v795, %v814
        %v822 = vmul.f32 %v796, %v814
        %v823 = vmul.f32 %v797, %v814
        %v824 = vmul.f32 %v798, %v814
        %v825 = vmul.f32 %v799, %v814
        %v826 = vmul.f32 %v800, %v814
        %v827 = vmul.f32 %v801, %v814
        %v828 = vmul.f32 %v802, %v814
        %v829 = vmul.f32 %v803, %v814
        %v830 = vmul.f32 %v804, %v814
        %v831 = vmul.f32 %v805, %v814
        %v832 = vmul.f32 %v806, %v814
        %v833 = vmul.f32 %v807, %v814
        %v835 = vlaneseq
        %v836 = vshrl.u32 %v835, 7
        %v837 = vsub.s32 0, %v836
        %v838 = vrot.slane %v809, %v837
        %v840 = vadd.f32 %v816, %v838
        %v841 = vadd.f32 %v817, %v838
        %v842 = vadd.f32 %v818, %v838
        %v843 = vadd.f32 %v819, %v838
        %v844 = vadd.f32 %v820, %v838
        %v845 = vadd.f32 %v821, %v838
        %v846 = vadd.f32 %v822, %v838
        %v847 = vadd.f32 %v823, %v838
        %v848 = vadd.f32 %v824, %v838
        %v849 = vadd.f32 %v825, %v838
        %v850 = vadd.f32 %v826, %v838
        %v851 = vadd.f32 %v827, %v838
        %v852 = vadd.f32 %v828, %v838
        %v853 = vadd.f32 %v829, %v838
        %v854 = vadd.f32 %v830, %v838
        %v855 = vadd.f32 %v831, %v838
        %v856 = vadd.f32 %v832, %v838
        %v857 = vadd.f32 %v833, %v838
        %v858 = vmax.f32 %v840, 0.0
        %v859 = vmax.f32 %v841, 0.0
        %v860 = vmax.f32 %v842, 0.0
        %v861 = vmax.f32 %v843, 0.0
        %v862 = vmax.f32 %v844, 0.0
        %v863 = vmax.f32 %v845, 0.0
        %v864 = vmax.f32 %v846, 0.0
        %v865 = vmax.f32 %v847, 0.0
        %v866 = vmax.f32 %v848, 0.0
        %v867 = vmax.f32 %v849, 0.0
        %v868 = vmax.f32 %v850, 0.0
        %v869 = vmax.f32 %v851, 0.0
        %v870 = vmax.f32 %v852, 0.0
        %v871 = vmax.f32 %v853, 0.0
        %v872 = vmax.f32 %v854, 0.0
        %v873 = vmax.f32 %v855, 0.0
        %v874 = vmax.f32 %v856, 0.0
        %v875 = vmax.f32 %v857, 0.0
        %v876 = vpack.c.bf16 %v859, %v858
        %v877 = vpack.c.bf16 %v861, %v860
        %v878 = vpack.c.bf16 %v863, %v862
        %v879 = vpack.c.bf16 %v865, %v864
        %v880 = vpack.c.bf16 %v867, %v866
        %v881 = vpack.c.bf16 %v869, %v868
        %v882 = vpack.c.bf16 %v871, %v870
        %v883 = vpack.c.bf16 %v873, %v872
        %v884 = vpack.c.bf16 %v875, %v874
        %v894 = vunpack.c.l.b16 %v876
        %v895 = vunpack.c.h.b16 %v876
        %v896 = vunpack.c.l.b16 %v877
        %v897 = vunpack.c.h.b16 %v877
        %v898 = vunpack.c.l.b16 %v878
        %v899 = vunpack.c.h.b16 %v878
        %v900 = vunpack.c.l.b16 %v879
        %v901 = vunpack.c.h.b16 %v879
        %v902 = vunpack.c.l.b16 %v880
        %v903 = vunpack.c.h.b16 %v880
        %v904 = vunpack.c.l.b16 %v881
        %v905 = vunpack.c.h.b16 %v881
        %v906 = vunpack.c.l.b16 %v882
        %v907 = vunpack.c.h.b16 %v882
        %v908 = vunpack.c.l.b16 %v883
        %v909 = vunpack.c.h.b16 %v883
        %v910 = vunpack.c.l.b16 %v884
        %v911 = vunpack.c.h.b16 %v884
        %v912 = vpack.c.b16 %v894, %v894
        %v913 = vpack.c.b16 %v895, %v895
        %v914 = vpack.c.b16 %v896, %v896
        %v915 = vpack.c.b16 %v897, %v897
        %v916 = vpack.c.b16 %v898, %v898
        %v917 = vpack.c.b16 %v899, %v899
        %v918 = vpack.c.b16 %v900, %v900
        %v919 = vpack.c.b16 %v901, %v901
        %v920 = vpack.c.b16 %v902, %v902
        %v921 = vpack.c.b16 %v903, %v903
        %v922 = vpack.c.b16 %v904, %v904
        %v923 = vpack.c.b16 %v905, %v905
        %v924 = vpack.c.b16 %v906, %v906
        %v925 = vpack.c.b16 %v907, %v907
        %v926 = vpack.c.b16 %v908, %v908
        %v927 = vpack.c.b16 %v909, %v909
        %v928 = vpack.c.b16 %v910, %v910
        %v929 = vpack.c.b16 %v911, %v911
        %vm930 = vsmask.f32 256
        %vm931 = vsmask.f32 4368
        %vm932 = vmor %vm930, %vm931
        %v934 = vshrl.u32 %v912, 16
        %v936 = vrot.slane %v934, 7
        %v937 = vshll.u32 %v912, 16
        %v939 = vor.u32 %v936, %v937
        %v940 = vrot.slane %v936, 4
        %v942 = vshrl.u32 %v913, 16
        %v944 = vrot.slane %v942, 7
        %v945 = vshll.u32 %v913, 16
        %v947 = vor.u32 %v944, %v945
        %v948 = vsel %vm932, %v940, %v947
        %v949 = vrot.slane %v944, 4
        %v951 = vshrl.u32 %v914, 16
        %v953 = vrot.slane %v951, 7
        %v954 = vshll.u32 %v914, 16
        %v956 = vor.u32 %v953, %v954
        %v957 = vrot.slane %v953, 4
        %v959 = vshrl.u32 %v915, 16
        %v961 = vrot.slane %v959, 7
        %v962 = vshll.u32 %v915, 16
        %v964 = vor.u32 %v961, %v962
        %v965 = vsel %vm932, %v957, %v964
        %v966 = vrot.slane %v961, 4
        %v968 = vshrl.u32 %v916, 16
        %v970 = vrot.slane %v968, 7
        %v971 = vshll.u32 %v916, 16
        %v973 = vor.u32 %v970, %v971
        %v974 = vrot.slane %v970, 4
        %v976 = vshrl.u32 %v917, 16
        %v978 = vrot.slane %v976, 7
        %v979 = vshll.u32 %v917, 16
        %v981 = vor.u32 %v978, %v979
        %v982 = vsel %vm932, %v974, %v981
        %v983 = vrot.slane %v978, 4
        %v985 = vshrl.u32 %v918, 16
        %v987 = vrot.slane %v985, 7
        %v988 = vshll.u32 %v918, 16
        %v990 = vor.u32 %v987, %v988
        %v991 = vrot.slane %v987, 4
        %v993 = vshrl.u32 %v919, 16
        %v995 = vrot.slane %v993, 7
        %v996 = vshll.u32 %v919, 16
        %v998 = vor.u32 %v995, %v996
        %v999 = vsel %vm932, %v991, %v998
        %v1000 = vrot.slane %v995, 4
        %v1002 = vshrl.u32 %v920, 16
        %v1004 = vrot.slane %v1002, 7
        %v1005 = vshll.u32 %v920, 16
        %v1007 = vor.u32 %v1004, %v1005
        %v1008 = vrot.slane %v1004, 4
        %v1010 = vshrl.u32 %v921, 16
        %v1012 = vrot.slane %v1010, 7
        %v1013 = vshll.u32 %v921, 16
        %v1015 = vor.u32 %v1012, %v1013
        %v1016 = vsel %vm932, %v1008, %v1015
        %v1017 = vrot.slane %v1012, 4
        %v1019 = vshrl.u32 %v922, 16
        %v1021 = vrot.slane %v1019, 7
        %v1022 = vshll.u32 %v922, 16
        %v1024 = vor.u32 %v1021, %v1022
        %v1025 = vrot.slane %v1021, 4
        %v1027 = vshrl.u32 %v923, 16
        %v1029 = vrot.slane %v1027, 7
        %v1030 = vshll.u32 %v923, 16
        %v1032 = vor.u32 %v1029, %v1030
        %v1033 = vsel %vm932, %v1025, %v1032
        %v1034 = vrot.slane %v1029, 4
        %v1036 = vshrl.u32 %v924, 16
        %v1038 = vrot.slane %v1036, 7
        %v1039 = vshll.u32 %v924, 16
        %v1041 = vor.u32 %v1038, %v1039
        %v1042 = vrot.slane %v1038, 4
        %v1044 = vshrl.u32 %v925, 16
        %v1046 = vrot.slane %v1044, 7
        %v1047 = vshll.u32 %v925, 16
        %v1049 = vor.u32 %v1046, %v1047
        %v1050 = vsel %vm932, %v1042, %v1049
        %v1051 = vrot.slane %v1046, 4
        %v1053 = vshrl.u32 %v926, 16
        %v1055 = vrot.slane %v1053, 7
        %v1056 = vshll.u32 %v926, 16
        %v1058 = vor.u32 %v1055, %v1056
        %v1059 = vrot.slane %v1055, 4
        %v1061 = vshrl.u32 %v927, 16
        %v1063 = vrot.slane %v1061, 7
        %v1064 = vshll.u32 %v927, 16
        %v1066 = vor.u32 %v1063, %v1064
        %v1067 = vsel %vm932, %v1059, %v1066
        %v1068 = vrot.slane %v1063, 4
        %v1070 = vshrl.u32 %v928, 16
        %v1072 = vrot.slane %v1070, 7
        %v1073 = vshll.u32 %v928, 16
        %v1075 = vor.u32 %v1072, %v1073
        %v1076 = vrot.slane %v1072, 4
        %v1078 = vshrl.u32 %v929, 16
        %v1080 = vrot.slane %v1078, 7
        %v1081 = vshll.u32 %v929, 16
        %v1083 = vor.u32 %v1080, %v1081
        %v1084 = vsel %vm932, %v1076, %v1083
        %v1085 = vrot.slane %v1080, 4
        %vm1113 = vcmask 1043456
        %vm1114 = vsmask.f32 7938
        %vm1115 = vmand %vm1113, %vm1114
        %v1116 = vld [vmem:[#allocation2] sm:$0xf]
        %v1117 = vsel %vm1115, %v939, %v1116
        %1118 = vst [vmem:[#allocation2] sm:$0xf] %v1117
        %1119 = vst [vmem:[#allocation2 + $0x4] sm:$0xf] %v948
        %vm1120 = vcmask 1040384
        %vm1121 = vmand %vm1120, %vm930
        %v1122 = vld [vmem:[#allocation2 + $0x8] sm:$0x1]
        %v1123 = vsel %vm1121, %v949, %v1122
        %1124 = vst [vmem:[#allocation2 + $0x8] sm:$0x1] %v1123
        %v1125 = vld [vmem:[#allocation2 + $0xc] sm:$0xf]
        %v1126 = vsel %vm1115, %v956, %v1125
        %1127 = vst [vmem:[#allocation2 + $0xc] sm:$0xf] %v1126
        %1128 = vst [vmem:[#allocation2 + $0x10] sm:$0xf] %v965
        %v1129 = vld [vmem:[#allocation2 + $0x14] sm:$0x1]
        %v1130 = vsel %vm1121, %v966, %v1129
        %1131 = vst [vmem:[#allocation2 + $0x14] sm:$0x1] %v1130
        %v1132 = vld [vmem:[#allocation2 + $0x18] sm:$0xf]
        %v1133 = vsel %vm1115, %v973, %v1132
        %1134 = vst [vmem:[#allocation2 + $0x18] sm:$0xf] %v1133
        %1135 = vst [vmem:[#allocation2 + $0x1c] sm:$0xf] %v982
        %v1136 = vld [vmem:[#allocation2 + $0x20] sm:$0x1]
        %v1137 = vsel %vm1121, %v983, %v1136
        %1138 = vst [vmem:[#allocation2 + $0x20] sm:$0x1] %v1137
        %v1139 = vld [vmem:[#allocation2 + $0x24] sm:$0xf]
        %v1140 = vsel %vm1115, %v990, %v1139
        %1141 = vst [vmem:[#allocation2 + $0x24] sm:$0xf] %v1140
        %1142 = vst [vmem:[#allocation2 + $0x28] sm:$0xf] %v999
        %v1143 = vld [vmem:[#allocation2 + $0x2c] sm:$0x1]
        %v1144 = vsel %vm1121, %v1000, %v1143
        %1145 = vst [vmem:[#allocation2 + $0x2c] sm:$0x1] %v1144
        %v1146 = vld [vmem:[#allocation2 + $0x30] sm:$0xf]
        %v1147 = vsel %vm1115, %v1007, %v1146
        %1148 = vst [vmem:[#allocation2 + $0x30] sm:$0xf] %v1147
        %1149 = vst [vmem:[#allocation2 + $0x34] sm:$0xf] %v1016
        %v1150 = vld [vmem:[#allocation2 + $0x38] sm:$0x1]
        %v1151 = vsel %vm1121, %v1017, %v1150
        %1152 = vst [vmem:[#allocation2 + $0x38] sm:$0x1] %v1151
        %v1153 = vld [vmem:[#allocation2 + $0x3c] sm:$0xf]
        %v1154 = vsel %vm1115, %v1024, %v1153
        %1155 = vst [vmem:[#allocation2 + $0x3c] sm:$0xf] %v1154
        %1156 = vst [vmem:[#allocation2 + $0x40] sm:$0xf] %v1033
        %v1157 = vld [vmem:[#allocation2 + $0x44] sm:$0x1]
        %v1158 = vsel %vm1121, %v1034, %v1157
        %1159 = vst [vmem:[#allocation2 + $0x44] sm:$0x1] %v1158
        %v1160 = vld [vmem:[#allocation2 + $0x48] sm:$0xf]
        %v1161 = vsel %vm1115, %v1041, %v1160
        %1162 = vst [vmem:[#allocation2 + $0x48] sm:$0xf] %v1161
        %1163 = vst [vmem:[#allocation2 + $0x4c] sm:$0xf] %v1050
        %v1164 = vld [vmem:[#allocation2 + $0x50] sm:$0x1]
        %v1165 = vsel %vm1121, %v1051, %v1164
        %1166 = vst [vmem:[#allocation2 + $0x50] sm:$0x1] %v1165
        %v1167 = vld [vmem:[#allocation2 + $0x54] sm:$0xf]
        %v1168 = vsel %vm1115, %v1058, %v1167
        %1169 = vst [vmem:[#allocation2 + $0x54] sm:$0xf] %v1168
        %1170 = vst [vmem:[#allocation2 + $0x58] sm:$0xf] %v1067
        %v1171 = vld [vmem:[#allocation2 + $0x5c] sm:$0x1]
        %v1172 = vsel %vm1121, %v1068, %v1171
        %1173 = vst [vmem:[#allocation2 + $0x5c] sm:$0x1] %v1172
        %v1174 = vld [vmem:[#allocation2 + $0x60] sm:$0xf]
        %v1175 = vsel %vm1115, %v1075, %v1174
        %1176 = vst [vmem:[#allocation2 + $0x60] sm:$0xf] %v1175
        %1177 = vst [vmem:[#allocation2 + $0x64] sm:$0xf] %v1084
        %v1178 = vld [vmem:[#allocation2 + $0x68] sm:$0x1]
        %v1179 = vsel %vm1121, %v1085, %v1178
        %1180 = vst [vmem:[#allocation2 + $0x68] sm:$0x1] %v1179
      $region44: #{expanding_block_forward.4} parent=35 // pred_fallthru
        _
      %v1181 = vld [vmem:[#allocation2] sm:$0xf]
      %v1182 = vld [vmem:[#allocation2 + $0x4] sm:$0xf]
      %v1183 = vld [vmem:[#allocation2 + $0x8] sm:$0x1]
      %v1184 = vld [vmem:[#allocation2 + $0xc] sm:$0xf]
      %v1185 = vld [vmem:[#allocation2 + $0x10] sm:$0xf]
      %v1186 = vld [vmem:[#allocation2 + $0x14] sm:$0x1]
      %v1187 = vld [vmem:[#allocation2 + $0x18] sm:$0xf]
      %v1188 = vld [vmem:[#allocation2 + $0x1c] sm:$0xf]
      %v1189 = vld [vmem:[#allocation2 + $0x20] sm:$0x1]
      %v1190 = vld [vmem:[#allocation2 + $0x24] sm:$0xf]
      %v1191 = vld [vmem:[#allocation2 + $0x28] sm:$0xf]
      %v1192 = vld [vmem:[#allocation2 + $0x2c] sm:$0x1]
      %v1193 = vld [vmem:[#allocation2 + $0x30] sm:$0xf]
      %v1194 = vld [vmem:[#allocation2 + $0x34] sm:$0xf]
      %v1195 = vld [vmem:[#allocation2 + $0x38] sm:$0x1]
      %v1196 = vld [vmem:[#allocation2 + $0x3c] sm:$0xf]
      %v1197 = vld [vmem:[#allocation2 + $0x40] sm:$0xf]
      %v1198 = vld [vmem:[#allocation2 + $0x44] sm:$0x1]
      %v1199 = vld [vmem:[#allocation2 + $0x48] sm:$0xf]
      %v1200 = vld [vmem:[#allocation2 + $0x4c] sm:$0xf]
      %v1201 = vld [vmem:[#allocation2 + $0x50] sm:$0x1]
      %v1202 = vld [vmem:[#allocation2 + $0x54] sm:$0xf]
      %v1203 = vld [vmem:[#allocation2 + $0x58] sm:$0xf]
      %v1204 = vld [vmem:[#allocation2 + $0x5c] sm:$0x1]
      %v1205 = vld [vmem:[#allocation2 + $0x60] sm:$0xf]
      %v1206 = vld [vmem:[#allocation2 + $0x64] sm:$0xf]
      %v1207 = vld [vmem:[#allocation2 + $0x68] sm:$0x1]
      %v1208 = vld [vmem:[#allocation2 + $0x6c] sm:$0xf]
      %v1209 = vld [vmem:[#allocation2 + $0x70] sm:$0xf]
      %v1210 = vld [vmem:[#allocation2 + $0x74] sm:$0x1]
      %vm1211 = vsmask.f32 3328
      %vm1212 = vsmask.f32 7440
      %vm1213 = vmor %vm1211, %vm1212
      %v1215 = vshrl.u32 %v1181, 16
      %v1217 = vrot.slane %v1215, 4
      %v1218 = vshll.u32 %v1181, 16
      %v1220 = vrot.slane %v1218, 5
      %v1221 = vor.u32 %v1217, %v1220
      %v1222 = vrot.slane %v1221, 4
      %v1224 = vshll.u32 %v1182, 16
      %v1226 = vrot.slane %v1224, 5
      %v1227 = vsel %vm1213, %v1222, %v1226
      %v1228 = vshrl.u32 %v1182, 16
      %v1230 = vrot.slane %v1228, 4
      %v1231 = vor.u32 %v1230, %v1226
      %v1232 = vrot.slane %v1231, 4
      %v1234 = vshll.u32 %v1183, 16
      %v1236 = vrot.slane %v1234, 5
      %v1237 = vsel %vm1213, %v1232, %v1236
      %v1239 = vshrl.u32 %v1184, 16
      %v1241 = vrot.slane %v1239, 4
      %v1242 = vshll.u32 %v1184, 16
      %v1244 = vrot.slane %v1242, 5
      %v1245 = vor.u32 %v1241, %v1244
      %v1246 = vrot.slane %v1245, 4
      %v1248 = vshll.u32 %v1185, 16
      %v1250 = vrot.slane %v1248, 5
      %v1251 = vsel %vm1213, %v1246, %v1250
      %v1252 = vshrl.u32 %v1185, 16
      %v1254 = vrot.slane %v1252, 4
      %v1255 = vor.u32 %v1254, %v1250
      %v1256 = vrot.slane %v1255, 4
      %v1258 = vshll.u32 %v1186, 16
      %v1260 = vrot.slane %v1258, 5
      %v1261 = vsel %vm1213, %v1256, %v1260
      %v1263 = vshrl.u32 %v1187, 16
      %v1265 = vrot.slane %v1263, 4
      %v1266 = vshll.u32 %v1187, 16
      %v1268 = vrot.slane %v1266, 5
      %v1269 = vor.u32 %v1265, %v1268
      %v1270 = vrot.slane %v1269, 4
      %v1272 = vshll.u32 %v1188, 16
      %v1274 = vrot.slane %v1272, 5
      %v1275 = vsel %vm1213, %v1270, %v1274
      %v1276 = vshrl.u32 %v1188, 16
      %v1278 = vrot.slane %v1276, 4
      %v1279 = vor.u32 %v1278, %v1274
      %v1280 = vrot.slane %v1279, 4
      %v1282 = vshll.u32 %v1189, 16
      %v1284 = vrot.slane %v1282, 5
      %v1285 = vsel %vm1213, %v1280, %v1284
      %v1287 = vshrl.u32 %v1190, 16
      %v1289 = vrot.slane %v1287, 4
      %v1290 = vshll.u32 %v1190, 16
      %v1292 = vrot.slane %v1290, 5
      %v1293 = vor.u32 %v1289, %v1292
      %v1294 = vrot.slane %v1293, 4
      %v1296 = vshll.u32 %v1191, 16
      %v1298 = vrot.slane %v1296, 5
      %v1299 = vsel %vm1213, %v1294, %v1298
      %v1300 = vshrl.u32 %v1191, 16
      %v1302 = vrot.slane %v1300, 4
      %v1303 = vor.u32 %v1302, %v1298
      %v1304 = vrot.slane %v1303, 4
      %v1306 = vshll.u32 %v1192, 16
      %v1308 = vrot.slane %v1306, 5
      %v1309 = vsel %vm1213, %v1304, %v1308
      %v1311 = vshrl.u32 %v1193, 16
      %v1313 = vrot.slane %v1311, 4
      %v1314 = vshll.u32 %v1193, 16
      %v1316 = vrot.slane %v1314, 5
      %v1317 = vor.u32 %v1313, %v1316
      %v1318 = vrot.slane %v1317, 4
      %v1320 = vshll.u32 %v1194, 16
      %v1322 = vrot.slane %v1320, 5
      %v1323 = vsel %vm1213, %v1318, %v1322
      %v1324 = vshrl.u32 %v1194, 16
      %v1326 = vrot.slane %v1324, 4
      %v1327 = vor.u32 %v1326, %v1322
      %v1328 = vrot.slane %v1327, 4
      %v1330 = vshll.u32 %v1195, 16
      %v1332 = vrot.slane %v1330, 5
      %v1333 = vsel %vm1213, %v1328, %v1332
      %v1335 = vshrl.u32 %v1196, 16
      %v1337 = vrot.slane %v1335, 4
      %v1338 = vshll.u32 %v1196, 16
      %v1340 = vrot.slane %v1338, 5
      %v1341 = vor.u32 %v1337, %v1340
      %v1342 = vrot.slane %v1341, 4
      %v1344 = vshll.u32 %v1197, 16
      %v1346 = vrot.slane %v1344, 5
      %v1347 = vsel %vm1213, %v1342, %v1346
      %v1348 = vshrl.u32 %v1197, 16
      %v1350 = vrot.slane %v1348, 4
      %v1351 = vor.u32 %v1350, %v1346
      %v1352 = vrot.slane %v1351, 4
      %v1354 = vshll.u32 %v1198, 16
      %v1356 = vrot.slane %v1354, 5
      %v1357 = vsel %vm1213, %v1352, %v1356
      %v1359 = vshrl.u32 %v1199, 16
      %v1361 = vrot.slane %v1359, 4
      %v1362 = vshll.u32 %v1199, 16
      %v1364 = vrot.slane %v1362, 5
      %v1365 = vor.u32 %v1361, %v1364
      %v1366 = vrot.slane %v1365, 4
      %v1368 = vshll.u32 %v1200, 16
      %v1370 = vrot.slane %v1368, 5
      %v1371 = vsel %vm1213, %v1366, %v1370
      %v1372 = vshrl.u32 %v1200, 16
      %v1374 = vrot.slane %v1372, 4
      %v1375 = vor.u32 %v1374, %v1370
      %v1376 = vrot.slane %v1375, 4
      %v1378 = vshll.u32 %v1201, 16
      %v1380 = vrot.slane %v1378, 5
      %v1381 = vsel %vm1213, %v1376, %v1380
      %v1383 = vshrl.u32 %v1202, 16
      %v1385 = vrot.slane %v1383, 4
      %v1386 = vshll.u32 %v1202, 16
      %v1388 = vrot.slane %v1386, 5
      %v1389 = vor.u32 %v1385, %v1388
      %v1390 = vrot.slane %v1389, 4
      %v1392 = vshll.u32 %v1203, 16
      %v1394 = vrot.slane %v1392, 5
      %v1395 = vsel %vm1213, %v1390, %v1394
      %v1396 = vshrl.u32 %v1203, 16
      %v1398 = vrot.slane %v1396, 4
      %v1399 = vor.u32 %v1398, %v1394
      %v1400 = vrot.slane %v1399, 4
      %v1402 = vshll.u32 %v1204, 16
      %v1404 = vrot.slane %v1402, 5
      %v1405 = vsel %vm1213, %v1400, %v1404
      %vm1430 = vcmask 1042432
      %vm1431 = vcmask 1046532
      %vm1432 = vmor %vm1430, %vm1431
      %v1433 = vrot.slane %v1181, 5
      %v1434 = vrot.slane %v1433, 4
      %v1435 = vrot.slane %v1182, 5
      %v1436 = vsel %vm1432, %v1434, %v1435
      %v1437 = vrot.slane %v1435, 4
      %v1438 = vrot.slane %v1183, 5
      %v1439 = vsel %vm1432, %v1437, %v1438
      %v1440 = vrot.slane %v1184, 5
      %v1441 = vrot.slane %v1440, 4
      %v1442 = vrot.slane %v1185, 5
      %v1443 = vsel %vm1432, %v1441, %v1442
      %v1444 = vrot.slane %v1442, 4
      %v1445 = vrot.slane %v1186, 5
      %v1446 = vsel %vm1432, %v1444, %v1445
      %v1447 = vrot.slane %v1187, 5
      %v1448 = vrot.slane %v1447, 4
      %v1449 = vrot.slane %v1188, 5
      %v1450 = vsel %vm1432, %v1448, %v1449
      %v1451 = vrot.slane %v1449, 4
      %v1452 = vrot.slane %v1189, 5
      %v1453 = vsel %vm1432, %v1451, %v1452
      %v1454 = vrot.slane %v1190, 5
      %v1455 = vrot.slane %v1454, 4
      %v1456 = vrot.slane %v1191, 5
      %v1457 = vsel %vm1432, %v1455, %v1456
      %v1458 = vrot.slane %v1456, 4
      %v1459 = vrot.slane %v1192, 5
      %v1460 = vsel %vm1432, %v1458, %v1459
      %v1461 = vrot.slane %v1193, 5
      %v1462 = vrot.slane %v1461, 4
      %v1463 = vrot.slane %v1194, 5
      %v1464 = vsel %vm1432, %v1462, %v1463
      %v1465 = vrot.slane %v1463, 4
      %v1466 = vrot.slane %v1195, 5
      %v1467 = vsel %vm1432, %v1465, %v1466
      %v1468 = vrot.slane %v1196, 5
      %v1469 = vrot.slane %v1468, 4
      %v1470 = vrot.slane %v1197, 5
      %v1471 = vsel %vm1432, %v1469, %v1470
      %v1472 = vrot.slane %v1470, 4
      %v1473 = vrot.slane %v1198, 5
      %v1474 = vsel %vm1432, %v1472, %v1473
      %v1475 = vrot.slane %v1199, 5
      %v1476 = vrot.slane %v1475, 4
      %v1477 = vrot.slane %v1200, 5
      %v1478 = vsel %vm1432, %v1476, %v1477
      %v1479 = vrot.slane %v1477, 4
      %v1480 = vrot.slane %v1201, 5
      %v1481 = vsel %vm1432, %v1479, %v1480
      %v1482 = vrot.slane %v1202, 5
      %v1483 = vrot.slane %v1482, 4
      %v1484 = vrot.slane %v1203, 5
      %v1485 = vsel %vm1432, %v1483, %v1484
      %v1486 = vrot.slane %v1484, 4
      %v1487 = vrot.slane %v1204, 5
      %v1488 = vsel %vm1432, %v1486, %v1487
      %v1490 = vshrl.u32 %v1205, 16
      %v1492 = vrot.slane %v1490, 4
      %v1493 = vshll.u32 %v1205, 16
      %v1495 = vrot.slane %v1493, 5
      %v1496 = vor.u32 %v1492, %v1495
      %v1497 = vrot.slane %v1496, 4
      %v1499 = vshll.u32 %v1206, 16
      %v1501 = vrot.slane %v1499, 5
      %v1502 = vsel %vm1213, %v1497, %v1501
      %v1503 = vshrl.u32 %v1206, 16
      %v1505 = vrot.slane %v1503, 4
      %v1506 = vor.u32 %v1505, %v1501
      %v1507 = vrot.slane %v1506, 4
      %v1509 = vshll.u32 %v1207, 16
      %v1511 = vrot.slane %v1509, 5
      %v1512 = vsel %vm1213, %v1507, %v1511
      %v1516 = vrot.slane %v1205, 5
      %v1517 = vrot.slane %v1516, 4
      %v1518 = vrot.slane %v1206, 5
      %v1519 = vsel %vm1432, %v1517, %v1518
      %v1520 = vrot.slane %v1518, 4
      %v1521 = vrot.slane %v1207, 5
      %v1522 = vsel %vm1432, %v1520, %v1521
      %v1524 = vshrl.u32 %v1208, 16
      %v1526 = vrot.slane %v1524, 4
      %v1527 = vshll.u32 %v1208, 16
      %v1529 = vrot.slane %v1527, 5
      %v1530 = vor.u32 %v1526, %v1529
      %v1531 = vrot.slane %v1530, 4
      %v1533 = vshll.u32 %v1209, 16
      %v1535 = vrot.slane %v1533, 5
      %v1536 = vsel %vm1213, %v1531, %v1535
      %v1537 = vshrl.u32 %v1209, 16
      %v1539 = vrot.slane %v1537, 4
      %v1540 = vor.u32 %v1539, %v1535
      %v1541 = vrot.slane %v1540, 4
      %v1543 = vshll.u32 %v1210, 16
      %v1545 = vrot.slane %v1543, 5
      %v1546 = vsel %vm1213, %v1541, %v1545
      %v1550 = vrot.slane %v1208, 5
      %v1551 = vrot.slane %v1550, 4
      %v1552 = vrot.slane %v1209, 5
      %v1553 = vsel %vm1432, %v1551, %v1552
      %v1554 = vrot.slane %v1552, 4
      %v1555 = vrot.slane %v1210, 5
      %v1556 = vsel %vm1432, %v1554, %v1555
      %v1557 = vunpack.c.l.b16 %v1181
      %v1558 = vunpack.c.l.b16 %v1182
      %v1559 = vunpack.c.l.b16 %v1184
      %v1560 = vunpack.c.l.b16 %v1185
      %v1561 = vunpack.c.l.b16 %v1187
      %v1562 = vunpack.c.l.b16 %v1188
      %v1563 = vunpack.c.l.b16 %v1190
      %v1564 = vunpack.c.l.b16 %v1191
      %v1565 = vunpack.c.l.b16 %v1193
      %v1566 = vunpack.c.l.b16 %v1194
      %v1567 = vunpack.c.l.b16 %v1196
      %v1568 = vunpack.c.l.b16 %v1197
      %v1569 = vunpack.c.l.b16 %v1199
      %v1570 = vunpack.c.l.b16 %v1200
      %v1571 = vunpack.c.l.b16 %v1202
      %v1572 = vunpack.c.l.b16 %v1203
      %v1573 = vpack.c.b16 %v1558, %v1557
      %v1574 = vpack.c.b16 %v1560, %v1559
      %v1575 = vpack.c.b16 %v1562, %v1561
      %v1576 = vpack.c.b16 %v1564, %v1563
      %v1577 = vpack.c.b16 %v1566, %v1565
      %v1578 = vpack.c.b16 %v1568, %v1567
      %v1579 = vpack.c.b16 %v1570, %v1569
      %v1580 = vpack.c.b16 %v1572, %v1571
      %v1589 = vunpack.c.l.b16 %v1227
      %v1590 = vunpack.c.l.b16 %v1237
      %v1591 = vunpack.c.l.b16 %v1251
      %v1592 = vunpack.c.l.b16 %v1261
      %v1593 = vunpack.c.l.b16 %v1275
      %v1594 = vunpack.c.l.b16 %v1285
      %v1595 = vunpack.c.l.b16 %v1299
      %v1596 = vunpack.c.l.b16 %v1309
      %v1597 = vunpack.c.l.b16 %v1323
      %v1598 = vunpack.c.l.b16 %v1333
      %v1599 = vunpack.c.l.b16 %v1347
      %v1600 = vunpack.c.l.b16 %v1357
      %v1601 = vunpack.c.l.b16 %v1371
      %v1602 = vunpack.c.l.b16 %v1381
      %v1603 = vunpack.c.l.b16 %v1395
      %v1604 = vunpack.c.l.b16 %v1405
      %v1605 = vpack.c.b16 %v1590, %v1589
      %v1606 = vpack.c.b16 %v1592, %v1591
      %v1607 = vpack.c.b16 %v1594, %v1593
      %v1608 = vpack.c.b16 %v1596, %v1595
      %v1609 = vpack.c.b16 %v1598, %v1597
      %v1610 = vpack.c.b16 %v1600, %v1599
      %v1611 = vpack.c.b16 %v1602, %v1601
      %v1612 = vpack.c.b16 %v1604, %v1603
      %v1621 = vunpack.c.l.b16 %v1436
      %v1622 = vunpack.c.l.b16 %v1439
      %v1623 = vunpack.c.l.b16 %v1443
      %v1624 = vunpack.c.l.b16 %v1446
      %v1625 = vunpack.c.l.b16 %v1450
      %v1626 = vunpack.c.l.b16 %v1453
      %v1627 = vunpack.c.l.b16 %v1457
      %v1628 = vunpack.c.l.b16 %v1460
      %v1629 = vunpack.c.l.b16 %v1464
      %v1630 = vunpack.c.l.b16 %v1467
      %v1631 = vunpack.c.l.b16 %v1471
      %v1632 = vunpack.c.l.b16 %v1474
      %v1633 = vunpack.c.l.b16 %v1478
      %v1634 = vunpack.c.l.b16 %v1481
      %v1635 = vunpack.c.l.b16 %v1485
      %v1636 = vunpack.c.l.b16 %v1488
      %v1637 = vpack.c.b16 %v1622, %v1621
      %v1638 = vpack.c.b16 %v1624, %v1623
      %v1639 = vpack.c.b16 %v1626, %v1625
      %v1640 = vpack.c.b16 %v1628, %v1627
      %v1641 = vpack.c.b16 %v1630, %v1629
      %v1642 = vpack.c.b16 %v1632, %v1631
      %v1643 = vpack.c.b16 %v1634, %v1633
      %v1644 = vpack.c.b16 %v1636, %v1635
      %v1653 = vunpack.c.l.b16 %v1205
      %v1654 = vunpack.c.l.b16 %v1206
      %v1655 = vpack.c.b16 %v1654, %v1653
      %v1657 = vunpack.c.l.b16 %v1502
      %v1658 = vunpack.c.l.b16 %v1512
      %v1659 = vpack.c.b16 %v1658, %v1657
      %v1661 = vunpack.c.l.b16 %v1519
      %v1662 = vunpack.c.l.b16 %v1522
      %v1663 = vpack.c.b16 %v1662, %v1661
      %v1665 = vunpack.c.l.b16 %v1208
      %v1666 = vunpack.c.l.b16 %v1209
      %v1667 = vpack.c.b16 %v1666, %v1665
      %v1669 = vunpack.c.l.b16 %v1536
      %v1670 = vunpack.c.l.b16 %v1546
      %v1671 = vpack.c.b16 %v1670, %v1669
      %v1673 = vunpack.c.l.b16 %v1553
      %v1674 = vunpack.c.l.b16 %v1556
      %v1675 = vpack.c.b16 %v1674, %v1673
      %v1677 = vld [vmem:[%s1] sm:$0xf]
      %v1678 = vld [vmem:[%s1 + $0x4] sm:$0xf]
      %v1679 = vld [vmem:[%s1 + $0x8] sm:$0xf]
      %v1680 = vld [vmem:[%s1 + $0xc] sm:$0xf]
      %v1681 = vld [vmem:[%s1 + $0x10] sm:$0xf]
      %v1682 = vld [vmem:[%s1 + $0x14] sm:$0xf]
      %v1683 = vld [vmem:[%s1 + $0x18] sm:$0xf]
      %v1684 = vld [vmem:[%s1 + $0x1c] sm:$0xf]
      %v1685 = vld [vmem:[%s1 + $0x20] sm:$0xf]
      %v1686 = vld [vmem:[%s1 + $0x24] sm:$0xf]
      %v1687 = vld [vmem:[%s1 + $0x28] sm:$0xf]
      %v1688 = vld [vmem:[%s1 + $0x2c] sm:$0xf]
      %v1689 = vld [vmem:[%s1 + $0x30] sm:$0xf]
      %v1690 = vld [vmem:[%s1 + $0x34] sm:$0xf]
      %v1691 = vld [vmem:[%s1 + $0x38] sm:$0xf]
      %v1692 = vld [vmem:[%s1 + $0x3c] sm:$0xf]
      %v1693 = vld [vmem:[%s1 + $0x40] sm:$0xf]
      %v1694 = vld [vmem:[%s1 + $0x44] sm:$0xf]
      %v1695 = vld [vmem:[%s1 + $0x48] sm:$0xf]
      %v1696 = vld [vmem:[%s1 + $0x4c] sm:$0xf]
      %v1697 = vld [vmem:[%s1 + $0x50] sm:$0xf]
      %v1698 = vld [vmem:[%s1 + $0x54] sm:$0xf]
      %v1699 = vld [vmem:[%s1 + $0x58] sm:$0xf]
      %v1700 = vld [vmem:[%s1 + $0x5c] sm:$0xf]
      %v1701 = vld [vmem:[%s1 + $0x60] sm:$0xf]
      %v1702 = vld [vmem:[%s1 + $0x64] sm:$0xf]
      %v1703 = vld [vmem:[%s1 + $0x68] sm:$0xf]
      %v1704 = vld [vmem:[%s1 + $0x6c] sm:$0xf]
      %v1705 = vld [vmem:[%s1 + $0x70] sm:$0xf]
      %v1706 = vld [vmem:[%s1 + $0x74] sm:$0xf]
      %v1707 = vld [vmem:[%s1 + $0x78] sm:$0xf]
      %v1708 = vld [vmem:[%s1 + $0x7c] sm:$0xf]
      %v1709 = vld [vmem:[%s1 + $0x80] sm:$0xf]
      %v1710 = vld [vmem:[%s1 + $0x84] sm:$0xf]
      %v1711 = vld [vmem:[%s1 + $0x88] sm:$0xf]
      %v1712 = vld [vmem:[%s1 + $0x8c] sm:$0xf]
      %v1713 = vld [vmem:[%s1 + $0x90] sm:$0xf]
      %v1714 = vld [vmem:[%s1 + $0x94] sm:$0xf]
      %v1715 = vld [vmem:[%s1 + $0x98] sm:$0xf]
      %v1716 = vld [vmem:[%s1 + $0x9c] sm:$0xf]
      %v1717 = vld [vmem:[%s1 + $0xa0] sm:$0xf]
      %v1718 = vld [vmem:[%s1 + $0xa4] sm:$0xf]
      %v1719 = vld [vmem:[%s1 + $0xa8] sm:$0xf]
      %v1720 = vld [vmem:[%s1 + $0xac] sm:$0xf]
      %v1721 = vld [vmem:[%s1 + $0xb0] sm:$0xf]
      %v1722 = vld [vmem:[%s1 + $0xb4] sm:$0xf]
      %v1723 = vld [vmem:[%s1 + $0xb8] sm:$0xf]
      %v1724 = vld [vmem:[%s1 + $0xbc] sm:$0xf]
      %v1725 = vld [vmem:[%s1 + $0xc0] sm:$0xf]
      %v1726 = vld [vmem:[%s1 + $0xc4] sm:$0xf]
      %v1727 = vld [vmem:[%s1 + $0xc8] sm:$0xf]
      %v1728 = vld [vmem:[%s1 + $0xcc] sm:$0xf]
      %v1729 = vld [vmem:[%s1 + $0xd0] sm:$0xf]
      %v1730 = vld [vmem:[%s1 + $0xd4] sm:$0xf]
      %v1731 = vld [vmem:[%s1 + $0xd8] sm:$0xf]
      %v1732 = vld [vmem:[%s1 + $0xdc] sm:$0xf]
      %v1733 = vld [vmem:[%s1 + $0xe0] sm:$0xf]
      %v1734 = vld [vmem:[%s1 + $0xe4] sm:$0xf]
      %v1735 = vld [vmem:[%s1 + $0xe8] sm:$0xf]
      %v1736 = vld [vmem:[%s1 + $0xec] sm:$0xf]
      %v1737 = vld [vmem:[%s1 + $0xf0] sm:$0xf]
      %v1738 = vld [vmem:[%s1 + $0xf4] sm:$0xf]
      %v1739 = vld [vmem:[%s1 + $0xf8] sm:$0xf]
      %v1740 = vld [vmem:[%s1 + $0xfc] sm:$0xf]
      %v1741 = vld [vmem:[%s1 + $0x100] sm:$0xf]
      %v1742 = vld [vmem:[%s1 + $0x104] sm:$0xf]
      %v1743 = vld [vmem:[%s1 + $0x108] sm:$0xf]
      %v1744 = vld [vmem:[%s1 + $0x10c] sm:$0xf]
      %v1745 = vld [vmem:[%s1 + $0x110] sm:$0xf]
      %v1746 = vld [vmem:[%s1 + $0x114] sm:$0xf]
      %v1747 = vld [vmem:[%s1 + $0x118] sm:$0xf]
      %v1748 = vld [vmem:[%s1 + $0x11c] sm:$0xf]
      %v1749 = vld [vmem:[%s1 + $0x120] sm:$0xf]
      %v1750 = vld [vmem:[%s1 + $0x124] sm:$0xf]
      %v1751 = vld [vmem:[%s1 + $0x128] sm:$0xf]
      %v1752 = vld [vmem:[%s1 + $0x12c] sm:$0xf]
      %v1753 = vld [vmem:[%s1 + $0x130] sm:$0xf]
      %v1754 = vld [vmem:[%s1 + $0x134] sm:$0xf]
      %v1755 = vld [vmem:[%s1 + $0x138] sm:$0xf]
      %v1756 = vld [vmem:[%s1 + $0x13c] sm:$0xf]
      %v1757 = vld [vmem:[%s1 + $0x140] sm:$0xf]
      %v1758 = vld [vmem:[%s1 + $0x144] sm:$0xf]
      %v1759 = vld [vmem:[%s1 + $0x148] sm:$0xf]
      %v1760 = vld [vmem:[%s1 + $0x14c] sm:$0xf]
      %v1761 = vld [vmem:[%s1 + $0x150] sm:$0xf]
      %v1762 = vld [vmem:[%s1 + $0x154] sm:$0xf]
      %v1763 = vld [vmem:[%s1 + $0x158] sm:$0xf]
      %v1764 = vld [vmem:[%s1 + $0x15c] sm:$0xf]
      %v1765 = vld [vmem:[%s1 + $0x160] sm:$0xf]
      %v1766 = vld [vmem:[%s1 + $0x164] sm:$0xf]
      %v1767 = vld [vmem:[%s1 + $0x168] sm:$0xf]
      %v1768 = vld [vmem:[%s1 + $0x16c] sm:$0xf]
      %v1769 = vld [vmem:[%s1 + $0x170] sm:$0xf]
      %v1770 = vld [vmem:[%s1 + $0x174] sm:$0xf]
      %v1771 = vld [vmem:[%s1 + $0x178] sm:$0xf]
      %v1772 = vld [vmem:[%s1 + $0x17c] sm:$0xf]
      %v1773 = vld [vmem:[%s1 + $0x180] sm:$0xf]
      %v1774 = vld [vmem:[%s1 + $0x184] sm:$0xf]
      %v1775 = vld [vmem:[%s1 + $0x188] sm:$0xf]
      %v1776 = vld [vmem:[%s1 + $0x18c] sm:$0xf]
      %v1777 = vld [vmem:[%s1 + $0x190] sm:$0xf]
      %v1778 = vld [vmem:[%s1 + $0x194] sm:$0xf]
      %v1779 = vld [vmem:[%s1 + $0x198] sm:$0xf]
      %v1780 = vld [vmem:[%s1 + $0x19c] sm:$0xf]
      %v1781 = vld [vmem:[%s1 + $0x1a0] sm:$0xf]
      %v1782 = vld [vmem:[%s1 + $0x1a4] sm:$0xf]
      %v1783 = vld [vmem:[%s1 + $0x1a8] sm:$0xf]
      %v1784 = vld [vmem:[%s1 + $0x1ac] sm:$0xf]
      %v1785 = vld [vmem:[%s1 + $0x1b0] sm:$0xf]
      %v1786 = vld [vmem:[%s1 + $0x1b4] sm:$0xf]
      %v1787 = vld [vmem:[%s1 + $0x1b8] sm:$0xf]
      %v1788 = vld [vmem:[%s1 + $0x1bc] sm:$0xf]
      %v1789 = vld [vmem:[%s1 + $0x1c0] sm:$0xf]
      %v1790 = vld [vmem:[%s1 + $0x1c4] sm:$0xf]
      %v1791 = vld [vmem:[%s1 + $0x1c8] sm:$0xf]
      %v1792 = vld [vmem:[%s1 + $0x1cc] sm:$0xf]
      %v1793 = vld [vmem:[%s1 + $0x1d0] sm:$0xf]
      %v1794 = vld [vmem:[%s1 + $0x1d4] sm:$0xf]
      %v1795 = vld [vmem:[%s1 + $0x1d8] sm:$0xf]
      %v1796 = vld [vmem:[%s1 + $0x1dc] sm:$0xf]
      %v1797 = vld [vmem:[%s1 + $0x1e0] sm:$0xf]
      %v1798 = vld [vmem:[%s1 + $0x1e4] sm:$0xf]
      %v1799 = vld [vmem:[%s1 + $0x1e8] sm:$0xf]
      %v1800 = vld [vmem:[%s1 + $0x1ec] sm:$0xf]
      %v1801 = vld [vmem:[%s1 + $0x1f0] sm:$0xf]
      %v1802 = vld [vmem:[%s1 + $0x1f4] sm:$0xf]
      %v1803 = vld [vmem:[%s1 + $0x1f8] sm:$0xf]
      %v1804 = vld [vmem:[%s1 + $0x1fc] sm:$0xf]
      %v1805 = vld [vmem:[%s1 + $0x200] sm:$0xf]
      %v1806 = vld [vmem:[%s1 + $0x204] sm:$0xf]
      %v1807 = vld [vmem:[%s1 + $0x208] sm:$0xf]
      %v1808 = vld [vmem:[%s1 + $0x20c] sm:$0xf]
      %v1809 = vld [vmem:[%s1 + $0x210] sm:$0xf]
      %v1810 = vld [vmem:[%s1 + $0x214] sm:$0xf]
      %v1811 = vld [vmem:[%s1 + $0x218] sm:$0xf]
      %v1812 = vld [vmem:[%s1 + $0x21c] sm:$0xf]
      %v1813 = vld [vmem:[%s1 + $0x220] sm:$0xf]
      %v1814 = vld [vmem:[%s1 + $0x224] sm:$0xf]
      %v1815 = vld [vmem:[%s1 + $0x228] sm:$0xf]
      %v1816 = vld [vmem:[%s1 + $0x22c] sm:$0xf]
      %v1817 = vld [vmem:[%s1 + $0x230] sm:$0xf]
      %v1818 = vld [vmem:[%s1 + $0x234] sm:$0xf]
      %v1819 = vld [vmem:[%s1 + $0x238] sm:$0xf]
      %v1820 = vld [vmem:[%s1 + $0x23c] sm:$0xf]
      %v1965 = vunpack.c.l.b16 %v1677
      %v1966 = vunpack.c.l.b16 %v1678
      %v1967 = vunpack.c.l.b16 %v1679
      %v1968 = vunpack.c.l.b16 %v1680
      %v1969 = vunpack.c.l.b16 %v1681
      %v1970 = vunpack.c.l.b16 %v1682
      %v1971 = vunpack.c.l.b16 %v1683
      %v1972 = vunpack.c.l.b16 %v1684
      %v1973 = vunpack.c.l.b16 %v1685
      %v1974 = vunpack.c.l.b16 %v1686
      %v1975 = vunpack.c.l.b16 %v1687
      %v1976 = vunpack.c.l.b16 %v1688
      %v1977 = vunpack.c.l.b16 %v1689
      %v1978 = vunpack.c.l.b16 %v1690
      %v1979 = vunpack.c.l.b16 %v1691
      %v1980 = vunpack.c.l.b16 %v1692
      %v1981 = vunpack.c.l.b16 %v1693
      %v1982 = vunpack.c.l.b16 %v1694
      %v1983 = vunpack.c.l.b16 %v1695
      %v1984 = vunpack.c.l.b16 %v1696
      %v1985 = vunpack.c.l.b16 %v1697
      %v1986 = vunpack.c.l.b16 %v1698
      %v1987 = vunpack.c.l.b16 %v1699
      %v1988 = vunpack.c.l.b16 %v1700
      %v1989 = vunpack.c.l.b16 %v1701
      %v1990 = vunpack.c.l.b16 %v1702
      %v1991 = vunpack.c.l.b16 %v1703
      %v1992 = vunpack.c.l.b16 %v1704
      %v1993 = vunpack.c.l.b16 %v1705
      %v1994 = vunpack.c.l.b16 %v1706
      %v1995 = vunpack.c.l.b16 %v1707
      %v1996 = vunpack.c.l.b16 %v1708
      %v1997 = vunpack.c.l.b16 %v1709
      %v1998 = vunpack.c.l.b16 %v1710
      %v1999 = vunpack.c.l.b16 %v1711
      %v2000 = vunpack.c.l.b16 %v1712
      %v2001 = vunpack.c.l.b16 %v1713
      %v2002 = vunpack.c.l.b16 %v1714
      %v2003 = vunpack.c.l.b16 %v1715
      %v2004 = vunpack.c.l.b16 %v1716
      %v2005 = vunpack.c.l.b16 %v1717
      %v2006 = vunpack.c.l.b16 %v1718
      %v2007 = vunpack.c.l.b16 %v1719
      %v2008 = vunpack.c.l.b16 %v1720
      %v2009 = vunpack.c.l.b16 %v1721
      %v2010 = vunpack.c.l.b16 %v1722
      %v2011 = vunpack.c.l.b16 %v1723
      %v2012 = vunpack.c.l.b16 %v1724
      %v2013 = vunpack.c.l.b16 %v1725
      %v2014 = vunpack.c.l.b16 %v1726
      %v2015 = vunpack.c.l.b16 %v1727
      %v2016 = vunpack.c.l.b16 %v1728
      %v2017 = vunpack.c.l.b16 %v1729
      %v2018 = vunpack.c.l.b16 %v1730
      %v2019 = vunpack.c.l.b16 %v1731
      %v2020 = vunpack.c.l.b16 %v1732
      %v2021 = vunpack.c.l.b16 %v1733
      %v2022 = vunpack.c.l.b16 %v1734
      %v2023 = vunpack.c.l.b16 %v1735
      %v2024 = vunpack.c.l.b16 %v1736
      %v2025 = vunpack.c.l.b16 %v1737
      %v2026 = vunpack.c.l.b16 %v1738
      %v2027 = vunpack.c.l.b16 %v1739
      %v2028 = vunpack.c.l.b16 %v1740
      %v2029 = vunpack.c.l.b16 %v1741
      %v2030 = vunpack.c.l.b16 %v1742
      %v2031 = vunpack.c.l.b16 %v1743
      %v2032 = vunpack.c.l.b16 %v1744
      %v2033 = vunpack.c.l.b16 %v1745
      %v2034 = vunpack.c.l.b16 %v1746
      %v2035 = vunpack.c.l.b16 %v1747
      %v2036 = vunpack.c.l.b16 %v1748
      %v2037 = vunpack.c.l.b16 %v1749
      %v2038 = vunpack.c.l.b16 %v1750
      %v2039 = vunpack.c.l.b16 %v1751
      %v2040 = vunpack.c.l.b16 %v1752
      %v2041 = vunpack.c.l.b16 %v1753
      %v2042 = vunpack.c.l.b16 %v1754
      %v2043 = vunpack.c.l.b16 %v1755
      %v2044 = vunpack.c.l.b16 %v1756
      %v2045 = vunpack.c.l.b16 %v1757
      %v2046 = vunpack.c.l.b16 %v1758
      %v2047 = vunpack.c.l.b16 %v1759
      %v2048 = vunpack.c.l.b16 %v1760
      %v2049 = vunpack.c.l.b16 %v1761
      %v2050 = vunpack.c.l.b16 %v1762
      %v2051 = vunpack.c.l.b16 %v1763
      %v2052 = vunpack.c.l.b16 %v1764
      %v2053 = vunpack.c.l.b16 %v1765
      %v2054 = vunpack.c.l.b16 %v1766
      %v2055 = vunpack.c.l.b16 %v1767
      %v2056 = vunpack.c.l.b16 %v1768
      %v2057 = vunpack.c.l.b16 %v1769
      %v2058 = vunpack.c.l.b16 %v1770
      %v2059 = vunpack.c.l.b16 %v1771
      %v2060 = vunpack.c.l.b16 %v1772
      %v2061 = vunpack.c.l.b16 %v1773
      %v2062 = vunpack.c.l.b16 %v1774
      %v2063 = vunpack.c.l.b16 %v1775
      %v2064 = vunpack.c.l.b16 %v1776
      %v2065 = vunpack.c.l.b16 %v1777
      %v2066 = vunpack.c.l.b16 %v1778
      %v2067 = vunpack.c.l.b16 %v1779
      %v2068 = vunpack.c.l.b16 %v1780
      %v2069 = vunpack.c.l.b16 %v1781
      %v2070 = vunpack.c.l.b16 %v1782
      %v2071 = vunpack.c.l.b16 %v1783
      %v2072 = vunpack.c.l.b16 %v1784
      %v2073 = vunpack.c.l.b16 %v1785
      %v2074 = vunpack.c.l.b16 %v1786
      %v2075 = vunpack.c.l.b16 %v1787
      %v2076 = vunpack.c.l.b16 %v1788
      %v2077 = vunpack.c.l.b16 %v1789
      %v2078 = vunpack.c.l.b16 %v1790
      %v2079 = vunpack.c.l.b16 %v1791
      %v2080 = vunpack.c.l.b16 %v1792
      %v2081 = vunpack.c.l.b16 %v1793
      %v2082 = vunpack.c.l.b16 %v1794
      %v2083 = vunpack.c.l.b16 %v1795
      %v2084 = vunpack.c.l.b16 %v1796
      %v2085 = vunpack.c.l.b16 %v1797
      %v2086 = vunpack.c.l.b16 %v1798
      %v2087 = vunpack.c.l.b16 %v1799
      %v2088 = vunpack.c.l.b16 %v1800
      %v2089 = vunpack.c.l.b16 %v1801
      %v2090 = vunpack.c.l.b16 %v1802
      %v2091 = vunpack.c.l.b16 %v1803
      %v2092 = vunpack.c.l.b16 %v1804
      %v2093 = vunpack.c.l.b16 %v1805
      %v2094 = vunpack.c.l.b16 %v1806
      %v2095 = vunpack.c.l.b16 %v1807
      %v2096 = vunpack.c.l.b16 %v1808
      %v2097 = vunpack.c.l.b16 %v1809
      %v2098 = vunpack.c.l.b16 %v1810
      %v2099 = vunpack.c.l.b16 %v1811
      %v2100 = vunpack.c.l.b16 %v1812
      %v2101 = vunpack.c.l.b16 %v1813
      %v2102 = vunpack.c.l.b16 %v1814
      %v2103 = vunpack.c.l.b16 %v1815
      %v2104 = vunpack.c.l.b16 %v1816
      %v2105 = vunpack.c.l.b16 %v1817
      %v2106 = vunpack.c.l.b16 %v1818
      %v2107 = vunpack.c.l.b16 %v1819
      %v2108 = vunpack.c.l.b16 %v1820
      %v2109 = vpack.c.b16 %v1966, %v1965
      %v2110 = vpack.c.b16 %v1968, %v1967
      %v2111 = vpack.c.b16 %v1970, %v1969
      %v2112 = vpack.c.b16 %v1972, %v1971
      %v2113 = vpack.c.b16 %v1974, %v1973
      %v2114 = vpack.c.b16 %v1976, %v1975
      %v2115 = vpack.c.b16 %v1978, %v1977
      %v2116 = vpack.c.b16 %v1980, %v1979
      %v2117 = vpack.c.b16 %v1982, %v1981
      %v2118 = vpack.c.b16 %v1984, %v1983
      %v2119 = vpack.c.b16 %v1986, %v1985
      %v2120 = vpack.c.b16 %v1988, %v1987
      %v2121 = vpack.c.b16 %v1990, %v1989
      %v2122 = vpack.c.b16 %v1992, %v1991
      %v2123 = vpack.c.b16 %v1994, %v1993
      %v2124 = vpack.c.b16 %v1996, %v1995
      %v2125 = vpack.c.b16 %v1998, %v1997
      %v2126 = vpack.c.b16 %v2000, %v1999
      %v2127 = vpack.c.b16 %v2002, %v2001
      %v2128 = vpack.c.b16 %v2004, %v2003
      %v2129 = vpack.c.b16 %v2006, %v2005
      %v2130 = vpack.c.b16 %v2008, %v2007
      %v2131 = vpack.c.b16 %v2010, %v2009
      %v2132 = vpack.c.b16 %v2012, %v2011
      %v2133 = vpack.c.b16 %v2014, %v2013
      %v2134 = vpack.c.b16 %v2016, %v2015
      %v2135 = vpack.c.b16 %v2018, %v2017
      %v2136 = vpack.c.b16 %v2020, %v2019
      %v2137 = vpack.c.b16 %v2022, %v2021
      %v2138 = vpack.c.b16 %v2024, %v2023
      %v2139 = vpack.c.b16 %v2026, %v2025
      %v2140 = vpack.c.b16 %v2028, %v2027
      %v2141 = vpack.c.b16 %v2030, %v2029
      %v2142 = vpack.c.b16 %v2032, %v2031
      %v2143 = vpack.c.b16 %v2034, %v2033
      %v2144 = vpack.c.b16 %v2036, %v2035
      %v2145 = vpack.c.b16 %v2038, %v2037
      %v2146 = vpack.c.b16 %v2040, %v2039
      %v2147 = vpack.c.b16 %v2042, %v2041
      %v2148 = vpack.c.b16 %v2044, %v2043
      %v2149 = vpack.c.b16 %v2046, %v2045
      %v2150 = vpack.c.b16 %v2048, %v2047
      %v2151 = vpack.c.b16 %v2050, %v2049
      %v2152 = vpack.c.b16 %v2052, %v2051
      %v2153 = vpack.c.b16 %v2054, %v2053
      %v2154 = vpack.c.b16 %v2056, %v2055
      %v2155 = vpack.c.b16 %v2058, %v2057
      %v2156 = vpack.c.b16 %v2060, %v2059
      %v2157 = vpack.c.b16 %v2062, %v2061
      %v2158 = vpack.c.b16 %v2064, %v2063
      %v2159 = vpack.c.b16 %v2066, %v2065
      %v2160 = vpack.c.b16 %v2068, %v2067
      %v2161 = vpack.c.b16 %v2070, %v2069
      %v2162 = vpack.c.b16 %v2072, %v2071
      %v2163 = vpack.c.b16 %v2074, %v2073
      %v2164 = vpack.c.b16 %v2076, %v2075
      %v2165 = vpack.c.b16 %v2078, %v2077
      %v2166 = vpack.c.b16 %v2080, %v2079
      %v2167 = vpack.c.b16 %v2082, %v2081
      %v2168 = vpack.c.b16 %v2084, %v2083
      %v2169 = vpack.c.b16 %v2086, %v2085
      %v2170 = vpack.c.b16 %v2088, %v2087
      %v2171 = vpack.c.b16 %v2090, %v2089
      %v2172 = vpack.c.b16 %v2092, %v2091
      %v2173 = vpack.c.b16 %v2094, %v2093
      %v2174 = vpack.c.b16 %v2096, %v2095
      %v2175 = vpack.c.b16 %v2098, %v2097
      %v2176 = vpack.c.b16 %v2100, %v2099
      %v2177 = vpack.c.b16 %v2102, %v2101
      %v2178 = vpack.c.b16 %v2104, %v2103
      %v2179 = vpack.c.b16 %v2106, %v2105
      %v2180 = vpack.c.b16 %v2108, %v2107
      %2253 = vmatprep.subr.bf16.mxu0 0
      %2254 = vmatpush1.bf16.msra.mxu0 %v2109
      %2255 = vmatprep.subr.bf16.mxu0 0
      %2256 = vmatpush1.bf16.msra.mxu0 %v2110
      %2257 = vmatprep.subr.bf16.mxu0 0
      %2258 = vmatpush1.bf16.msra.mxu0 %v2111
      %2259 = vmatprep.subr.bf16.mxu0 0
      %2260 = vmatpush1.bf16.msra.mxu0 %v2112
      %2261 = vmatprep.subr.bf16.mxu0 0
      %2262 = vmatpush1.bf16.msra.mxu0 %v2113
      %2263 = vmatprep.subr.bf16.mxu0 0
      %2264 = vmatpush1.bf16.msra.mxu0 %v2114
      %2265 = vmatprep.subr.bf16.mxu0 0
      %2266 = vmatpush1.bf16.msra.mxu0 %v2115
      %2267 = vmatprep.subr.bf16.mxu0 0
      %2268 = vmatpush1.bf16.msra.mxu0 %v2116
      %2269 = vmatprep.subr.bf16.mxu0 0
      %2270 = vmatpush1.bf16.msra.mxu0 %v2117
      %2271 = vmatprep.subr.bf16.mxu0 0
      %2272 = vmatpush1.bf16.msra.mxu0 %v2118
      %2273 = vmatprep.subr.bf16.mxu0 0
      %2274 = vmatpush1.bf16.msra.mxu0 %v2119
      %2275 = vmatprep.subr.bf16.mxu0 0
      %2276 = vmatpush1.bf16.msra.mxu0 %v2120
      %2277 = vmatprep.subr.bf16.mxu0 0
      %2278 = vmatpush1.bf16.msra.mxu0 %v2121
      %2279 = vmatprep.subr.bf16.mxu0 0
      %2280 = vmatpush1.bf16.msra.mxu0 %v2122
      %2281 = vmatprep.subr.bf16.mxu0 0
      %2282 = vmatpush1.bf16.msra.mxu0 %v2123
      %2283 = vmatprep.subr.bf16.mxu0 0
      %2284 = vmatpush1.bf16.msra.mxu0 %v2124
      %2285 = vmatprep.mubr.bf16.mxu0 %v1605
      %2286 = vmatmul.mubr.bf16.gmra.mrb[0].mxu0 %v1573
      %v2287 = vpop.f32.mrb[0].mxu0
      %v2288 = vadd.f32 0.0, %v2287
      %v2289 = vpop.f32.mrb[0].mxu0
      %v2290 = vpop.f32.mrb[0].mxu0
      %v2291 = vadd.f32 0.0, %v2290
      %v2292 = vpop.f32.mrb[0].mxu0
      %2293 = vmatprep.mubr.bf16.mxu0 %v1606
      %2294 = vmatmul.mubr.bf16.gmra.mrb[0].mxu0 %v1574
      %v2295 = vpop.f32.mrb[0].mxu0
      %v2296 = vadd.f32 0.0, %v2295
      %v2297 = vpop.f32.mrb[0].mxu0
      %v2298 = vpop.f32.mrb[0].mxu0
      %v2299 = vadd.f32 0.0, %v2298
      %v2300 = vpop.f32.mrb[0].mxu0
      %2301 = vmatprep.mubr.bf16.mxu0 %v1607
      %2302 = vmatmul.mubr.bf16.gmra.mrb[0].mxu0 %v1575
      %v2303 = vpop.f32.mrb[0].mxu0
      %v2304 = vadd.f32 0.0, %v2303
      %v2305 = vpop.f32.mrb[0].mxu0
      %v2306 = vpop.f32.mrb[0].mxu0
      %v2307 = vadd.f32 0.0, %v2306
      %v2308 = vpop.f32.mrb[0].mxu0
      %2309 = vmatprep.mubr.bf16.mxu0 %v1608
      %2310 = vmatmul.mubr.bf16.gmra.mrb[0].mxu0 %v1576
      %v2311 = vpop.f32.mrb[0].mxu0
      %v2312 = vadd.f32 0.0, %v2311
      %v2313 = vpop.f32.mrb[0].mxu0
      %v2314 = vpop.f32.mrb[0].mxu0
      %v2315 = vadd.f32 0.0, %v2314
      %v2316 = vpop.f32.mrb[0].mxu0
      %2317 = vmatprep.mubr.bf16.mxu0 %v1609
      %2318 = vmatmul.mubr.bf16.gmra.mrb[0].mxu0 %v1577
      %v2319 = vpop.f32.mrb[0].mxu0
      %v2320 = vadd.f32 0.0, %v2319
      %v2321 = vpop.f32.mrb[0].mxu0
      %v2322 = vpop.f32.mrb[0].mxu0
      %v2323 = vadd.f32 0.0, %v2322
      %v2324 = vpop.f32.mrb[0].mxu0
      %2325 = vmatprep.mubr.bf16.mxu0 %v1610
      %2326 = vmatmul.mubr.bf16.gmra.mrb[0].mxu0 %v1578
      %v2327 = vpop.f32.mrb[0].mxu0
      %v2328 = vadd.f32 0.0, %v2327
      %v2329 = vpop.f32.mrb[0].mxu0
      %v2330 = vpop.f32.mrb[0].mxu0
      %v2331 = vadd.f32 0.0, %v2330
      %v2332 = vpop.f32.mrb[0].mxu0
      %2333 = vmatprep.mubr.bf16.mxu0 %v1611
      %2334 = vmatmul.mubr.bf16.gmra.mrb[0].mxu0 %v1579
      %v2335 = vpop.f32.mrb[0].mxu0
      %v2336 = vadd.f32 0.0, %v2335
      %v2337 = vpop.f32.mrb[0].mxu0
      %v2338 = vpop.f32.mrb[0].mxu0
      %v2339 = vadd.f32 0.0, %v2338
      %v2340 = vpop.f32.mrb[0].mxu0
      %2341 = vmatprep.mubr.bf16.mxu0 %v1612
      %2342 = vmatmul.mubr.bf16.gmra.mrb[0].mxu0 %v1580
      %v2343 = vpop.f32.mrb[0].mxu0
      %v2344 = vadd.f32 0.0, %v2343
      %v2345 = vpop.f32.mrb[0].mxu0
      %v2346 = vpop.f32.mrb[0].mxu0
      %v2347 = vadd.f32 0.0, %v2346
      %v2348 = vpop.f32.mrb[0].mxu0
      %2349 = vdwg.mxu0
      %2350 = vmatprep.subr.bf16.mxu0 0
      %2351 = vmatpush1.bf16.msra.mxu0 %v2125
      %2352 = vmatprep.subr.bf16.mxu0 0
      %2353 = vmatpush1.bf16.msra.mxu0 %v2126
      %2354 = vmatprep.subr.bf16.mxu0 0
      %2355 = vmatpush1.bf16.msra.mxu0 %v2127
      %2356 = vmatprep.subr.bf16.mxu0 0
      %2357 = vmatpush1.bf16.msra.mxu0 %v2128
      %2358 = vmatprep.subr.bf16.mxu0 0
      %2359 = vmatpush1.bf16.msra.mxu0 %v2129
      %2360 = vmatprep.subr.bf16.mxu0 0
      %2361 = vmatpush1.bf16.msra.mxu0 %v2130
      %2362 = vmatprep.subr.bf16.mxu0 0
      %2363 = vmatpush1.bf16.msra.mxu0 %v2131
      %2364 = vmatprep.subr.bf16.mxu0 0
      %2365 = vmatpush1.bf16.msra.mxu0 %v2132
      %2366 = vmatprep.subr.bf16.mxu0 0
      %2367 = vmatpush1.bf16.msra.mxu0 %v2133
      %2368 = vmatprep.subr.bf16.mxu0 0
      %2369 = vmatpush1.bf16.msra.mxu0 %v2134
      %2370 = vmatprep.subr.bf16.mxu0 0
      %2371 = vmatpush1.bf16.msra.mxu0 %v2135
      %2372 = vmatprep.subr.bf16.mxu0 0
      %2373 = vmatpush1.bf16.msra.mxu0 %v2136
      %2374 = vmatprep.subr.bf16.mxu0 0
      %2375 = vmatpush1.bf16.msra.mxu0 %v2137
      %2376 = vmatprep.subr.bf16.mxu0 0
      %2377 = vmatpush1.bf16.msra.mxu0 %v2138
      %2378 = vmatprep.subr.bf16.mxu0 0
      %2379 = vmatpush1.bf16.msra.mxu0 %v2139
      %2380 = vmatprep.subr.bf16.mxu0 0
      %2381 = vmatpush1.bf16.msra.mxu0 %v2140
      %2382 = vmatprep.mubr.bf16.mxu0 %v1574
      %2383 = vmatmul.mubr.bf16.gmra.mrb[0].mxu0 %v1637
      %v2384 = vpop.f32.mrb[0].mxu0
      %v2385 = vadd.f32 %v2288, %v2384
      %v2386 = vpop.f32.mrb[0].mxu0
      %v2387 = vpop.f32.mrb[0].mxu0
      %v2388 = vadd.f32 %v2291, %v2387
      %v2389 = vpop.f32.mrb[0].mxu0
      %2390 = vmatprep.mubr.bf16.mxu0 %v1575
      %2391 = vmatmul.mubr.bf16.gmra.mrb[0].mxu0 %v1638
      %v2392 = vpop.f32.mrb[0].mxu0
      %v2393 = vadd.f32 %v2296, %v2392
      %v2394 = vpop.f32.mrb[0].mxu0
      %v2395 = vpop.f32.mrb[0].mxu0
      %v2396 = vadd.f32 %v2299, %v2395
      %v2397 = vpop.f32.mrb[0].mxu0
      %2398 = vmatprep.mubr.bf16.mxu0 %v1576
      %2399 = vmatmul.mubr.bf16.gmra.mrb[0].mxu0 %v1639
      %v2400 = vpop.f32.mrb[0].mxu0
      %v2401 = vadd.f32 %v2304, %v2400
      %v2402 = vpop.f32.mrb[0].mxu0
      %v2403 = vpop.f32.mrb[0].mxu0
      %v2404 = vadd.f32 %v2307, %v2403
      %v2405 = vpop.f32.mrb[0].mxu0
      %2406 = vmatprep.mubr.bf16.mxu0 %v1577
      %2407 = vmatmul.mubr.bf16.gmra.mrb[0].mxu0 %v1640
      %v2408 = vpop.f32.mrb[0].mxu0
      %v2409 = vadd.f32 %v2312, %v2408
      %v2410 = vpop.f32.mrb[0].mxu0
      %v2411 = vpop.f32.mrb[0].mxu0
      %v2412 = vadd.f32 %v2315, %v2411
      %v2413 = vpop.f32.mrb[0].mxu0
      %2414 = vmatprep.mubr.bf16.mxu0 %v1578
      %2415 = vmatmul.mubr.bf16.gmra.mrb[0].mxu0 %v1641
      %v2416 = vpop.f32.mrb[0].mxu0
      %v2417 = vadd.f32 %v2320, %v2416
      %v2418 = vpop.f32.mrb[0].mxu0
      %v2419 = vpop.f32.mrb[0].mxu0
      %v2420 = vadd.f32 %v2323, %v2419
      %v2421 = vpop.f32.mrb[0].mxu0
      %2422 = vmatprep.mubr.bf16.mxu0 %v1579
      %2423 = vmatmul.mubr.bf16.gmra.mrb[0].mxu0 %v1642
      %v2424 = vpop.f32.mrb[0].mxu0
      %v2425 = vadd.f32 %v2328, %v2424
      %v2426 = vpop.f32.mrb[0].mxu0
      %v2427 = vpop.f32.mrb[0].mxu0
      %v2428 = vadd.f32 %v2331, %v2427
      %v2429 = vpop.f32.mrb[0].mxu0
      %2430 = vmatprep.mubr.bf16.mxu0 %v1580
      %2431 = vmatmul.mubr.bf16.gmra.mrb[0].mxu0 %v1643
      %v2432 = vpop.f32.mrb[0].mxu0
      %v2433 = vadd.f32 %v2336, %v2432
      %v2434 = vpop.f32.mrb[0].mxu0
      %v2435 = vpop.f32.mrb[0].mxu0
      %v2436 = vadd.f32 %v2339, %v2435
      %v2437 = vpop.f32.mrb[0].mxu0
      %2438 = vmatprep.mubr.bf16.mxu0 %v1655
      %2439 = vmatmul.mubr.bf16.gmra.mrb[0].mxu0 %v1644
      %v2440 = vpop.f32.mrb[0].mxu0
      %v2441 = vadd.f32 %v2344, %v2440
      %v2442 = vpop.f32.mrb[0].mxu0
      %v2443 = vpop.f32.mrb[0].mxu0
      %v2444 = vadd.f32 %v2347, %v2443
      %v2445 = vpop.f32.mrb[0].mxu0
      %2446 = vdwg.mxu0
      %2447 = vmatprep.subr.bf16.mxu0 0
      %2448 = vmatpush1.bf16.msra.mxu0 %v2141
      %2449 = vmatprep.subr.bf16.mxu0 0
      %2450 = vmatpush1.bf16.msra.mxu0 %v2142
      %2451 = vmatprep.subr.bf16.mxu0 0
      %2452 = vmatpush1.bf16.msra.mxu0 %v2143
      %2453 = vmatprep.subr.bf16.mxu0 0
      %2454 = vmatpush1.bf16.msra.mxu0 %v2144
      %2455 = vmatprep.subr.bf16.mxu0 0
      %2456 = vmatpush1.bf16.msra.mxu0 %v2145
      %2457 = vmatprep.subr.bf16.mxu0 0
      %2458 = vmatpush1.bf16.msra.mxu0 %v2146
      %2459 = vmatprep.subr.bf16.mxu0 0
      %2460 = vmatpush1.bf16.msra.mxu0 %v2147
      %2461 = vmatprep.subr.bf16.mxu0 0
      %2462 = vmatpush1.bf16.msra.mxu0 %v2148
      %2463 = vmatprep.subr.bf16.mxu0 0
      %2464 = vmatpush1.bf16.msra.mxu0 %v2149
      %2465 = vmatprep.subr.bf16.mxu0 0
      %2466 = vmatpush1.bf16.msra.mxu0 %v2150
      %2467 = vmatprep.subr.bf16.mxu0 0
      %2468 = vmatpush1.bf16.msra.mxu0 %v2151
      %2469 = vmatprep.subr.bf16.mxu0 0
      %2470 = vmatpush1.bf16.msra.mxu0 %v2152
      %2471 = vmatprep.subr.bf16.mxu0 0
      %2472 = vmatpush1.bf16.msra.mxu0 %v2153
      %2473 = vmatprep.subr.bf16.mxu0 0
      %2474 = vmatpush1.bf16.msra.mxu0 %v2154
      %2475 = vmatprep.subr.bf16.mxu0 0
      %2476 = vmatpush1.bf16.msra.mxu0 %v2155
      %2477 = vmatprep.subr.bf16.mxu0 0
      %2478 = vmatpush1.bf16.msra.mxu0 %v2156
      %2479 = vmatprep.mubr.bf16.mxu0 %v1638
      %2480 = vmatmul.mubr.bf16.gmra.mrb[0].mxu0 %v1606
      %v2481 = vpop.f32.mrb[0].mxu0
      %v2482 = vadd.f32 %v2385, %v2481
      %v2483 = vpop.f32.mrb[0].mxu0
      %v2484 = vpop.f32.mrb[0].mxu0
      %v2485 = vadd.f32 %v2388, %v2484
      %v2486 = vpop.f32.mrb[0].mxu0
      %2487 = vmatprep.mubr.bf16.mxu0 %v1639
      %2488 = vmatmul.mubr.bf16.gmra.mrb[0].mxu0 %v1607
      %v2489 = vpop.f32.mrb[0].mxu0
      %v2490 = vadd.f32 %v2393, %v2489
      %v2491 = vpop.f32.mrb[0].mxu0
      %v2492 = vpop.f32.mrb[0].mxu0
      %v2493 = vadd.f32 %v2396, %v2492
      %v2494 = vpop.f32.mrb[0].mxu0
      %2495 = vmatprep.mubr.bf16.mxu0 %v1640
      %2496 = vmatmul.mubr.bf16.gmra.mrb[0].mxu0 %v1608
      %v2497 = vpop.f32.mrb[0].mxu0
      %v2498 = vadd.f32 %v2401, %v2497
      %v2499 = vpop.f32.mrb[0].mxu0
      %v2500 = vpop.f32.mrb[0].mxu0
      %v2501 = vadd.f32 %v2404, %v2500
      %v2502 = vpop.f32.mrb[0].mxu0
      %2503 = vmatprep.mubr.bf16.mxu0 %v1641
      %2504 = vmatmul.mubr.bf16.gmra.mrb[0].mxu0 %v1609
      %v2505 = vpop.f32.mrb[0].mxu0
      %v2506 = vadd.f32 %v2409, %v2505
      %v2507 = vpop.f32.mrb[0].mxu0
      %v2508 = vpop.f32.mrb[0].mxu0
      %v2509 = vadd.f32 %v2412, %v2508
      %v2510 = vpop.f32.mrb[0].mxu0
      %2511 = vmatprep.mubr.bf16.mxu0 %v1642
      %2512 = vmatmul.mubr.bf16.gmra.mrb[0].mxu0 %v1610
      %v2513 = vpop.f32.mrb[0].mxu0
      %v2514 = vadd.f32 %v2417, %v2513
      %v2515 = vpop.f32.mrb[0].mxu0
      %v2516 = vpop.f32.mrb[0].mxu0
      %v2517 = vadd.f32 %v2420, %v2516
      %v2518 = vpop.f32.mrb[0].mxu0
      %2519 = vmatprep.mubr.bf16.mxu0 %v1643
      %2520 = vmatmul.mubr.bf16.gmra.mrb[0].mxu0 %v1611
      %v2521 = vpop.f32.mrb[0].mxu0
      %v2522 = vadd.f32 %v2425, %v2521
      %v2523 = vpop.f32.mrb[0].mxu0
      %v2524 = vpop.f32.mrb[0].mxu0
      %v2525 = vadd.f32 %v2428, %v2524
      %v2526 = vpop.f32.mrb[0].mxu0
      %2527 = vmatprep.mubr.bf16.mxu0 %v1644
      %2528 = vmatmul.mubr.bf16.gmra.mrb[0].mxu0 %v1612
      %v2529 = vpop.f32.mrb[0].mxu0
      %v2530 = vadd.f32 %v2433, %v2529
      %v2531 = vpop.f32.mrb[0].mxu0
      %v2532 = vpop.f32.mrb[0].mxu0
      %v2533 = vadd.f32 %v2436, %v2532
      %v2534 = vpop.f32.mrb[0].mxu0
      %2535 = vmatprep.mubr.bf16.mxu0 %v1663
      %2536 = vmatmul.mubr.bf16.gmra.mrb[0].mxu0 %v1659
      %v2537 = vpop.f32.mrb[0].mxu0
      %v2538 = vadd.f32 %v2441, %v2537
      %v2539 = vpop.f32.mrb[0].mxu0
      %v2540 = vpop.f32.mrb[0].mxu0
      %v2541 = vadd.f32 %v2444, %v2540
      %v2542 = vpop.f32.mrb[0].mxu0
      %2543 = vdwg.mxu0
      %2544 = vmatprep.subr.bf16.mxu0 0
      %2545 = vmatpush1.bf16.msra.mxu0 %v2157
      %2546 = vmatprep.subr.bf16.mxu0 0
      %2547 = vmatpush1.bf16.msra.mxu0 %v2158
      %2548 = vmatprep.subr.bf16.mxu0 0
      %2549 = vmatpush1.bf16.msra.mxu0 %v2159
      %2550 = vmatprep.subr.bf16.mxu0 0
      %2551 = vmatpush1.bf16.msra.mxu0 %v2160
      %2552 = vmatprep.subr.bf16.mxu0 0
      %2553 = vmatpush1.bf16.msra.mxu0 %v2161
      %2554 = vmatprep.subr.bf16.mxu0 0
      %2555 = vmatpush1.bf16.msra.mxu0 %v2162
      %2556 = vmatprep.subr.bf16.mxu0 0
      %2557 = vmatpush1.bf16.msra.mxu0 %v2163
      %2558 = vmatprep.subr.bf16.mxu0 0
      %2559 = vmatpush1.bf16.msra.mxu0 %v2164
      %2560 = vmatprep.subr.bf16.mxu0 0
      %2561 = vmatpush1.bf16.msra.mxu0 %v2165
      %2562 = vmatprep.subr.bf16.mxu0 0
      %2563 = vmatpush1.bf16.msra.mxu0 %v2166
      %2564 = vmatprep.subr.bf16.mxu0 0
      %2565 = vmatpush1.bf16.msra.mxu0 %v2167
      %2566 = vmatprep.subr.bf16.mxu0 0
      %2567 = vmatpush1.bf16.msra.mxu0 %v2168
      %2568 = vmatprep.subr.bf16.mxu0 0
      %2569 = vmatpush1.bf16.msra.mxu0 %v2169
      %2570 = vmatprep.subr.bf16.mxu0 0
      %2571 = vmatpush1.bf16.msra.mxu0 %v2170
      %2572 = vmatprep.subr.bf16.mxu0 0
      %2573 = vmatpush1.bf16.msra.mxu0 %v2171
      %2574 = vmatprep.subr.bf16.mxu0 0
      %2575 = vmatpush1.bf16.msra.mxu0 %v2172
      %2576 = vmatprep.mubr.bf16.mxu0 %v1607
      %2577 = vmatmul.mubr.bf16.gmra.mrb[0].mxu0 %v1575
      %v2578 = vpop.f32.mrb[0].mxu0
      %v2579 = vadd.f32 %v2482, %v2578
      %v2580 = vpop.f32.mrb[0].mxu0
      %v2581 = vpop.f32.mrb[0].mxu0
      %v2582 = vadd.f32 %v2485, %v2581
      %v2583 = vpop.f32.mrb[0].mxu0
      %2584 = vmatprep.mubr.bf16.mxu0 %v1608
      %2585 = vmatmul.mubr.bf16.gmra.mrb[0].mxu0 %v1576
      %v2586 = vpop.f32.mrb[0].mxu0
      %v2587 = vadd.f32 %v2490, %v2586
      %v2588 = vpop.f32.mrb[0].mxu0
      %v2589 = vpop.f32.mrb[0].mxu0
      %v2590 = vadd.f32 %v2493, %v2589
      %v2591 = vpop.f32.mrb[0].mxu0
      %2592 = vmatprep.mubr.bf16.mxu0 %v1609
      %2593 = vmatmul.mubr.bf16.gmra.mrb[0].mxu0 %v1577
      %v2594 = vpop.f32.mrb[0].mxu0
      %v2595 = vadd.f32 %v2498, %v2594
      %v2596 = vpop.f32.mrb[0].mxu0
      %v2597 = vpop.f32.mrb[0].mxu0
      %v2598 = vadd.f32 %v2501, %v2597
      %v2599 = vpop.f32.mrb[0].mxu0
      %2600 = vmatprep.mubr.bf16.mxu0 %v1610
      %2601 = vmatmul.mubr.bf16.gmra.mrb[0].mxu0 %v1578
      %v2602 = vpop.f32.mrb[0].mxu0
      %v2603 = vadd.f32 %v2506, %v2602
      %v2604 = vpop.f32.mrb[0].mxu0
      %v2605 = vpop.f32.mrb[0].mxu0
      %v2606 = vadd.f32 %v2509, %v2605
      %v2607 = vpop.f32.mrb[0].mxu0
      %2608 = vmatprep.mubr.bf16.mxu0 %v1611
      %2609 = vmatmul.mubr.bf16.gmra.mrb[0].mxu0 %v1579
      %v2610 = vpop.f32.mrb[0].mxu0
      %v2611 = vadd.f32 %v2514, %v2610
      %v2612 = vpop.f32.mrb[0].mxu0
      %v2613 = vpop.f32.mrb[0].mxu0
      %v2614 = vadd.f32 %v2517, %v2613
      %v2615 = vpop.f32.mrb[0].mxu0
      %2616 = vmatprep.mubr.bf16.mxu0 %v1612
      %2617 = vmatmul.mubr.bf16.gmra.mrb[0].mxu0 %v1580
      %v2618 = vpop.f32.mrb[0].mxu0
      %v2619 = vadd.f32 %v2522, %v2618
      %v2620 = vpop.f32.mrb[0].mxu0
      %v2621 = vpop.f32.mrb[0].mxu0
      %v2622 = vadd.f32 %v2525, %v2621
      %v2623 = vpop.f32.mrb[0].mxu0
      %2624 = vmatprep.mubr.bf16.mxu0 %v1659
      %2625 = vmatmul.mubr.bf16.gmra.mrb[0].mxu0 %v1655
      %v2626 = vpop.f32.mrb[0].mxu0
      %v2627 = vadd.f32 %v2530, %v2626
      %v2628 = vpop.f32.mrb[0].mxu0
      %v2629 = vpop.f32.mrb[0].mxu0
      %v2630 = vadd.f32 %v2533, %v2629
      %v2631 = vpop.f32.mrb[0].mxu0
      %2632 = vmatprep.mubr.bf16.mxu0 %v1671
      %2633 = vmatmul.mubr.bf16.gmra.mrb[0].mxu0 %v1667
      %v2634 = vpop.f32.mrb[0].mxu0
      %v2635 = vadd.f32 %v2538, %v2634
      %v2636 = vpop.f32.mrb[0].mxu0
      %v2637 = vpop.f32.mrb[0].mxu0
      %v2638 = vadd.f32 %v2541, %v2637
      %v2639 = vpop.f32.mrb[0].mxu0
      %2640 = vdwg.mxu0
      %2641 = vmatprep.subr.bf16.mxu0 0
      %2642 = vmatpush1.bf16.msra.mxu0 %v2173
      %2643 = vmatprep.subr.bf16.mxu0 0
      %2644 = vmatpush1.bf16.msra.mxu0 %v2174
      %2645 = vmatprep.subr.bf16.mxu0 0
      %2646 = vmatpush1.bf16.msra.mxu0 %v2175
      %2647 = vmatprep.subr.bf16.mxu0 0
      %2648 = vmatpush1.bf16.msra.mxu0 %v2176
      %2649 = vmatprep.subr.bf16.mxu0 0
      %2650 = vmatpush1.bf16.msra.mxu0 %v2177
      %2651 = vmatprep.subr.bf16.mxu0 0
      %2652 = vmatpush1.bf16.msra.mxu0 %v2178
      %2653 = vmatprep.subr.bf16.mxu0 0
      %2654 = vmatpush1.bf16.msra.mxu0 %v2179
      %2655 = vmatprep.subr.bf16.mxu0 0
      %2656 = vmatpush1.bf16.msra.mxu0 %v2180
      %2657 = vmatprep.subr.bf16.mxu0 0
      %2658 = vmatpush1.bf16.msra.mxu0 0
      %2659 = vmatprep.subr.bf16.mxu0 0
      %2660 = vmatpush1.bf16.msra.mxu0 0
      %2661 = vmatprep.subr.bf16.mxu0 0
      %2662 = vmatpush1.bf16.msra.mxu0 0
      %2663 = vmatprep.subr.bf16.mxu0 0
      %2664 = vmatpush1.bf16.msra.mxu0 0
      %2665 = vmatprep.subr.bf16.mxu0 0
      %2666 = vmatpush1.bf16.msra.mxu0 0
      %2667 = vmatprep.subr.bf16.mxu0 0
      %2668 = vmatpush1.bf16.msra.mxu0 0
      %2669 = vmatprep.subr.bf16.mxu0 0
      %2670 = vmatpush1.bf16.msra.mxu0 0
      %2671 = vmatprep.subr.bf16.mxu0 0
      %2672 = vmatpush1.bf16.msra.mxu0 0
      %2673 = vmatprep.mubr.bf16.mxu0 0
      %2674 = vmatmul.mubr.bf16.gmra.mrb[0].mxu0 %v1639
      %v2675 = vpop.f32.mrb[0].mxu0
      %v2676 = vadd.f32 %v2579, %v2675
      %v2677 = vpop.f32.mrb[0].mxu0
      %v2678 = vpop.f32.mrb[0].mxu0
      %v2679 = vadd.f32 %v2582, %v2678
      %v2680 = vpop.f32.mrb[0].mxu0
      %2681 = vmatprep.mubr.bf16.mxu0 0
      %2682 = vmatmul.mubr.bf16.gmra.mrb[0].mxu0 %v1640
      %v2683 = vpop.f32.mrb[0].mxu0
      %v2684 = vadd.f32 %v2587, %v2683
      %v2685 = vpop.f32.mrb[0].mxu0
      %v2686 = vpop.f32.mrb[0].mxu0
      %v2687 = vadd.f32 %v2590, %v2686
      %v2688 = vpop.f32.mrb[0].mxu0
      %2689 = vmatprep.mubr.bf16.mxu0 0
      %2690 = vmatmul.mubr.bf16.gmra.mrb[0].mxu0 %v1641
      %v2691 = vpop.f32.mrb[0].mxu0
      %v2692 = vadd.f32 %v2595, %v2691
      %v2693 = vpop.f32.mrb[0].mxu0
      %v2694 = vpop.f32.mrb[0].mxu0
      %v2695 = vadd.f32 %v2598, %v2694
      %v2696 = vpop.f32.mrb[0].mxu0
      %2697 = vmatprep.mubr.bf16.mxu0 0
      %2698 = vmatmul.mubr.bf16.gmra.mrb[0].mxu0 %v1642
      %v2699 = vpop.f32.mrb[0].mxu0
      %v2700 = vadd.f32 %v2603, %v2699
      %v2701 = vpop.f32.mrb[0].mxu0
      %v2702 = vpop.f32.mrb[0].mxu0
      %v2703 = vadd.f32 %v2606, %v2702
      %v2704 = vpop.f32.mrb[0].mxu0
      %2705 = vmatprep.mubr.bf16.mxu0 0
      %2706 = vmatmul.mubr.bf16.gmra.mrb[0].mxu0 %v1643
      %v2707 = vpop.f32.mrb[0].mxu0
      %v2708 = vadd.f32 %v2611, %v2707
      %v2709 = vpop.f32.mrb[0].mxu0
      %v2710 = vpop.f32.mrb[0].mxu0
      %v2711 = vadd.f32 %v2614, %v2710
      %v2712 = vpop.f32.mrb[0].mxu0
      %2713 = vmatprep.mubr.bf16.mxu0 0
      %2714 = vmatmul.mubr.bf16.gmra.mrb[0].mxu0 %v1644
      %v2715 = vpop.f32.mrb[0].mxu0
      %v2716 = vadd.f32 %v2619, %v2715
      %v2717 = vpop.f32.mrb[0].mxu0
      %v2718 = vpop.f32.mrb[0].mxu0
      %v2719 = vadd.f32 %v2622, %v2718
      %v2720 = vpop.f32.mrb[0].mxu0
      %2721 = vmatprep.mubr.bf16.mxu0 0
      %2722 = vmatmul.mubr.bf16.gmra.mrb[0].mxu0 %v1663
      %v2723 = vpop.f32.mrb[0].mxu0
      %v2724 = vadd.f32 %v2627, %v2723
      %v2725 = vpop.f32.mrb[0].mxu0
      %v2726 = vpop.f32.mrb[0].mxu0
      %v2727 = vadd.f32 %v2630, %v2726
      %v2728 = vpop.f32.mrb[0].mxu0
      %2729 = vmatprep.mubr.bf16.mxu0 0
      %2730 = vmatmul.mubr.bf16.gmra.mrb[0].mxu0 %v1675
      %v2731 = vpop.f32.mrb[0].mxu0
      %v2732 = vadd.f32 %v2635, %v2731
      %v2733 = vpop.f32.mrb[0].mxu0
      %v2734 = vpop.f32.mrb[0].mxu0
      %v2735 = vadd.f32 %v2638, %v2734
      %v2736 = vpop.f32.mrb[0].mxu0
      %2737 = vdwg.mxu0
      %2738 = vst [vmem:[%s300] sm:$0xff] %v2676
      %2739 = vst [vmem:[%s300 + $0x8] sm:$0xff] %v2679
      %2740 = vst [vmem:[%s300 + $0x10] sm:$0xff] %v2684
      %2741 = vst [vmem:[%s300 + $0x18] sm:$0xff] %v2687
      %2742 = vst [vmem:[%s300 + $0x20] sm:$0xff] %v2692
      %2743 = vst [vmem:[%s300 + $0x28] sm:$0xff] %v2695
      %2744 = vst [vmem:[%s300 + $0x30] sm:$0xff] %v2700
      %2745 = vst [vmem:[%s300 + $0x38] sm:$0xff] %v2703
      %2746 = vst [vmem:[%s300 + $0x40] sm:$0xff] %v2708
      %2747 = vst [vmem:[%s300 + $0x48] sm:$0xff] %v2711
      %2748 = vst [vmem:[%s300 + $0x50] sm:$0xff] %v2716
      %2749 = vst [vmem:[%s300 + $0x58] sm:$0xff] %v2719
      %2750 = vst [vmem:[%s300 + $0x60] sm:$0xff] %v2724
      %2751 = vst [vmem:[%s300 + $0x68] sm:$0xff] %v2727
      %2752 = vst [vmem:[%s300 + $0x70] sm:$0xff] %v2732
      %2753 = vst [vmem:[%s300 + $0x78] sm:$0xff] %v2735
      %v2754 = vadd.f32 %v2676, %v2679
      %v2755 = vadd.f32 %v2754, %v2684
      %v2756 = vadd.f32 %v2755, %v2687
      %v2757 = vadd.f32 %v2756, %v2692
      %v2758 = vadd.f32 %v2757, %v2695
      %v2759 = vadd.f32 %v2758, %v2700
      %v2760 = vadd.f32 %v2759, %v2703
      %v2761 = vadd.f32 %v2760, %v2708
      %v2762 = vadd.f32 %v2761, %v2711
      %v2763 = vadd.f32 %v2762, %v2716
      %v2764 = vadd.f32 %v2763, %v2719
      %v2765 = vadd.f32 %v2764, %v2724
      %v2766 = vadd.f32 %v2765, %v2727
      %v2767 = vadd.f32 %v2766, %v2732
      %v2768 = vadd.f32 %v2767, %v2735
      %v2769 = vrot.slane %v2768, 4
      %v2770 = vadd.f32 %v2768, %v2769
      %v2771 = vrot.slane %v2770, 2
      %v2772 = vadd.f32 %v2770, %v2771
      %v2773 = vrot.slane %v2772, 1
      %v2774 = vadd.f32 %v2772, %v2773
      %v2775 = vmul.f32 %v2774, 0.0078125
      %v2776 = vsub.f32 %v2676, %v2775
      %v2777 = vsub.f32 %v2679, %v2775
      %v2778 = vsub.f32 %v2684, %v2775
      %v2779 = vsub.f32 %v2687, %v2775
      %v2780 = vsub.f32 %v2692, %v2775
      %v2781 = vsub.f32 %v2695, %v2775
      %v2782 = vsub.f32 %v2700, %v2775
      %v2783 = vsub.f32 %v2703, %v2775
      %v2784 = vsub.f32 %v2708, %v2775
      %v2785 = vsub.f32 %v2711, %v2775
      %v2786 = vsub.f32 %v2716, %v2775
      %v2787 = vsub.f32 %v2719, %v2775
      %v2788 = vsub.f32 %v2724, %v2775
      %v2789 = vsub.f32 %v2727, %v2775
      %v2790 = vsub.f32 %v2732, %v2775
      %v2791 = vsub.f32 %v2735, %v2775
      %v2792 = vmul.f32 %v2776, %v2776
      %v2793 = vmul.f32 %v2777, %v2777
      %v2794 = vmul.f32 %v2778, %v2778
      %v2795 = vmul.f32 %v2779, %v2779
      %v2796 = vmul.f32 %v2780, %v2780
      %v2797 = vmul.f32 %v2781, %v2781
      %v2798 = vmul.f32 %v2782, %v2782
      %v2799 = vmul.f32 %v2783, %v2783
      %v2800 = vmul.f32 %v2784, %v2784
      %v2801 = vmul.f32 %v2785, %v2785
      %v2802 = vmul.f32 %v2786, %v2786
      %v2803 = vmul.f32 %v2787, %v2787
      %v2804 = vmul.f32 %v2788, %v2788
      %v2805 = vmul.f32 %v2789, %v2789
      %v2806 = vmul.f32 %v2790, %v2790
      %v2807 = vmul.f32 %v2791, %v2791
      %v2808 = vadd.f32 %v2792, %v2793
      %v2809 = vadd.f32 %v2808, %v2794
      %v2810 = vadd.f32 %v2809, %v2795
      %v2811 = vadd.f32 %v2810, %v2796
      %v2812 = vadd.f32 %v2811, %v2797
      %v2813 = vadd.f32 %v2812, %v2798
      %v2814 = vadd.f32 %v2813, %v2799
      %v2815 = vadd.f32 %v2814, %v2800
      %v2816 = vadd.f32 %v2815, %v2801
      %v2817 = vadd.f32 %v2816, %v2802
      %v2818 = vadd.f32 %v2817, %v2803
      %v2819 = vadd.f32 %v2818, %v2804
      %v2820 = vadd.f32 %v2819, %v2805
      %v2821 = vadd.f32 %v2820, %v2806
      %v2822 = vadd.f32 %v2821, %v2807
      %v2823 = vrot.slane %v2822, 4
      %v2824 = vadd.f32 %v2822, %v2823
      %v2825 = vrot.slane %v2824, 2
      %v2826 = vadd.f32 %v2824, %v2825
      %v2827 = vrot.slane %v2826, 1
      %v2828 = vadd.f32 %v2826, %v2827
      %2829 = vst [vmem:[%s309] sm:$0xff] %v2774
      %2830 = vst [vmem:[%s317] sm:$0xff] %v2828
      %s2831 = smul.u32 8, %s23
      %p2832 = scmp.lt.s32.totalorder %s22, 1
      %s2833 = scalar_select %p2832, %s22, 1
      %p2834 = scmp.lt.s32.totalorder %s2831, 15
      %s2835 = scalar_select %p2834, %s2831, 15
      %s2836 = smul.addr %s2835, 2
      %s2837 = smul.addr %s2833, 32
      %s2838 = sadd.s32 %s2836, %s2837
      %s2839 = smul.addr %s2838, 8
      %s2840 = scalar_lea.vmem %s4, %s2839
      %p2841 = scmp.lt.s32.totalorder %s22, 1
      %s2842 = scalar_select %p2841, %s22, 1
      %p2843 = scmp.lt.s32.totalorder %s23, 1
      %s2844 = scalar_select %p2843, %s23, 1
      %s2845 = smul.addr %s2842, 2
      %s2846 = sadd.s32 %s2844, %s2845
      %s2847 = smul.addr %s2846, 8
      %s2848 = scalar_lea.vmem %s5, %s2847
      %p2849 = scmp.lt.s32.totalorder %s22, 1
      %s2850 = scalar_select %p2849, %s22, 1
      %p2851 = scmp.lt.s32.totalorder %s23, 1
      %s2852 = scalar_select %p2851, %s23, 1
      %s2853 = smul.addr %s2850, 2
      %s2854 = sadd.s32 %s2852, %s2853
      %s2855 = smul.addr %s2854, 8
      %s2856 = scalar_lea.vmem %s6, %s2855
      // Predicated region
      $region45: #{expanding_block_forward.4} parent=35 // pred_check
        %p2857 = pneg %p139
      $region46: #{expanding_block_forward.4} parent=35 // pred_check_branch
        %2859 = sbr.rel (%p2857) target = $region48
      $region47: #{expanding_block_forward.4} parent=35 // pred_region
        %s2860 = smul.u32 8, %s23
      $region48: #{expanding_block_forward.4} parent=35 // pred_fallthru
        _
      // Predicated region
      $region49: #{expanding_block_forward.4} parent=35 // pred_check
        %p2861 = pneg %p167
      $region50: #{expanding_block_forward.4} parent=35 // pred_check_branch
        %2863 = sbr.rel (%p2861) target = $region52
      $region51: #{expanding_block_forward.4} parent=35 // pred_region
        _
      $region52: #{expanding_block_forward.4} parent=35 // pred_fallthru
        _
      // Predicated region
      $region53: #{expanding_block_forward.4} parent=35 // pred_check
        %p2864 = pneg %p195
      $region54: #{expanding_block_forward.4} parent=35 // pred_check_branch
        %2866 = sbr.rel (%p2864) target = $region56
      $region55: #{expanding_block_forward.4} parent=35 // pred_region
        _
      $region56: #{expanding_block_forward.4} parent=35 // pred_fallthru
        _
    $region36: #{expanding_block_forward.4} parent=5 // pred_fallthru
      _
    %p2867 = scmp.le.s32.totalorder 2, %s13
    // Predicated region
    $region57: #{expanding_block_forward.4} parent=5 // pred_check
      %p2868 = pneg %p2867
    $region58: #{expanding_block_forward.4} parent=5 // pred_check_branch
      %2870 = sbr.rel (%p2868) target = $region60
    $region59: #{expanding_block_forward.4} parent=5 // pred_region
      %s2871 = ssub.s32 %s13, 2
      // Predicated region
      $region61: #{expanding_block_forward.4} parent=59 // pred_check
        %p2872 = pneg %p145
      $region62: #{expanding_block_forward.4} parent=59 // pred_check_branch
        %2874 = sbr.rel (%p2872) target = $region64
      $region63: #{expanding_block_forward.4} parent=59 // pred_region
        %s2875 = smul.u32 8, %s25
        %p2876 = scmp.lt.s32.totalorder %s24, 1
        %s2877 = scalar_select %p2876, %s24, 1
        %p2878 = scmp.lt.s32.totalorder %s2875, 15
        %s2879 = scalar_select %p2878, %s2875, 15
        %s2880 = smul.addr %s2879, 2
        %s2881 = smul.addr %s2877, 32
        %s2882 = sadd.s32 %s2880, %s2881
        %s2883 = smul.addr %s2882, 8
        %s2884 = scalar_lea.vmem %s4, %s2883
      $region64: #{expanding_block_forward.4} parent=59 // pred_fallthru
        _
      // Predicated region
      $region65: #{expanding_block_forward.4} parent=59 // pred_check
        %p2885 = pneg %p173
      $region66: #{expanding_block_forward.4} parent=59 // pred_check_branch
        %2887 = sbr.rel (%p2885) target = $region68
      $region67: #{expanding_block_forward.4} parent=59 // pred_region
        %p2888 = scmp.lt.s32.totalorder %s24, 1
        %s2889 = scalar_select %p2888, %s24, 1
        %p2890 = scmp.lt.s32.totalorder %s25, 1
        %s2891 = scalar_select %p2890, %s25, 1
        %s2892 = smul.addr %s2889, 2
        %s2893 = sadd.s32 %s2891, %s2892
        %s2894 = smul.addr %s2893, 8
        %s2895 = scalar_lea.vmem %s5, %s2894
      $region68: #{expanding_block_forward.4} parent=59 // pred_fallthru
        _
      // Predicated region
      $region69: #{expanding_block_forward.4} parent=59 // pred_check
        %p2896 = pneg %p201
      $region70: #{expanding_block_forward.4} parent=59 // pred_check_branch
        %2898 = sbr.rel (%p2896) target = $region72
      $region71: #{expanding_block_forward.4} parent=59 // pred_region
        %p2899 = scmp.lt.s32.totalorder %s24, 1
        %s2900 = scalar_select %p2899, %s24, 1
        %p2901 = scmp.lt.s32.totalorder %s25, 1
        %s2902 = scalar_select %p2901, %s25, 1
        %s2903 = smul.addr %s2900, 2
        %s2904 = sadd.s32 %s2902, %s2903
        %s2905 = smul.addr %s2904, 8
        %s2906 = scalar_lea.vmem %s6, %s2905
      $region72: #{expanding_block_forward.4} parent=59 // pred_fallthru
        _
    $region60: #{expanding_block_forward.4} parent=5 // pred_fallthru
      _
  $region6: #{expanding_block_forward.4} parent=0 // loop_footer
    %s17 = sadd.s32 1, %s13
  $region7: #{expanding_block_forward.4} parent=0 // loop_footer_branch
    %12 = sbr.rel target = $region3
  $region8: #{expanding_block_forward.4} parent=0 // loop_exit
    _

</llo_original>
